<compile_context>
chip_gen: v7x
topology: tpu7x:2x2x1
jax: 0.10.0
libtpu: 0.0.40
codegen_flags: <defaults>
</compile_context>

<pallas_src>
import functools

import jax
import jax.numpy as jnp
from jax.experimental import pallas as pl
from jax.experimental.pallas import tpu as pltpu

_LANE = 128


def _reattention_kernel(x_ref, xT_ref, wqv_ref, wkT_ref, wp_ref, bp_ref,
                        wc_ref, bc_ref, out_ref, attn_ref, kT_scr, v_scr,
                        *, num_heads, head_dim, seq_real, block_q, scale,
                        approx_recip, compute_dtype):
    H, d, TQ = num_heads, head_dim, block_q
    C = H * d
    NP = x_ref.shape[1]                      # lane-padded sequence length
    f32 = jnp.float32
    cdt = compute_dtype
    qi = pl.program_id(1)

    # --- K^T / V projection + head split: once per batch element (qi == 0) -------
    @pl.when(qi == 0)
    def _():
        # K^T = Wk^T @ x^T -> (C, NP): keys land lane-dense, no transposes needed.
        kT = jnp.dot(wkT_ref[...], xT_ref[0], preferred_element_type=f32)
        vf = jnp.dot(x_ref[0], wqv_ref[:, C:], preferred_element_type=f32)
        for h in range(H):                   # static, aligned sublane/lane slices
            kT_scr[h] = kT[h * d:(h + 1) * d, :].astype(cdt)        # (d, NP)
            v_scr[h] = vf[:, h * d:(h + 1) * d].astype(cdt)         # (NP, d)

    # --- Q projection for this tile, sliced from the resident x block ------------
    qstart = pl.multiple_of(qi * TQ, TQ)
    xq = x_ref[0, pl.ds(qstart, TQ), :]                              # (TQ, C)
    q2 = jnp.dot(xq, wqv_ref[:, :C], preferred_element_type=f32) * scale

    # --- per-head scores + softmax (f32 accumulation, EUP reciprocal) ------------
    if seq_real < NP:                        # static: mask zero-padded key columns
        key_mask = jax.lax.broadcasted_iota(jnp.int32, (TQ, NP), 1) < seq_real
    attn_heads = []
    for h in range(H):
        qh = q2[:, h * d:(h + 1) * d].astype(cdt)                    # (TQ, d)
        s = jnp.dot(qh, kT_scr[h], preferred_element_type=f32)       # (TQ, NP)
        if seq_real < NP:
            s = jnp.where(key_mask, s, -1e30)
        m = jnp.max(s, axis=-1, keepdims=True)
        p = jnp.exp(s - m)
        r = pl.reciprocal(jnp.sum(p, axis=-1, keepdims=True), approx=approx_recip)
        attn_heads.append(p * r)                                     # f32 (TQ, NP)

    # --- re-attention head mixing (1x1 conv + eval BN folded) + attn @ V ---------
    # Each mixed head stays live: fire-and-forget store into attn_next, then it is
    # fed directly to its (TQ, NP) x (NP, d) MXU matmul (no store->load round trip).
    wmix = [[wc_ref[o, h] for h in range(H)] for o in range(H)]      # hoisted SMEM reads
    bmix = [bc_ref[o] for o in range(H)]
    head_out = []
    for o in range(H):
        acc = wmix[o][0] * attn_heads[0]
        for h in range(1, H):
            acc = acc + wmix[o][h] * attn_heads[h]
        mixed = acc + bmix[o]                                        # f32 (TQ, NP)
        attn_ref[0, o] = mixed.astype(attn_ref.dtype)
        head_out.append(jnp.dot(mixed.astype(cdt), v_scr[o],
                                preferred_element_type=f32))         # (TQ, d)

    # --- output projection --------------------------------------------------------
    o_cat = jnp.concatenate(head_out, axis=-1).astype(cdt)           # (TQ, C)
    out_ref[0] = (jnp.dot(o_cat, wp_ref[...], preferred_element_type=f32)
                  + bp_ref[...]).astype(out_ref.dtype)


def reattention_forward(x, params, *, num_heads, compute_dtype=jnp.bfloat16,
                        approx_recip=False, q_tile=None):
    B, N, C = x.shape
    H = num_heads
    assert C % H == 0
    d = C // H
    scale = d ** -0.5
    reatten_scale = 1.0                       # transform_scale=False (module default)
    eps = 1e-5

    # Lane-dense padding of the sequence axis (attn_next last dim -> multiple of 128).
    NP = ((N + _LANE - 1) // _LANE) * _LANE

    # VMEM budget from the actual chip (v7x: 64 MiB per TensorCore), with headroom.
    try:
        vmem_cap = int(pltpu.get_tpu_info().vmem_capacity_bytes)
    except Exception:
        vmem_cap = 64 * 1024 * 1024           # conservative fallback
    vmem_limit = (vmem_cap * 3) // 4

    itemsize = jnp.dtype(compute_dtype).itemsize

    def _footprint(tq):   # rough per-step VMEM bytes (pipelined blocks double-buffered)
        scr = 2 * H * NP * d * itemsize                     # K^T + V scratch
        xin = 2 * 2 * NP * C * itemsize                     # x and x^T blocks
        wts = (2 * C * C + C * C + C * C + C) * itemsize    # resident weights
        outs = 2 * (tq * C + H * tq * NP) * 4               # x-out + attn_next blocks
        return scr + xin + wts + outs

    if q_tile is None:
        TQ = min(NP, 128)
        while TQ > 8 and _footprint(TQ) > (vmem_limit * 4) // 5:
            TQ //= 2
    else:
        TQ = q_tile
    assert NP % TQ == 0 and TQ % 8 == 0, "query tile must divide padded N, mult. of 8"
    n_q = NP // TQ

    # Fold 1x1 conv + eval-mode BatchNorm2d + reatten_scale into (H, H) + (H,).
    s_bn = params["bn_gamma"] / jnp.sqrt(params["bn_var"] + eps)
    t_bn = params["bn_beta"] - params["bn_mean"] * s_bn
    wc_eff = ((params["w_conv"] * s_bn[:, None]) * reatten_scale).astype(jnp.float32)
    bc_eff = ((params["b_conv"] * s_bn + t_bn) * reatten_scale).astype(jnp.float32)

    # Zero-pad the sequence axis (padded keys masked in-kernel; qkv has no bias so
    # padded V rows are exactly zero) and build the channels-major copy for K^T.
    x_p = jnp.pad(x, ((0, 0), (0, NP - N), (0, 0))).astype(compute_dtype)
    x_pT = jnp.swapaxes(x_p, 1, 2)                                   # (B, C, NP)

    # Weights: Q|V fused, K projection pre-transposed, all in compute dtype.
    w_qkv = params["w_qkv"]
    w_qv = jnp.concatenate([w_qkv[:, :C], w_qkv[:, 2 * C:]], axis=1).astype(compute_dtype)
    w_kT = jnp.transpose(w_qkv[:, C:2 * C]).astype(compute_dtype)
    w_proj = params["w_proj"].astype(compute_dtype)
    b_proj = params["b_proj"].reshape(1, C).astype(jnp.float32)

    kernel = functools.partial(
        _reattention_kernel, num_heads=H, head_dim=d, seq_real=N, block_q=TQ,
        scale=scale, approx_recip=approx_recip, compute_dtype=compute_dtype)

    grid_spec = pltpu.PrefetchScalarGridSpec(
        num_scalar_prefetch=0,
        grid=(B, n_q),
        in_specs=[
            pl.BlockSpec((1, NP, C), lambda b, q: (b, 0, 0)),        # x (tokens-major)
            pl.BlockSpec((1, C, NP), lambda b, q: (b, 0, 0)),        # x^T (for K^T)
            pl.BlockSpec(memory_space=pltpu.MemorySpace.VMEM),       # w_qv  (C, 2C)
            pl.BlockSpec(memory_space=pltpu.MemorySpace.VMEM),       # w_k^T (C, C)
            pl.BlockSpec(memory_space=pltpu.MemorySpace.VMEM),       # w_proj (C, C)
            pl.BlockSpec(memory_space=pltpu.MemorySpace.VMEM),       # b_proj (1, C)
            pl.BlockSpec(memory_space=pltpu.MemorySpace.SMEM),       # wc_eff (H, H)
            pl.BlockSpec(memory_space=pltpu.MemorySpace.SMEM),       # bc_eff (H,)
        ],
        out_specs=[
            pl.BlockSpec((1, TQ, C), lambda b, q: (b, q, 0)),              # x out
            pl.BlockSpec((1, H, TQ, NP), lambda b, q: (b, 0, q, 0)),       # attn_next
        ],
        scratch_shapes=[
            pltpu.VMEM((H, d, NP), compute_dtype),   # K^T (head-split, whole seq)
            pltpu.VMEM((H, NP, d), compute_dtype),   # V   (head-split, whole seq)
        ],
    )
    out_shape = (jax.ShapeDtypeStruct((B, NP, C), jnp.float32),
                 jax.ShapeDtypeStruct((B, H, NP, NP), jnp.float32))

    out_p, attn_p = pl.pallas_call(
        kernel,
        grid_spec=grid_spec,
        out_shape=out_shape,
        compiler_params=pltpu.CompilerParams(
            dimension_semantics=("parallel", "arbitrary"),
            vmem_limit_bytes=int(vmem_limit)),
    )(x_p, x_pT, w_qv, w_kT, w_proj, b_proj, wc_eff, bc_eff)

    # Strip the lane padding before returning.
    return out_p[:, :N, :], attn_p[:, :, :N, :N]


def reattention_ref(x, params, *, num_heads):
    """Pure-JAX reference mirroring the PyTorch forward (eval mode)."""
    B, N, C = x.shape
    d = C // num_heads
    scale = d ** -0.5
    eps = 1e-5
    qkv = (x @ params["w_qkv"]).reshape(B, N, 3, num_heads, d).transpose(2, 0, 3, 1, 4)
    q, k, v = qkv[0], qkv[1], qkv[2]                               # (B, H, N, d)
    attn = jnp.einsum('bhnd,bhmd->bhnm', q, k) * scale
    attn = jax.nn.softmax(attn, axis=-1)
    conv = (jnp.einsum('oh,bhnm->bonm', params["w_conv"], attn)
            + params["b_conv"][None, :, None, None])
    bn = (conv - params["bn_mean"][None, :, None, None]) \
         / jnp.sqrt(params["bn_var"] + eps)[None, :, None, None]
    bn = bn * params["bn_gamma"][None, :, None, None] + params["bn_beta"][None, :, None, None]
    attn_next = bn * 1.0
    out = jnp.einsum('bhnm,bhmd->bhnd', attn_next, v)
    out = out.transpose(0, 2, 1, 3).reshape(B, N, C)
    out = out @ params["w_proj"] + params["b_proj"]
    return out, attn_next


if __name__ == "__main__":
    B, N, C, H = 2, 16, 32, 4

    key = jax.random.PRNGKey(0)
    ks = jax.random.split(key, 10)
    params = {
        # Linear(dim, 3*dim, bias=False) stored transposed: (C, 3C)
        "w_qkv":   0.1 * jax.random.normal(ks[0], (C, 3 * C), jnp.float32),
        # Linear(dim, dim) stored transposed: (C, C), plus bias (C,)
        "w_proj":  0.1 * jax.random.normal(ks[1], (C, C), jnp.float32),
        "b_proj":  0.1 * jax.random.normal(ks[2], (C,), jnp.float32),
        # Conv2d(H, H, 1, 1) weight squeezed to (H, H), bias (H,)
        "w_conv":  0.2 * jax.random.normal(ks[3], (H, H), jnp.float32),
        "b_conv":  0.1 * jax.random.normal(ks[4], (H,), jnp.float32),
        # BatchNorm2d(H) eval-mode parameters / running stats
        "bn_gamma": 1.0 + 0.1 * jax.random.normal(ks[5], (H,), jnp.float32),
        "bn_beta":  0.1 * jax.random.normal(ks[6], (H,), jnp.float32),
        "bn_mean":  0.1 * jax.random.normal(ks[7], (H,), jnp.float32),
        "bn_var":   0.5 + jnp.abs(jax.random.normal(ks[8], (H,), jnp.float32)),
    }
    x = jax.random.normal(ks[9], (B, N, C), jnp.float32)

    out_r, attn_r = reattention_ref(x, params, num_heads=H)

    # 1) f32 operands, single query tile — exact-path correctness (exercises padding
    #    + key masking since N=16 < 128).
    out, attn = reattention_forward(x, params, num_heads=H, compute_dtype=jnp.float32)
    jax.block_until_ready((out, attn))
    assert out.shape == (B, N, C) and attn.shape == (B, H, N, N)
    assert jnp.allclose(out, out_r, atol=1e-4, rtol=1e-4), "x output mismatch (f32)"
    assert jnp.allclose(attn, attn_r, atol=1e-4, rtol=1e-4), "attn mismatch (f32)"

    # 2) f32 operands, many query tiles — exercises K^T/V scratch reuse across tiles.
    out, attn = reattention_forward(x, params, num_heads=H, compute_dtype=jnp.float32,
                                    q_tile=8)
    jax.block_until_ready((out, attn))
    assert jnp.allclose(out, out_r, atol=1e-4, rtol=1e-4), "x output mismatch (tiled)"
    assert jnp.allclose(attn, attn_r, atol=1e-4, rtol=1e-4), "attn mismatch (tiled)"

    # 3) default production config: bf16 matmul operands (f32 accumulation) +
    #    approximate-reciprocal softmax.
    out, attn = reattention_forward(x, params, num_heads=H, approx_recip=True)
    jax.block_until_ready((out, attn))
    assert jnp.allclose(out, out_r, atol=5e-2, rtol=5e-2), "x output mismatch (bf16)"
    assert jnp.allclose(attn, attn_r, atol=5e-2, rtol=5e-2), "attn mismatch (bf16)"

    print("KERNEL_OK")
</pallas_src>

<mosaic_0001>
module attributes {stable_mosaic.version = 11 : i64} {
  func.func @_reattention_kernel(%arg0: i32, %arg1: i32, %arg2: memref<1x128x32xf32, #tpu.memory_space<vmem>>, %arg3: memref<1x32x128xf32, #tpu.memory_space<vmem>>, %arg4: memref<32x64xf32, #tpu.memory_space<vmem>>, %arg5: memref<32x32xf32, #tpu.memory_space<vmem>>, %arg6: memref<32x32xf32, #tpu.memory_space<vmem>>, %arg7: memref<1x32xf32, #tpu.memory_space<vmem>>, %arg8: memref<4x4xf32, #tpu.memory_space<smem>>, %arg9: memref<4xf32, #tpu.memory_space<smem>>, %arg10: memref<1x128x32xf32, #tpu.memory_space<vmem>>, %arg11: memref<1x4x128x128xf32, #tpu.memory_space<vmem>>, %arg12: memref<4x8x128xf32, #tpu.memory_space<vmem>>, %arg13: memref<4x128x8xf32, #tpu.memory_space<vmem>>) attributes {dimension_semantics = [#tpu.dimension_semantics<parallel>, #tpu.dimension_semantics<arbitrary>], iteration_bounds = array<i64: 2, 1>, scalar_prefetch = 0 : i64, scratch_operands = 2 : i64, tpu.core_type = #tpu.core_type<tc>, window_params = [{transform_indices = @transform_0, window_bounds = array<i64: 1, 128, 32>}, {transform_indices = @transform_1, window_bounds = array<i64: 1, 32, 128>}, {pipeline_mode = #tpu.pipeline_mode<synchronous>, transform_indices = @transform_2, window_bounds = array<i64: 32, 64>}, {pipeline_mode = #tpu.pipeline_mode<synchronous>, transform_indices = @transform_3, window_bounds = array<i64: 32, 32>}, {pipeline_mode = #tpu.pipeline_mode<synchronous>, transform_indices = @transform_4, window_bounds = array<i64: 32, 32>}, {pipeline_mode = #tpu.pipeline_mode<synchronous>, transform_indices = @transform_5, window_bounds = array<i64: 1, 32>}, {transform_indices = @transform_6, window_bounds = array<i64: 4, 4>}, {transform_indices = @transform_7, window_bounds = array<i64: 4>}, {transform_indices = @transform_8, window_bounds = array<i64: 1, 128, 32>}, {transform_indices = @transform_9, window_bounds = array<i64: 1, 4, 128, 128>}]} {
    %c0_i32 = arith.constant 0 : i32
    %0 = arith.cmpi eq, %arg1, %c0_i32 : i32
    %1 = arith.extui %0 : i1 to i32
    %c0_i32_0 = arith.constant 0 : i32
    %2 = arith.cmpi ne, %1, %c0_i32_0 : i32
    scf.if %2 {
      %c0_106 = arith.constant 0 : index
      %c0_107 = arith.constant 0 : index
      %184 = vector.load %arg5[%c0_106, %c0_107] : memref<32x32xf32, #tpu.memory_space<vmem>>, vector<32x32xf32>
      %c0_108 = arith.constant 0 : index
      %c0_109 = arith.constant 0 : index
      %c0_110 = arith.constant 0 : index
      %185 = vector.load %arg3[%c0_108, %c0_109, %c0_110] : memref<1x32x128xf32, #tpu.memory_space<vmem>>, vector<1x32x128xf32>
      %186 = vector.shape_cast %185 : vector<1x32x128xf32> to vector<32x128xf32>
      %cst_111 = arith.constant dense<0.000000e+00> : vector<32x128xf32>
      %187 = tpu.matmul %184, %186, %cst_111 {dimension_numbers = #tpu.dot_dimension_numbers<[1], [0], [0], [1], [0, 0, 1, 1], [], []>} : vector<32x32xf32>, vector<32x128xf32>, vector<32x128xf32> -> vector<32x128xf32>
      %c0_112 = arith.constant 0 : index
      %c0_113 = arith.constant 0 : index
      %c0_114 = arith.constant 0 : index
      %188 = vector.load %arg2[%c0_112, %c0_113, %c0_114] : memref<1x128x32xf32, #tpu.memory_space<vmem>>, vector<1x128x32xf32>
      %189 = vector.shape_cast %188 : vector<1x128x32xf32> to vector<128x32xf32>
      %c0_115 = arith.constant 0 : index
      %c32 = arith.constant 32 : index
      %190 = vector.load %arg4[%c0_115, %c32] : memref<32x64xf32, #tpu.memory_space<vmem>>, vector<32x32xf32>
      %cst_116 = arith.constant dense<0.000000e+00> : vector<128x32xf32>
      %191 = tpu.matmul %189, %190, %cst_116 {dimension_numbers = #tpu.dot_dimension_numbers<[1], [0], [0], [1], [0, 0, 1, 1], [], []>} : vector<128x32xf32>, vector<32x32xf32>, vector<128x32xf32> -> vector<128x32xf32>
      %192 = vector.extract_strided_slice %187 {offsets = [0, 0], sizes = [8, 128], strides = [1, 1]} : vector<32x128xf32> to vector<8x128xf32>
      %c0_117 = arith.constant 0 : index
      %c0_118 = arith.constant 0 : index
      %c0_119 = arith.constant 0 : index
      %193 = vector.load %arg12[%c0_117, %c0_118, %c0_119] : memref<4x8x128xf32, #tpu.memory_space<vmem>>, vector<1x8x128xf32>
      %194 = vector.shape_cast %193 : vector<1x8x128xf32> to vector<8x128xf32>
      %195 = vector.shape_cast %192 : vector<8x128xf32> to vector<1x8x128xf32>
      tpu.vector_store %arg12[%c0_117, %c0_118, %c0_119], %195 {strides = array<i32>} : memref<4x8x128xf32, #tpu.memory_space<vmem>>, vector<1x8x128xf32>,
      %196 = vector.extract_strided_slice %191 {offsets = [0, 0], sizes = [128, 8], strides = [1, 1]} : vector<128x32xf32> to vector<128x8xf32>
      %c0_120 = arith.constant 0 : index
      %c0_121 = arith.constant 0 : index
      %c0_122 = arith.constant 0 : index
      %197 = vector.load %arg13[%c0_120, %c0_121, %c0_122] : memref<4x128x8xf32, #tpu.memory_space<vmem>>, vector<1x128x8xf32>
      %198 = vector.shape_cast %197 : vector<1x128x8xf32> to vector<128x8xf32>
      %199 = vector.shape_cast %196 : vector<128x8xf32> to vector<1x128x8xf32>
      tpu.vector_store %arg13[%c0_120, %c0_121, %c0_122], %199 {strides = array<i32>} : memref<4x128x8xf32, #tpu.memory_space<vmem>>, vector<1x128x8xf32>,
      %200 = vector.extract_strided_slice %187 {offsets = [8, 0], sizes = [8, 128], strides = [1, 1]} : vector<32x128xf32> to vector<8x128xf32>
      %c1_123 = arith.constant 1 : index
      %c0_124 = arith.constant 0 : index
      %c0_125 = arith.constant 0 : index
      %201 = vector.load %arg12[%c1_123, %c0_124, %c0_125] : memref<4x8x128xf32, #tpu.memory_space<vmem>>, vector<1x8x128xf32>
      %202 = vector.shape_cast %201 : vector<1x8x128xf32> to vector<8x128xf32>
      %203 = vector.shape_cast %200 : vector<8x128xf32> to vector<1x8x128xf32>
      tpu.vector_store %arg12[%c1_123, %c0_124, %c0_125], %203 {strides = array<i32>} : memref<4x8x128xf32, #tpu.memory_space<vmem>>, vector<1x8x128xf32>,
      %204 = vector.extract_strided_slice %191 {offsets = [0, 8], sizes = [128, 8], strides = [1, 1]} : vector<128x32xf32> to vector<128x8xf32>
      %c1_126 = arith.constant 1 : index
      %c0_127 = arith.constant 0 : index
      %c0_128 = arith.constant 0 : index
      %205 = vector.load %arg13[%c1_126, %c0_127, %c0_128] : memref<4x128x8xf32, #tpu.memory_space<vmem>>, vector<1x128x8xf32>
      %206 = vector.shape_cast %205 : vector<1x128x8xf32> to vector<128x8xf32>
      %207 = vector.shape_cast %204 : vector<128x8xf32> to vector<1x128x8xf32>
      tpu.vector_store %arg13[%c1_126, %c0_127, %c0_128], %207 {strides = array<i32>} : memref<4x128x8xf32, #tpu.memory_space<vmem>>, vector<1x128x8xf32>,
      %208 = vector.extract_strided_slice %187 {offsets = [16, 0], sizes = [8, 128], strides = [1, 1]} : vector<32x128xf32> to vector<8x128xf32>
      %c2_129 = arith.constant 2 : index
      %c0_130 = arith.constant 0 : index
      %c0_131 = arith.constant 0 : index
      %209 = vector.load %arg12[%c2_129, %c0_130, %c0_131] : memref<4x8x128xf32, #tpu.memory_space<vmem>>, vector<1x8x128xf32>
      %210 = vector.shape_cast %209 : vector<1x8x128xf32> to vector<8x128xf32>
      %211 = vector.shape_cast %208 : vector<8x128xf32> to vector<1x8x128xf32>
      tpu.vector_store %arg12[%c2_129, %c0_130, %c0_131], %211 {strides = array<i32>} : memref<4x8x128xf32, #tpu.memory_space<vmem>>, vector<1x8x128xf32>,
      %212 = vector.extract_strided_slice %191 {offsets = [0, 16], sizes = [128, 8], strides = [1, 1]} : vector<128x32xf32> to vector<128x8xf32>
      %c2_132 = arith.constant 2 : index
      %c0_133 = arith.constant 0 : index
      %c0_134 = arith.constant 0 : index
      %213 = vector.load %arg13[%c2_132, %c0_133, %c0_134] : memref<4x128x8xf32, #tpu.memory_space<vmem>>, vector<1x128x8xf32>
      %214 = vector.shape_cast %213 : vector<1x128x8xf32> to vector<128x8xf32>
      %215 = vector.shape_cast %212 : vector<128x8xf32> to vector<1x128x8xf32>
      tpu.vector_store %arg13[%c2_132, %c0_133, %c0_134], %215 {strides = array<i32>} : memref<4x128x8xf32, #tpu.memory_space<vmem>>, vector<1x128x8xf32>,
      %216 = vector.extract_strided_slice %187 {offsets = [24, 0], sizes = [8, 128], strides = [1, 1]} : vector<32x128xf32> to vector<8x128xf32>
      %c3_135 = arith.constant 3 : index
      %c0_136 = arith.constant 0 : index
      %c0_137 = arith.constant 0 : index
      %217 = vector.load %arg12[%c3_135, %c0_136, %c0_137] : memref<4x8x128xf32, #tpu.memory_space<vmem>>, vector<1x8x128xf32>
      %218 = vector.shape_cast %217 : vector<1x8x128xf32> to vector<8x128xf32>
      %219 = vector.shape_cast %216 : vector<8x128xf32> to vector<1x8x128xf32>
      tpu.vector_store %arg12[%c3_135, %c0_136, %c0_137], %219 {strides = array<i32>} : memref<4x8x128xf32, #tpu.memory_space<vmem>>, vector<1x8x128xf32>,
      %220 = vector.extract_strided_slice %191 {offsets = [0, 24], sizes = [128, 8], strides = [1, 1]} : vector<128x32xf32> to vector<128x8xf32>
      %c3_138 = arith.constant 3 : index
      %c0_139 = arith.constant 0 : index
      %c0_140 = arith.constant 0 : index
      %221 = vector.load %arg13[%c3_138, %c0_139, %c0_140] : memref<4x128x8xf32, #tpu.memory_space<vmem>>, vector<1x128x8xf32>
      %222 = vector.shape_cast %221 : vector<1x128x8xf32> to vector<128x8xf32>
      %223 = vector.shape_cast %220 : vector<128x8xf32> to vector<1x128x8xf32>
      tpu.vector_store %arg13[%c3_138, %c0_139, %c0_140], %223 {strides = array<i32>} : memref<4x128x8xf32, #tpu.memory_space<vmem>>, vector<1x128x8xf32>,
    } else {
    }
    %c128_i32 = arith.constant 128 : i32
    %3 = arith.muli %arg1, %c128_i32 : i32
    %4 = tpu.assume_multiple %3, 128 : i32
    %c0 = arith.constant 0 : index
    %5 = arith.index_cast %4 : i32 to index
    %c0_1 = arith.constant 0 : index
    %6 = vector.load %arg2[%c0, %5, %c0_1] : memref<1x128x32xf32, #tpu.memory_space<vmem>>, vector<1x128x32xf32>
    %7 = vector.shape_cast %6 : vector<1x128x32xf32> to vector<128x32xf32>
    %c0_2 = arith.constant 0 : index
    %c0_3 = arith.constant 0 : index
    %8 = vector.load %arg4[%c0_2, %c0_3] : memref<32x64xf32, #tpu.memory_space<vmem>>, vector<32x32xf32>
    %cst = arith.constant dense<0.000000e+00> : vector<128x32xf32>
    %9 = tpu.matmul %7, %8, %cst {dimension_numbers = #tpu.dot_dimension_numbers<[1], [0], [0], [1], [0, 0, 1, 1], [], []>} : vector<128x32xf32>, vector<32x32xf32>, vector<128x32xf32> -> vector<128x32xf32>
    %cst_4 = arith.constant 0.353553385 : f32
    %10 = vector.broadcast %cst_4 : f32 to vector<128x32xf32>
    %11 = arith.mulf %9, %10 : vector<128x32xf32>
    %12 = tpu.iota {dimensions = array<i32: 1>} : vector<128x128xi32>
    %c16_i32 = arith.constant 16 : i32
    %13 = vector.broadcast %c16_i32 : i32 to vector<128x128xi32>
    %14 = arith.cmpi slt, %12, %13 : vector<128x128xi32>
    %15 = vector.extract_strided_slice %11 {offsets = [0, 0], sizes = [128, 8], strides = [1, 1]} : vector<128x32xf32> to vector<128x8xf32>
    %c0_5 = arith.constant 0 : index
    %c0_6 = arith.constant 0 : index
    %c0_7 = arith.constant 0 : index
    %16 = vector.load %arg12[%c0_5, %c0_6, %c0_7] : memref<4x8x128xf32, #tpu.memory_space<vmem>>, vector<1x8x128xf32>
    %17 = vector.shape_cast %16 : vector<1x8x128xf32> to vector<8x128xf32>
    %cst_8 = arith.constant dense<0.000000e+00> : vector<128x128xf32>
    %18 = tpu.matmul %15, %17, %cst_8 {dimension_numbers = #tpu.dot_dimension_numbers<[1], [0], [0], [1], [0, 0, 1, 1], [], []>} : vector<128x8xf32>, vector<8x128xf32>, vector<128x128xf32> -> vector<128x128xf32>
    %cst_9 = arith.constant -1.000000e+30 : f32
    %19 = vector.broadcast %cst_9 : f32 to vector<128x128xf32>
    %20 = arith.select %14, %18, %19 : vector<128x128xi1>, vector<128x128xf32>
    %cst_10 = arith.constant dense<0xFF800000> : vector<128xf32>
    %21 = vector.multi_reduction <maximumf>, %20, %cst_10 [1] : vector<128x128xf32> to vector<128xf32>
    %22 = vector.shape_cast %21 : vector<128xf32> to vector<128x1xf32>
    %23 = vector.broadcast %22 : vector<128x1xf32> to vector<128x128xf32>
    %24 = arith.subf %20, %23 : vector<128x128xf32>
    %25 = math.exp %24 : vector<128x128xf32>
    %cst_11 = arith.constant dense<0.000000e+00> : vector<128xf32>
    %26 = vector.multi_reduction <add>, %25, %cst_11 [1] : vector<128x128xf32> to vector<128xf32>
    %27 = vector.shape_cast %26 : vector<128xf32> to vector<128x1xf32>
    %28 = tpu.reciprocal %27 : vector<128x1xf32> -> vector<128x1xf32>
    %29 = vector.broadcast %28 : vector<128x1xf32> to vector<128x128xf32>
    %30 = arith.mulf %25, %29 : vector<128x128xf32>
    %31 = vector.extract_strided_slice %11 {offsets = [0, 8], sizes = [128, 8], strides = [1, 1]} : vector<128x32xf32> to vector<128x8xf32>
    %c1 = arith.constant 1 : index
    %c0_12 = arith.constant 0 : index
    %c0_13 = arith.constant 0 : index
    %32 = vector.load %arg12[%c1, %c0_12, %c0_13] : memref<4x8x128xf32, #tpu.memory_space<vmem>>, vector<1x8x128xf32>
    %33 = vector.shape_cast %32 : vector<1x8x128xf32> to vector<8x128xf32>
    %cst_14 = arith.constant dense<0.000000e+00> : vector<128x128xf32>
    %34 = tpu.matmul %31, %33, %cst_14 {dimension_numbers = #tpu.dot_dimension_numbers<[1], [0], [0], [1], [0, 0, 1, 1], [], []>} : vector<128x8xf32>, vector<8x128xf32>, vector<128x128xf32> -> vector<128x128xf32>
    %cst_15 = arith.constant -1.000000e+30 : f32
    %35 = vector.broadcast %cst_15 : f32 to vector<128x128xf32>
    %36 = arith.select %14, %34, %35 : vector<128x128xi1>, vector<128x128xf32>
    %cst_16 = arith.constant dense<0xFF800000> : vector<128xf32>
    %37 = vector.multi_reduction <maximumf>, %36, %cst_16 [1] : vector<128x128xf32> to vector<128xf32>
    %38 = vector.shape_cast %37 : vector<128xf32> to vector<128x1xf32>
    %39 = vector.broadcast %38 : vector<128x1xf32> to vector<128x128xf32>
    %40 = arith.subf %36, %39 : vector<128x128xf32>
    %41 = math.exp %40 : vector<128x128xf32>
    %cst_17 = arith.constant dense<0.000000e+00> : vector<128xf32>
    %42 = vector.multi_reduction <add>, %41, %cst_17 [1] : vector<128x128xf32> to vector<128xf32>
    %43 = vector.shape_cast %42 : vector<128xf32> to vector<128x1xf32>
    %44 = tpu.reciprocal %43 : vector<128x1xf32> -> vector<128x1xf32>
    %45 = vector.broadcast %44 : vector<128x1xf32> to vector<128x128xf32>
    %46 = arith.mulf %41, %45 : vector<128x128xf32>
    %47 = vector.extract_strided_slice %11 {offsets = [0, 16], sizes = [128, 8], strides = [1, 1]} : vector<128x32xf32> to vector<128x8xf32>
    %c2 = arith.constant 2 : index
    %c0_18 = arith.constant 0 : index
    %c0_19 = arith.constant 0 : index
    %48 = vector.load %arg12[%c2, %c0_18, %c0_19] : memref<4x8x128xf32, #tpu.memory_space<vmem>>, vector<1x8x128xf32>
    %49 = vector.shape_cast %48 : vector<1x8x128xf32> to vector<8x128xf32>
    %cst_20 = arith.constant dense<0.000000e+00> : vector<128x128xf32>
    %50 = tpu.matmul %47, %49, %cst_20 {dimension_numbers = #tpu.dot_dimension_numbers<[1], [0], [0], [1], [0, 0, 1, 1], [], []>} : vector<128x8xf32>, vector<8x128xf32>, vector<128x128xf32> -> vector<128x128xf32>
    %cst_21 = arith.constant -1.000000e+30 : f32
    %51 = vector.broadcast %cst_21 : f32 to vector<128x128xf32>
    %52 = arith.select %14, %50, %51 : vector<128x128xi1>, vector<128x128xf32>
    %cst_22 = arith.constant dense<0xFF800000> : vector<128xf32>
    %53 = vector.multi_reduction <maximumf>, %52, %cst_22 [1] : vector<128x128xf32> to vector<128xf32>
    %54 = vector.shape_cast %53 : vector<128xf32> to vector<128x1xf32>
    %55 = vector.broadcast %54 : vector<128x1xf32> to vector<128x128xf32>
    %56 = arith.subf %52, %55 : vector<128x128xf32>
    %57 = math.exp %56 : vector<128x128xf32>
    %cst_23 = arith.constant dense<0.000000e+00> : vector<128xf32>
    %58 = vector.multi_reduction <add>, %57, %cst_23 [1] : vector<128x128xf32> to vector<128xf32>
    %59 = vector.shape_cast %58 : vector<128xf32> to vector<128x1xf32>
    %60 = tpu.reciprocal %59 : vector<128x1xf32> -> vector<128x1xf32>
    %61 = vector.broadcast %60 : vector<128x1xf32> to vector<128x128xf32>
    %62 = arith.mulf %57, %61 : vector<128x128xf32>
    %63 = vector.extract_strided_slice %11 {offsets = [0, 24], sizes = [128, 8], strides = [1, 1]} : vector<128x32xf32> to vector<128x8xf32>
    %c3 = arith.constant 3 : index
    %c0_24 = arith.constant 0 : index
    %c0_25 = arith.constant 0 : index
    %64 = vector.load %arg12[%c3, %c0_24, %c0_25] : memref<4x8x128xf32, #tpu.memory_space<vmem>>, vector<1x8x128xf32>
    %65 = vector.shape_cast %64 : vector<1x8x128xf32> to vector<8x128xf32>
    %cst_26 = arith.constant dense<0.000000e+00> : vector<128x128xf32>
    %66 = tpu.matmul %63, %65, %cst_26 {dimension_numbers = #tpu.dot_dimension_numbers<[1], [0], [0], [1], [0, 0, 1, 1], [], []>} : vector<128x8xf32>, vector<8x128xf32>, vector<128x128xf32> -> vector<128x128xf32>
    %cst_27 = arith.constant -1.000000e+30 : f32
    %67 = vector.broadcast %cst_27 : f32 to vector<128x128xf32>
    %68 = arith.select %14, %66, %67 : vector<128x128xi1>, vector<128x128xf32>
    %cst_28 = arith.constant dense<0xFF800000> : vector<128xf32>
    %69 = vector.multi_reduction <maximumf>, %68, %cst_28 [1] : vector<128x128xf32> to vector<128xf32>
    %70 = vector.shape_cast %69 : vector<128xf32> to vector<128x1xf32>
    %71 = vector.broadcast %70 : vector<128x1xf32> to vector<128x128xf32>
    %72 = arith.subf %68, %71 : vector<128x128xf32>
    %73 = math.exp %72 : vector<128x128xf32>
    %cst_29 = arith.constant dense<0.000000e+00> : vector<128xf32>
    %74 = vector.multi_reduction <add>, %73, %cst_29 [1] : vector<128x128xf32> to vector<128xf32>
    %75 = vector.shape_cast %74 : vector<128xf32> to vector<128x1xf32>
    %76 = tpu.reciprocal %75 : vector<128x1xf32> -> vector<128x1xf32>
    %77 = vector.broadcast %76 : vector<128x1xf32> to vector<128x128xf32>
    %78 = arith.mulf %73, %77 : vector<128x128xf32>
    %c0_30 = arith.constant 0 : index
    %c0_31 = arith.constant 0 : index
    %79 = memref.load %arg8[%c0_30, %c0_31] : memref<4x4xf32, #tpu.memory_space<smem>>
    %c0_32 = arith.constant 0 : index
    %c1_33 = arith.constant 1 : index
    %80 = memref.load %arg8[%c0_32, %c1_33] : memref<4x4xf32, #tpu.memory_space<smem>>
    %c0_34 = arith.constant 0 : index
    %c2_35 = arith.constant 2 : index
    %81 = memref.load %arg8[%c0_34, %c2_35] : memref<4x4xf32, #tpu.memory_space<smem>>
    %c0_36 = arith.constant 0 : index
    %c3_37 = arith.constant 3 : index
    %82 = memref.load %arg8[%c0_36, %c3_37] : memref<4x4xf32, #tpu.memory_space<smem>>
    %c1_38 = arith.constant 1 : index
    %c0_39 = arith.constant 0 : index
    %83 = memref.load %arg8[%c1_38, %c0_39] : memref<4x4xf32, #tpu.memory_space<smem>>
    %c1_40 = arith.constant 1 : index
    %c1_41 = arith.constant 1 : index
    %84 = memref.load %arg8[%c1_40, %c1_41] : memref<4x4xf32, #tpu.memory_space<smem>>
    %c1_42 = arith.constant 1 : index
    %c2_43 = arith.constant 2 : index
    %85 = memref.load %arg8[%c1_42, %c2_43] : memref<4x4xf32, #tpu.memory_space<smem>>
    %c1_44 = arith.constant 1 : index
    %c3_45 = arith.constant 3 : index
    %86 = memref.load %arg8[%c1_44, %c3_45] : memref<4x4xf32, #tpu.memory_space<smem>>
    %c2_46 = arith.constant 2 : index
    %c0_47 = arith.constant 0 : index
    %87 = memref.load %arg8[%c2_46, %c0_47] : memref<4x4xf32, #tpu.memory_space<smem>>
    %c2_48 = arith.constant 2 : index
    %c1_49 = arith.constant 1 : index
    %88 = memref.load %arg8[%c2_48, %c1_49] : memref<4x4xf32, #tpu.memory_space<smem>>
    %c2_50 = arith.constant 2 : index
    %c2_51 = arith.constant 2 : index
    %89 = memref.load %arg8[%c2_50, %c2_51] : memref<4x4xf32, #tpu.memory_space<smem>>
    %c2_52 = arith.constant 2 : index
    %c3_53 = arith.constant 3 : index
    %90 = memref.load %arg8[%c2_52, %c3_53] : memref<4x4xf32, #tpu.memory_space<smem>>
    %c3_54 = arith.constant 3 : index
    %c0_55 = arith.constant 0 : index
    %91 = memref.load %arg8[%c3_54, %c0_55] : memref<4x4xf32, #tpu.memory_space<smem>>
    %c3_56 = arith.constant 3 : index
    %c1_57 = arith.constant 1 : index
    %92 = memref.load %arg8[%c3_56, %c1_57] : memref<4x4xf32, #tpu.memory_space<smem>>
    %c3_58 = arith.constant 3 : index
    %c2_59 = arith.constant 2 : index
    %93 = memref.load %arg8[%c3_58, %c2_59] : memref<4x4xf32, #tpu.memory_space<smem>>
    %c3_60 = arith.constant 3 : index
    %c3_61 = arith.constant 3 : index
    %94 = memref.load %arg8[%c3_60, %c3_61] : memref<4x4xf32, #tpu.memory_space<smem>>
    %c0_62 = arith.constant 0 : index
    %95 = memref.load %arg9[%c0_62] : memref<4xf32, #tpu.memory_space<smem>>
    %c1_63 = arith.constant 1 : index
    %96 = memref.load %arg9[%c1_63] : memref<4xf32, #tpu.memory_space<smem>>
    %c2_64 = arith.constant 2 : index
    %97 = memref.load %arg9[%c2_64] : memref<4xf32, #tpu.memory_space<smem>>
    %c3_65 = arith.constant 3 : index
    %98 = memref.load %arg9[%c3_65] : memref<4xf32, #tpu.memory_space<smem>>
    %99 = vector.broadcast %79 : f32 to vector<128x128xf32>
    %100 = arith.mulf %99, %30 : vector<128x128xf32>
    %101 = vector.broadcast %80 : f32 to vector<128x128xf32>
    %102 = arith.mulf %101, %46 : vector<128x128xf32>
    %103 = arith.addf %100, %102 : vector<128x128xf32>
    %104 = vector.broadcast %81 : f32 to vector<128x128xf32>
    %105 = arith.mulf %104, %62 : vector<128x128xf32>
    %106 = arith.addf %103, %105 : vector<128x128xf32>
    %107 = vector.broadcast %82 : f32 to vector<128x128xf32>
    %108 = arith.mulf %107, %78 : vector<128x128xf32>
    %109 = arith.addf %106, %108 : vector<128x128xf32>
    %110 = vector.broadcast %95 : f32 to vector<128x128xf32>
    %111 = arith.addf %109, %110 : vector<128x128xf32>
    %c0_66 = arith.constant 0 : index
    %c0_67 = arith.constant 0 : index
    %c0_68 = arith.constant 0 : index
    %c0_69 = arith.constant 0 : index
    %112 = vector.load %arg11[%c0_66, %c0_67, %c0_68, %c0_69] : memref<1x4x128x128xf32, #tpu.memory_space<vmem>>, vector<1x1x128x128xf32>
    %113 = vector.shape_cast %112 : vector<1x1x128x128xf32> to vector<128x128xf32>
    %114 = vector.shape_cast %111 : vector<128x128xf32> to vector<1x1x128x128xf32>
    tpu.vector_store %arg11[%c0_66, %c0_67, %c0_68, %c0_69], %114 {strides = array<i32>} : memref<1x4x128x128xf32, #tpu.memory_space<vmem>>, vector<1x1x128x128xf32>,
    %c0_70 = arith.constant 0 : index
    %c0_71 = arith.constant 0 : index
    %c0_72 = arith.constant 0 : index
    %115 = vector.load %arg13[%c0_70, %c0_71, %c0_72] : memref<4x128x8xf32, #tpu.memory_space<vmem>>, vector<1x128x8xf32>
    %116 = vector.shape_cast %115 : vector<1x128x8xf32> to vector<128x8xf32>
    %cst_73 = arith.constant dense<0.000000e+00> : vector<128x8xf32>
    %117 = tpu.matmul %111, %116, %cst_73 {dimension_numbers = #tpu.dot_dimension_numbers<[1], [0], [0], [1], [0, 0, 1, 1], [], []>} : vector<128x128xf32>, vector<128x8xf32>, vector<128x8xf32> -> vector<128x8xf32>
    %118 = vector.broadcast %83 : f32 to vector<128x128xf32>
    %119 = arith.mulf %118, %30 : vector<128x128xf32>
    %120 = vector.broadcast %84 : f32 to vector<128x128xf32>
    %121 = arith.mulf %120, %46 : vector<128x128xf32>
    %122 = arith.addf %119, %121 : vector<128x128xf32>
    %123 = vector.broadcast %85 : f32 to vector<128x128xf32>
    %124 = arith.mulf %123, %62 : vector<128x128xf32>
    %125 = arith.addf %122, %124 : vector<128x128xf32>
    %126 = vector.broadcast %86 : f32 to vector<128x128xf32>
    %127 = arith.mulf %126, %78 : vector<128x128xf32>
    %128 = arith.addf %125, %127 : vector<128x128xf32>
    %129 = vector.broadcast %96 : f32 to vector<128x128xf32>
    %130 = arith.addf %128, %129 : vector<128x128xf32>
    %c0_74 = arith.constant 0 : index
    %c1_75 = arith.constant 1 : index
    %c0_76 = arith.constant 0 : index
    %c0_77 = arith.constant 0 : index
    %131 = vector.load %arg11[%c0_74, %c1_75, %c0_76, %c0_77] : memref<1x4x128x128xf32, #tpu.memory_space<vmem>>, vector<1x1x128x128xf32>
    %132 = vector.shape_cast %131 : vector<1x1x128x128xf32> to vector<128x128xf32>
    %133 = vector.shape_cast %130 : vector<128x128xf32> to vector<1x1x128x128xf32>
    tpu.vector_store %arg11[%c0_74, %c1_75, %c0_76, %c0_77], %133 {strides = array<i32>} : memref<1x4x128x128xf32, #tpu.memory_space<vmem>>, vector<1x1x128x128xf32>,
    %c1_78 = arith.constant 1 : index
    %c0_79 = arith.constant 0 : index
    %c0_80 = arith.constant 0 : index
    %134 = vector.load %arg13[%c1_78, %c0_79, %c0_80] : memref<4x128x8xf32, #tpu.memory_space<vmem>>, vector<1x128x8xf32>
    %135 = vector.shape_cast %134 : vector<1x128x8xf32> to vector<128x8xf32>
    %cst_81 = arith.constant dense<0.000000e+00> : vector<128x8xf32>
    %136 = tpu.matmul %130, %135, %cst_81 {dimension_numbers = #tpu.dot_dimension_numbers<[1], [0], [0], [1], [0, 0, 1, 1], [], []>} : vector<128x128xf32>, vector<128x8xf32>, vector<128x8xf32> -> vector<128x8xf32>
    %137 = vector.broadcast %87 : f32 to vector<128x128xf32>
    %138 = arith.mulf %137, %30 : vector<128x128xf32>
    %139 = vector.broadcast %88 : f32 to vector<128x128xf32>
    %140 = arith.mulf %139, %46 : vector<128x128xf32>
    %141 = arith.addf %138, %140 : vector<128x128xf32>
    %142 = vector.broadcast %89 : f32 to vector<128x128xf32>
    %143 = arith.mulf %142, %62 : vector<128x128xf32>
    %144 = arith.addf %141, %143 : vector<128x128xf32>
    %145 = vector.broadcast %90 : f32 to vector<128x128xf32>
    %146 = arith.mulf %145, %78 : vector<128x128xf32>
    %147 = arith.addf %144, %146 : vector<128x128xf32>
    %148 = vector.broadcast %97 : f32 to vector<128x128xf32>
    %149 = arith.addf %147, %148 : vector<128x128xf32>
    %c0_82 = arith.constant 0 : index
    %c2_83 = arith.constant 2 : index
    %c0_84 = arith.constant 0 : index
    %c0_85 = arith.constant 0 : index
    %150 = vector.load %arg11[%c0_82, %c2_83, %c0_84, %c0_85] : memref<1x4x128x128xf32, #tpu.memory_space<vmem>>, vector<1x1x128x128xf32>
    %151 = vector.shape_cast %150 : vector<1x1x128x128xf32> to vector<128x128xf32>
    %152 = vector.shape_cast %149 : vector<128x128xf32> to vector<1x1x128x128xf32>
    tpu.vector_store %arg11[%c0_82, %c2_83, %c0_84, %c0_85], %152 {strides = array<i32>} : memref<1x4x128x128xf32, #tpu.memory_space<vmem>>, vector<1x1x128x128xf32>,
    %c2_86 = arith.constant 2 : index
    %c0_87 = arith.constant 0 : index
    %c0_88 = arith.constant 0 : index
    %153 = vector.load %arg13[%c2_86, %c0_87, %c0_88] : memref<4x128x8xf32, #tpu.memory_space<vmem>>, vector<1x128x8xf32>
    %154 = vector.shape_cast %153 : vector<1x128x8xf32> to vector<128x8xf32>
    %cst_89 = arith.constant dense<0.000000e+00> : vector<128x8xf32>
    %155 = tpu.matmul %149, %154, %cst_89 {dimension_numbers = #tpu.dot_dimension_numbers<[1], [0], [0], [1], [0, 0, 1, 1], [], []>} : vector<128x128xf32>, vector<128x8xf32>, vector<128x8xf32> -> vector<128x8xf32>
    %156 = vector.broadcast %91 : f32 to vector<128x128xf32>
    %157 = arith.mulf %156, %30 : vector<128x128xf32>
    %158 = vector.broadcast %92 : f32 to vector<128x128xf32>
    %159 = arith.mulf %158, %46 : vector<128x128xf32>
    %160 = arith.addf %157, %159 : vector<128x128xf32>
    %161 = vector.broadcast %93 : f32 to vector<128x128xf32>
    %162 = arith.mulf %161, %62 : vector<128x128xf32>
    %163 = arith.addf %160, %162 : vector<128x128xf32>
    %164 = vector.broadcast %94 : f32 to vector<128x128xf32>
    %165 = arith.mulf %164, %78 : vector<128x128xf32>
    %166 = arith.addf %163, %165 : vector<128x128xf32>
    %167 = vector.broadcast %98 : f32 to vector<128x128xf32>
    %168 = arith.addf %166, %167 : vector<128x128xf32>
    %c0_90 = arith.constant 0 : index
    %c3_91 = arith.constant 3 : index
    %c0_92 = arith.constant 0 : index
    %c0_93 = arith.constant 0 : index
    %169 = vector.load %arg11[%c0_90, %c3_91, %c0_92, %c0_93] : memref<1x4x128x128xf32, #tpu.memory_space<vmem>>, vector<1x1x128x128xf32>
    %170 = vector.shape_cast %169 : vector<1x1x128x128xf32> to vector<128x128xf32>
    %171 = vector.shape_cast %168 : vector<128x128xf32> to vector<1x1x128x128xf32>
    tpu.vector_store %arg11[%c0_90, %c3_91, %c0_92, %c0_93], %171 {strides = array<i32>} : memref<1x4x128x128xf32, #tpu.memory_space<vmem>>, vector<1x1x128x128xf32>,
    %c3_94 = arith.constant 3 : index
    %c0_95 = arith.constant 0 : index
    %c0_96 = arith.constant 0 : index
    %172 = vector.load %arg13[%c3_94, %c0_95, %c0_96] : memref<4x128x8xf32, #tpu.memory_space<vmem>>, vector<1x128x8xf32>
    %173 = vector.shape_cast %172 : vector<1x128x8xf32> to vector<128x8xf32>
    %cst_97 = arith.constant dense<0.000000e+00> : vector<128x8xf32>
    %174 = tpu.matmul %168, %173, %cst_97 {dimension_numbers = #tpu.dot_dimension_numbers<[1], [0], [0], [1], [0, 0, 1, 1], [], []>} : vector<128x128xf32>, vector<128x8xf32>, vector<128x8xf32> -> vector<128x8xf32>
    %175 = tpu.concatenate %117, %136, %155, %174 in 1 : vector<128x8xf32>, vector<128x8xf32>, vector<128x8xf32>, vector<128x8xf32> -> vector<128x32xf32>
    %c0_98 = arith.constant 0 : index
    %c0_99 = arith.constant 0 : index
    %176 = vector.load %arg6[%c0_98, %c0_99] : memref<32x32xf32, #tpu.memory_space<vmem>>, vector<32x32xf32>
    %cst_100 = arith.constant dense<0.000000e+00> : vector<128x32xf32>
    %177 = tpu.matmul %175, %176, %cst_100 {dimension_numbers = #tpu.dot_dimension_numbers<[1], [0], [0], [1], [0, 0, 1, 1], [], []>} : vector<128x32xf32>, vector<32x32xf32>, vector<128x32xf32> -> vector<128x32xf32>
    %c0_101 = arith.constant 0 : index
    %c0_102 = arith.constant 0 : index
    %178 = vector.load %arg7[%c0_101, %c0_102] : memref<1x32xf32, #tpu.memory_space<vmem>>, vector<1x32xf32>
    %179 = vector.broadcast %178 : vector<1x32xf32> to vector<128x32xf32>
    %180 = arith.addf %177, %179 : vector<128x32xf32>
    %c0_103 = arith.constant 0 : index
    %c0_104 = arith.constant 0 : index
    %c0_105 = arith.constant 0 : index
    %181 = vector.load %arg10[%c0_103, %c0_104, %c0_105] : memref<1x128x32xf32, #tpu.memory_space<vmem>>, vector<1x128x32xf32>
    %182 = vector.shape_cast %181 : vector<1x128x32xf32> to vector<128x32xf32>
    %183 = vector.shape_cast %180 : vector<128x32xf32> to vector<1x128x32xf32>
    tpu.vector_store %arg10[%c0_103, %c0_104, %c0_105], %183 {strides = array<i32>} : memref<1x128x32xf32, #tpu.memory_space<vmem>>, vector<1x128x32xf32>,
    return
  }
  func.func @transform_0(%arg0: i32, %arg1: i32) -> (i32, i32, i32) {
    %c0_i32 = arith.constant 0 : i32
    %c0_i32_0 = arith.constant 0 : i32
    %c0_i32_1 = arith.constant 0 : i32
    return %arg0, %c0_i32, %c0_i32_0 : i32, i32, i32
  }
  func.func @transform_1(%arg0: i32, %arg1: i32) -> (i32, i32, i32) {
    %c0_i32 = arith.constant 0 : i32
    %c0_i32_0 = arith.constant 0 : i32
    %c0_i32_1 = arith.constant 0 : i32
    return %arg0, %c0_i32, %c0_i32_0 : i32, i32, i32
  }
  func.func @transform_2(%arg0: i32, %arg1: i32) -> (i32, i32) {
    %c0_i32 = arith.constant 0 : i32
    %c0_i32_0 = arith.constant 0 : i32
    %c0_i32_1 = arith.constant 0 : i32
    return %c0_i32, %c0_i32_0 : i32, i32
  }
  func.func @transform_3(%arg0: i32, %arg1: i32) -> (i32, i32) {
    %c0_i32 = arith.constant 0 : i32
    %c0_i32_0 = arith.constant 0 : i32
    %c0_i32_1 = arith.constant 0 : i32
    return %c0_i32, %c0_i32_0 : i32, i32
  }
  func.func @transform_4(%arg0: i32, %arg1: i32) -> (i32, i32) {
    %c0_i32 = arith.constant 0 : i32
    %c0_i32_0 = arith.constant 0 : i32
    %c0_i32_1 = arith.constant 0 : i32
    return %c0_i32, %c0_i32_0 : i32, i32
  }
  func.func @transform_5(%arg0: i32, %arg1: i32) -> (i32, i32) {
    %c0_i32 = arith.constant 0 : i32
    %c0_i32_0 = arith.constant 0 : i32
    %c0_i32_1 = arith.constant 0 : i32
    return %c0_i32, %c0_i32_0 : i32, i32
  }
  func.func @transform_6(%arg0: i32, %arg1: i32) -> (i32, i32) {
    %c0_i32 = arith.constant 0 : i32
    %c0_i32_0 = arith.constant 0 : i32
    %c0_i32_1 = arith.constant 0 : i32
    return %c0_i32, %c0_i32_0 : i32, i32
  }
  func.func @transform_7(%arg0: i32, %arg1: i32) -> i32 {
    %c0_i32 = arith.constant 0 : i32
    %c0_i32_0 = arith.constant 0 : i32
    return %c0_i32 : i32
  }
  func.func @transform_8(%arg0: i32, %arg1: i32) -> (i32, i32, i32) {
    %c0_i32 = arith.constant 0 : i32
    %c0_i32_0 = arith.constant 0 : i32
    return %arg0, %arg1, %c0_i32 : i32, i32, i32
  }
  func.func @transform_9(%arg0: i32, %arg1: i32) -> (i32, i32, i32, i32) {
    %c0_i32 = arith.constant 0 : i32
    %c0_i32_0 = arith.constant 0 : i32
    %c0_i32_1 = arith.constant 0 : i32
    return %arg0, %c0_i32, %arg1, %c0_i32_0 : i32, i32, i32, i32
  }
}

</mosaic_0001>

<llo_original>
// kernel: tpu_custom_call.1
$region0: #{tpu_custom_call.1}
  #allocation0 [shape = 'u32[]', space=smem, size = 0x4, offset = 0x4, fixed_abs, tag = 'smem constant byte address 0x4 - core index']
  #allocation1 [shape = 'u32[144,128]{1,0:T(1,128)}', space=vmem, size = 0x12000, scoped, tag = 'internal scratch']
  #allocation2 [shape = 'f32[4,8,128]{2,1,0:T(8,128)}', space=vmem, size = 0x4000, scoped, tag = 'scratch operand']
  #allocation3 [shape = 'f32[4,128,8]{2,1,0:T(8,128)}', space=vmem, size = 0x40000, scoped, tag = 'scratch operand']
  %s0 = inlined_call_operand.vmem [shape: f32[2,128,32], index: 0, kind: input, shape index: {}]
  %s1 = inlined_call_operand.vmem [shape: f32[2,32,128], index: 1, kind: input, shape index: {}]
  %s2 = inlined_call_operand.vmem [shape: f32[32,64], index: 2, kind: input, shape index: {}]
  %s3 = inlined_call_operand.vmem [shape: f32[32,32], index: 3, kind: input, shape index: {}]
  %s4 = inlined_call_operand.vmem [shape: f32[32,32], index: 4, kind: input, shape index: {}]
  %s5 = inlined_call_operand.vmem [shape: f32[1,32], index: 5, kind: input, shape index: {}]
  %s6 = inlined_call_operand.vmem [shape: f32[4,4], index: 6, kind: input, shape index: {}]
  %s7 = inlined_call_operand.vmem [shape: f32[4], index: 7, kind: input, shape index: {}]
  %s8 = inlined_call_operand.vmem [shape: f32[2,128,32], index: 8, kind: output, shape index: {0}]
  %s9 = inlined_call_operand.hbm [shape: f32[2,4,128,128], index: 9, kind: output, shape index: {1}]
  %10 = xla_tuple %s8, %s9
  %s11 = sld [smem:[#allocation0]]
  $region85: #{tpu_custom_call.1} parent=0
    _
  %s13 = ssub.s32 1, %s11
  %s14 = scalar_select 0, %s13, %s11
  $region1: #{tpu_custom_call.1} parent=0
    #allocation4 [shape = 'u8[2048]{0}', space=smem, size = 0x800, scoped, tag = 'input window, operand 6, single buffered']
    #allocation5 [shape = 's32[2]{0}', space=sflag, size = 0x8, scoped, tag = 'scoped memory for tpu_custom_call.1']
    #allocation6 [shape = 's32[2]{0}', space=sflag, size = 0x8, scoped, tag = 'scoped memory for tpu_custom_call.1']
    #allocation7 [shape = 'u8[512]{0}', space=smem, size = 0x200, scoped, tag = 'input window, operand 7, single buffered']
    #allocation8 [shape = 's32[1]{0}', space=sflag, size = 0x4, scoped, tag = 'scoped memory for tpu_custom_call.1']
    #allocation9 [shape = 'u8[524288]{0}', space=vmem, size = 0x80000, scoped, tag = 'output window, operand 1']
    %15 = vsyncpa [#allocation6], 0
    %16 = vsyncpa [#allocation8], 0
    %17 = vsyncpa [#allocation5], 0
    %s18 = scalar_lea.sflag [#allocation5], 1
    %19 = vsyncpa %s18, 0
    loop: start=0, step=1, limit=4
    $region2: #{tpu_custom_call.1} parent=1 // loop_pre_header
      _
    $region3: #{tpu_custom_call.1} parent=1 // loop_header
      %s21 = sphi 0, %s25
      %p22 = scmp.ge.s32.totalorder %s21, 4
      %s28 = sphi 0, %s40
      %s29 = sphi 0, %s36
      %s30 = sphi 0, %s28
      %s31 = sphi 0, %s29
      %s32 = sphi 0, %s30
      %s33 = sphi 0, %s31
      %s43 = sphi 0, %s45
      %s46 = sphi 0, %s43
      %s47 = sphi 0, %s46
      %s63 = sphi 0, %s47
      %s69 = sphi 0, %s71
      %s72 = sphi 0, %s69
      %s73 = sphi 0, %s72
      %s89 = sphi 0, %s73
      %s93 = sphi 0, %s93
      %s95 = sphi 0, %s93
      %s96 = sphi 0, %s95
      %s110 = sphi 0, %s96
      %s114 = sphi 0, %s114
      %s116 = sphi 0, %s114
      %s117 = sphi 0, %s116
      %s131 = sphi 0, %s117
      %s135 = sphi 0, %s135
      %s137 = sphi 0, %s135
      %s138 = sphi 0, %s137
      %s152 = sphi 0, %s138
      %s156 = sphi 0, %s156
      %s158 = sphi 0, %s156
      %s159 = sphi 0, %s158
      %s173 = sphi 0, %s159
      %s177 = sphi 0, %s177
      %s179 = sphi 0, %s177
      %s180 = sphi 0, %s179
      %s194 = sphi 0, %s180
      %s198 = sphi 0, %s198
      %s200 = sphi 0, %s198
      %s201 = sphi 0, %s200
      %s215 = sphi 0, %s201
      %s223 = sphi 0, %s225
      %s226 = sphi 0, %s223
      %s227 = sphi 0, %s226
      %s243 = sphi 0, %s227
      %s251 = sphi 0, %s253
      %s254 = sphi 0, %s251
      %s255 = sphi 0, %s254
      %s271 = sphi 0, %s255
    $region4: #{tpu_custom_call.1} parent=1 // loop_header_branch
      %24 = sbr.rel (%p22) target = $region8
    $region5: #{tpu_custom_call.1} parent=1 // loop_body
      %s26 = ssub.s32 %s21, 1
      %s27 = ssub.s32 %s21, 2
      %s34 = sadd.s32 1, %s29
      %p35 = scmp.ge.s32.totalorder %s34, 1
      %s36 = scalar_select %p35, 0, %s34
      %s37 = sadd.s32 1, %s28
      %s38 = scalar_select %p35, %s37, %s28
      %p39 = scmp.ge.s32.totalorder %s38, 2
      %s40 = scalar_select %p39, 0, %s38
      %s41 = ssub.s32 %s28, %s40
      %p42 = scmp.eq.s32.totalorder %s41, 0
      %s44 = sadd.s32 %s43, 1
      %s45 = scalar_select %p42, %s43, %s44
      %p48 = pneg %p42
      %p49 = scmp.eq.s32.totalorder %s21, 1
      %p50 = por %p48, %p49
      %p51 = scmp.ne.s32.totalorder %s43, %s46
      %p52 = scmp.eq.s32.totalorder %s21, 0
      %p53 = por %p51, %p52
      %p54 = scmp.ne.s32.totalorder %s43, %s46
      %p55 = scmp.eq.s32.totalorder %s26, 1
      %p56 = por %p54, %p55
      %p57 = scmp.ne.s32.totalorder %s46, %s47
      %p58 = scmp.eq.s32.totalorder %s26, 0
      %p59 = por %p57, %p58
      %p60 = scmp.ne.s32.totalorder %s46, %s47
      %p61 = scmp.eq.s32.totalorder %s27, 1
      %p62 = por %p60, %p61
      %p64 = scmp.ne.s32.totalorder %s47, %s63
      %p65 = scmp.eq.s32.totalorder %s27, 0
      %p66 = por %p64, %p65
      %s67 = ssub.s32 %s28, %s40
      %p68 = scmp.eq.s32.totalorder %s67, 0
      %s70 = sadd.s32 %s69, 1
      %s71 = scalar_select %p68, %s69, %s70
      %p74 = pneg %p68
      %p75 = scmp.eq.s32.totalorder %s21, 1
      %p76 = por %p74, %p75
      %p77 = scmp.ne.s32.totalorder %s69, %s72
      %p78 = scmp.eq.s32.totalorder %s21, 0
      %p79 = por %p77, %p78
      %p80 = scmp.ne.s32.totalorder %s69, %s72
      %p81 = scmp.eq.s32.totalorder %s26, 1
      %p82 = por %p80, %p81
      %p83 = scmp.ne.s32.totalorder %s72, %s73
      %p84 = scmp.eq.s32.totalorder %s26, 0
      %p85 = por %p83, %p84
      %p86 = scmp.ne.s32.totalorder %s72, %s73
      %p87 = scmp.eq.s32.totalorder %s27, 1
      %p88 = por %p86, %p87
      %p90 = scmp.ne.s32.totalorder %s73, %s89
      %p91 = scmp.eq.s32.totalorder %s27, 0
      %p92 = por %p90, %p91
      %s94 = sadd.s32 %s93, 1
      %p97 = scmp.eq.s32.totalorder %s21, 1
      %p98 = scmp.ne.s32.totalorder %s93, %s95
      %p99 = scmp.eq.s32.totalorder %s21, 0
      %p100 = por %p98, %p99
      %p101 = scmp.ne.s32.totalorder %s93, %s95
      %p102 = scmp.eq.s32.totalorder %s26, 1
      %p103 = por %p101, %p102
      %p104 = scmp.ne.s32.totalorder %s95, %s96
      %p105 = scmp.eq.s32.totalorder %s26, 0
      %p106 = por %p104, %p105
      %p107 = scmp.ne.s32.totalorder %s95, %s96
      %p108 = scmp.eq.s32.totalorder %s27, 1
      %p109 = por %p107, %p108
      %p111 = scmp.ne.s32.totalorder %s96, %s110
      %p112 = scmp.eq.s32.totalorder %s27, 0
      %p113 = por %p111, %p112
      %s115 = sadd.s32 %s114, 1
      %p118 = scmp.eq.s32.totalorder %s21, 1
      %p119 = scmp.ne.s32.totalorder %s114, %s116
      %p120 = scmp.eq.s32.totalorder %s21, 0
      %p121 = por %p119, %p120
      %p122 = scmp.ne.s32.totalorder %s114, %s116
      %p123 = scmp.eq.s32.totalorder %s26, 1
      %p124 = por %p122, %p123
      %p125 = scmp.ne.s32.totalorder %s116, %s117
      %p126 = scmp.eq.s32.totalorder %s26, 0
      %p127 = por %p125, %p126
      %p128 = scmp.ne.s32.totalorder %s116, %s117
      %p129 = scmp.eq.s32.totalorder %s27, 1
      %p130 = por %p128, %p129
      %p132 = scmp.ne.s32.totalorder %s117, %s131
      %p133 = scmp.eq.s32.totalorder %s27, 0
      %p134 = por %p132, %p133
      %s136 = sadd.s32 %s135, 1
      %p139 = scmp.eq.s32.totalorder %s21, 1
      %p140 = scmp.ne.s32.totalorder %s135, %s137
      %p141 = scmp.eq.s32.totalorder %s21, 0
      %p142 = por %p140, %p141
      %p143 = scmp.ne.s32.totalorder %s135, %s137
      %p144 = scmp.eq.s32.totalorder %s26, 1
      %p145 = por %p143, %p144
      %p146 = scmp.ne.s32.totalorder %s137, %s138
      %p147 = scmp.eq.s32.totalorder %s26, 0
      %p148 = por %p146, %p147
      %p149 = scmp.ne.s32.totalorder %s137, %s138
      %p150 = scmp.eq.s32.totalorder %s27, 1
      %p151 = por %p149, %p150
      %p153 = scmp.ne.s32.totalorder %s138, %s152
      %p154 = scmp.eq.s32.totalorder %s27, 0
      %p155 = por %p153, %p154
      %s157 = sadd.s32 %s156, 1
      %p160 = scmp.eq.s32.totalorder %s21, 1
      %p161 = scmp.ne.s32.totalorder %s156, %s158
      %p162 = scmp.eq.s32.totalorder %s21, 0
      %p163 = por %p161, %p162
      %p164 = scmp.ne.s32.totalorder %s156, %s158
      %p165 = scmp.eq.s32.totalorder %s26, 1
      %p166 = por %p164, %p165
      %p167 = scmp.ne.s32.totalorder %s158, %s159
      %p168 = scmp.eq.s32.totalorder %s26, 0
      %p169 = por %p167, %p168
      %p170 = scmp.ne.s32.totalorder %s158, %s159
      %p171 = scmp.eq.s32.totalorder %s27, 1
      %p172 = por %p170, %p171
      %p174 = scmp.ne.s32.totalorder %s159, %s173
      %p175 = scmp.eq.s32.totalorder %s27, 0
      %p176 = por %p174, %p175
      %s178 = sadd.s32 %s177, 1
      %p181 = scmp.eq.s32.totalorder %s21, 1
      %p182 = scmp.ne.s32.totalorder %s177, %s179
      %p183 = scmp.eq.s32.totalorder %s21, 0
      %p184 = por %p182, %p183
      %p185 = scmp.ne.s32.totalorder %s177, %s179
      %p186 = scmp.eq.s32.totalorder %s26, 1
      %p187 = por %p185, %p186
      %p188 = scmp.ne.s32.totalorder %s179, %s180
      %p189 = scmp.eq.s32.totalorder %s26, 0
      %p190 = por %p188, %p189
      %p191 = scmp.ne.s32.totalorder %s179, %s180
      %p192 = scmp.eq.s32.totalorder %s27, 1
      %p193 = por %p191, %p192
      %p195 = scmp.ne.s32.totalorder %s180, %s194
      %p196 = scmp.eq.s32.totalorder %s27, 0
      %p197 = por %p195, %p196
      %s199 = sadd.s32 %s198, 1
      %p202 = scmp.eq.s32.totalorder %s21, 1
      %p203 = scmp.ne.s32.totalorder %s198, %s200
      %p204 = scmp.eq.s32.totalorder %s21, 0
      %p205 = por %p203, %p204
      %p206 = scmp.ne.s32.totalorder %s198, %s200
      %p207 = scmp.eq.s32.totalorder %s26, 1
      %p208 = por %p206, %p207
      %p209 = scmp.ne.s32.totalorder %s200, %s201
      %p210 = scmp.eq.s32.totalorder %s26, 0
      %p211 = por %p209, %p210
      %p212 = scmp.ne.s32.totalorder %s200, %s201
      %p213 = scmp.eq.s32.totalorder %s27, 1
      %p214 = por %p212, %p213
      %p216 = scmp.ne.s32.totalorder %s201, %s215
      %p217 = scmp.eq.s32.totalorder %s27, 0
      %p218 = por %p216, %p217
      %s219 = ssub.s32 %s28, %s40
      %s220 = ssub.s32 %s29, %s36
      %s221 = sor.u32 %s219, %s220
      %p222 = scmp.eq.s32.totalorder %s221, 0
      %s224 = sadd.s32 %s223, 1
      %s225 = scalar_select %p222, %s223, %s224
      %p228 = pneg %p222
      %p229 = scmp.eq.s32.totalorder %s21, 1
      %p230 = por %p228, %p229
      %p231 = scmp.ne.s32.totalorder %s223, %s226
      %p232 = scmp.eq.s32.totalorder %s21, 0
      %p233 = por %p231, %p232
      %p234 = scmp.ne.s32.totalorder %s223, %s226
      %p235 = scmp.eq.s32.totalorder %s26, 1
      %p236 = por %p234, %p235
      %p237 = scmp.ne.s32.totalorder %s226, %s227
      %p238 = scmp.eq.s32.totalorder %s26, 0
      %p239 = por %p237, %p238
      %p240 = scmp.ne.s32.totalorder %s226, %s227
      %p241 = scmp.eq.s32.totalorder %s27, 1
      %p242 = por %p240, %p241
      %p244 = scmp.ne.s32.totalorder %s227, %s243
      %p245 = scmp.eq.s32.totalorder %s27, 0
      %p246 = por %p244, %p245
      %s247 = ssub.s32 %s28, %s40
      %s248 = ssub.s32 %s29, %s36
      %s249 = sor.u32 %s247, %s248
      %p250 = scmp.eq.s32.totalorder %s249, 0
      %s252 = sadd.s32 %s251, 1
      %s253 = scalar_select %p250, %s251, %s252
      %p256 = pneg %p250
      %p257 = scmp.eq.s32.totalorder %s21, 1
      %p258 = por %p256, %p257
      %p259 = scmp.ne.s32.totalorder %s251, %s254
      %p260 = scmp.eq.s32.totalorder %s21, 0
      %p261 = por %p259, %p260
      %p262 = scmp.ne.s32.totalorder %s251, %s254
      %p263 = scmp.eq.s32.totalorder %s26, 1
      %p264 = por %p262, %p263
      %p265 = scmp.ne.s32.totalorder %s254, %s255
      %p266 = scmp.eq.s32.totalorder %s26, 0
      %p267 = por %p265, %p266
      %p268 = scmp.ne.s32.totalorder %s254, %s255
      %p269 = scmp.eq.s32.totalorder %s27, 1
      %p270 = por %p268, %p269
      %p272 = scmp.ne.s32.totalorder %s255, %s271
      %p273 = scmp.eq.s32.totalorder %s27, 0
      %p274 = por %p272, %p273
      %p275 = scmp.le.s32.totalorder 1, %s21
      %p276 = scmp.lt.s32.totalorder %s21, 3
      %p277 = pnand %p275, %p276
      %p278 = pneg %p277
      // Predicated region
      $region9: #{tpu_custom_call.1} parent=5 // pred_check
        _
      $region10: #{tpu_custom_call.1} parent=5 // pred_check_branch
        %280 = sbr.rel (%p277) target = $region12
      $region11: #{tpu_custom_call.1} parent=5 // pred_region
        %s281 = ssub.s32 %s21, 1
        // Predicated region
        $region13: #{tpu_custom_call.1} parent=11 // pred_check
          %p282 = pneg %p106
        $region14: #{tpu_custom_call.1} parent=11 // pred_check_branch
          %284 = sbr.rel (%p282) target = $region16
        $region15: #{tpu_custom_call.1} parent=11 // pred_region
          _
        $region16: #{tpu_custom_call.1} parent=11 // pred_fallthru
          _
        // Predicated region
        $region17: #{tpu_custom_call.1} parent=11 // pred_check
          %p285 = pneg %p127
        $region18: #{tpu_custom_call.1} parent=11 // pred_check_branch
          %287 = sbr.rel (%p285) target = $region20
        $region19: #{tpu_custom_call.1} parent=11 // pred_region
          _
        $region20: #{tpu_custom_call.1} parent=11 // pred_fallthru
          _
        // Predicated region
        $region21: #{tpu_custom_call.1} parent=11 // pred_check
          %p288 = pneg %p148
        $region22: #{tpu_custom_call.1} parent=11 // pred_check_branch
          %290 = sbr.rel (%p288) target = $region24
        $region23: #{tpu_custom_call.1} parent=11 // pred_region
          _
        $region24: #{tpu_custom_call.1} parent=11 // pred_fallthru
          _
        // Predicated region
        $region25: #{tpu_custom_call.1} parent=11 // pred_check
          %p291 = pneg %p169
        $region26: #{tpu_custom_call.1} parent=11 // pred_check_branch
          %293 = sbr.rel (%p291) target = $region28
        $region27: #{tpu_custom_call.1} parent=11 // pred_region
          _
        $region28: #{tpu_custom_call.1} parent=11 // pred_fallthru
          _
        // Predicated region
        $region29: #{tpu_custom_call.1} parent=11 // pred_check
          %p294 = pneg %p190
        $region30: #{tpu_custom_call.1} parent=11 // pred_check_branch
          %296 = sbr.rel (%p294) target = $region32
        $region31: #{tpu_custom_call.1} parent=11 // pred_region
          %s298 = ssub.s32 64, 64
          %299 = vsyncadd [#allocation6], %s298
          %s301 = sshll.u32 %s6, 4
          %s302 = int_to_ptr.vmem [resolvable:$true] %s301
          %304 = dma.vmem_to_smem %s302, 64, [#allocation4], [#allocation6]
        $region32: #{tpu_custom_call.1} parent=11 // pred_fallthru
          _
        // Predicated region
        $region33: #{tpu_custom_call.1} parent=11 // pred_check
          %p305 = pneg %p211
        $region34: #{tpu_custom_call.1} parent=11 // pred_check_branch
          %307 = sbr.rel (%p305) target = $region36
        $region35: #{tpu_custom_call.1} parent=11 // pred_region
          %s309 = ssub.s32 16, 16
          %310 = vsyncadd [#allocation8], %s309
          %s312 = sshll.u32 %s7, 4
          %s313 = int_to_ptr.vmem [resolvable:$true] %s312
          %315 = dma.vmem_to_smem %s313, 16, [#allocation7], [#allocation8]
        $region36: #{tpu_custom_call.1} parent=11 // pred_fallthru
          _
      $region12: #{tpu_custom_call.1} parent=5 // pred_fallthru
        _
      %p316 = scmp.lt.s32.totalorder %s21, 2
      // Predicated region
      $region37: #{tpu_custom_call.1} parent=5 // pred_check
        %p317 = pneg %p316
      $region38: #{tpu_custom_call.1} parent=5 // pred_check_branch
        %319 = sbr.rel (%p317) target = $region40
      $region39: #{tpu_custom_call.1} parent=5 // pred_region
        // Predicated region
        $region41: #{tpu_custom_call.1} parent=39 // pred_check
          %p320 = pneg %p53
        $region42: #{tpu_custom_call.1} parent=39 // pred_check_branch
          %322 = sbr.rel (%p320) target = $region44
        $region43: #{tpu_custom_call.1} parent=39 // pred_region
          %p323 = scmp.lt.s32.totalorder %s28, 1
          %s324 = scalar_select %p323, %s28, 1
          %s325 = smul.addr %s324, 16
          %s326 = smul.addr %s325, 8
          %s327 = scalar_lea.vmem %s0, %s326
        $region44: #{tpu_custom_call.1} parent=39 // pred_fallthru
          _
        // Predicated region
        $region45: #{tpu_custom_call.1} parent=39 // pred_check
          %p328 = pneg %p79
        $region46: #{tpu_custom_call.1} parent=39 // pred_check_branch
          %330 = sbr.rel (%p328) target = $region48
        $region47: #{tpu_custom_call.1} parent=39 // pred_region
          %p331 = scmp.lt.s32.totalorder %s28, 1
          %s332 = scalar_select %p331, %s28, 1
          %s333 = smul.addr %s332, 4
          %s334 = smul.addr %s333, 8
          %s335 = scalar_lea.vmem %s1, %s334
        $region48: #{tpu_custom_call.1} parent=39 // pred_fallthru
          _
      $region40: #{tpu_custom_call.1} parent=5 // pred_fallthru
        _
      %p336 = scmp.le.s32.totalorder 1, %s21
      %p337 = scmp.lt.s32.totalorder %s21, 3
      %p338 = pnand %p336, %p337
      %p339 = pneg %p338
      // Predicated region
      $region49: #{tpu_custom_call.1} parent=5 // pred_check
        _
      $region50: #{tpu_custom_call.1} parent=5 // pred_check_branch
        %341 = sbr.rel (%p338) target = $region52
      $region51: #{tpu_custom_call.1} parent=5 // pred_region
        %s342 = ssub.s32 %s21, 1
        // Predicated region
        $region53: #{tpu_custom_call.1} parent=51 // pred_check
          %p343 = pneg %p190
        $region54: #{tpu_custom_call.1} parent=51 // pred_check_branch
          %345 = sbr.rel (%p343) target = $region56
        $region55: #{tpu_custom_call.1} parent=51 // pred_region
          %346 = dma.done [#allocation6], 64
        $region56: #{tpu_custom_call.1} parent=51 // pred_fallthru
          _
        // Predicated region
        $region57: #{tpu_custom_call.1} parent=51 // pred_check
          %p347 = pneg %p211
        $region58: #{tpu_custom_call.1} parent=51 // pred_check_branch
          %349 = sbr.rel (%p347) target = $region60
        $region59: #{tpu_custom_call.1} parent=51 // pred_region
          %350 = dma.done [#allocation8], 16
        $region60: #{tpu_custom_call.1} parent=51 // pred_fallthru
          _
        %351 = sfence
        %p352 = scmp.lt.s32.totalorder %s30, 1
        %s353 = scalar_select %p352, %s30, 1
        %s354 = smul.addr %s353, 16
        %s355 = smul.addr %s354, 8
        %s356 = scalar_lea.vmem %s0, %s355
        %p357 = pneg %p59
        %p358 = pneg %p56
        %p359 = scmp.lt.s32.totalorder %s30, 1
        %s360 = scalar_select %p359, %s30, 1
        %s361 = smul.addr %s360, 4
        %s362 = smul.addr %s361, 8
        %s363 = scalar_lea.vmem %s1, %s362
        %p364 = pneg %p85
        %p365 = pneg %p82
        %p366 = pneg %p106
        %p367 = pneg %p103
        %p368 = pneg %p127
        %p369 = pneg %p124
        %p370 = pneg %p148
        %p371 = pneg %p145
        %p372 = pneg %p169
        %p373 = pneg %p166
        %p374 = pneg %p190
        %p375 = pneg %p187
        %p376 = pneg %p211
        %p377 = pneg %p208
        %p378 = pneg %p239
        %p379 = pneg %p236
        %s380 = smul.u32 16, %s31
        %p381 = scmp.lt.s32.totalorder %s30, 1
        %s382 = scalar_select %p381, %s30, 1
        %p383 = scmp.lt.s32.totalorder %s380, 15
        %s384 = scalar_select %p383, %s380, 15
        %s385 = smul.addr %s382, 16
        %s386 = sadd.s32 %s384, %s385
        %s387 = smul.addr %s386, 8
        %s388 = scalar_lea.vmem %s8, %s387
        %p389 = pneg %p267
        %p390 = pneg %p264
        %s391 = sand.u32 %s254, 1
        %s392 = scalar_lea.sflag [#allocation5], %s391
        %s393 = sand.u32 %s254, 1
        %s394 = smul.addr %s393, 512
        %s395 = scalar_lea.vmem [#allocation9], %s394
        %p396 = scmp.lt.s32.totalorder %s30, 1
        %s397 = scalar_select %p396, %s30, 1
        %s398 = smul.addr %s397, 16
        %s399 = smul.addr %s398, 8
        %s400 = scalar_lea.vmem %s0, %s399
        %p401 = scmp.lt.s32.totalorder %s30, 1
        %s402 = scalar_select %p401, %s30, 1
        %s403 = smul.addr %s402, 4
        %s404 = smul.addr %s403, 8
        %s405 = scalar_lea.vmem %s1, %s404
        %s406 = smul.u32 16, %s31
        %p407 = scmp.lt.s32.totalorder %s30, 1
        %s408 = scalar_select %p407, %s30, 1
        %p409 = scmp.lt.s32.totalorder %s406, 15
        %s410 = scalar_select %p409, %s406, 15
        %s411 = smul.addr %s408, 16
        %s412 = sadd.s32 %s410, %s411
        %s413 = smul.addr %s412, 8
        %s414 = scalar_lea.vmem %s8, %s413
        %s415 = smul.u32 16, %s31
        %s416 = smul.u32 16, %s31
        %p417 = scmp.eq.s32.totalorder %s31, 0
        // Predicated region
        $region61: #{tpu_custom_call.1} parent=51 // pred_check
          %p418 = pneg %p417
        $region62: #{tpu_custom_call.1} parent=51 // pred_check_branch
          %420 = sbr.rel (%p418) target = $region64
        $region63: #{tpu_custom_call.1} parent=51 // pred_region
          %v421 = vld [vmem:[%s3] sm:$0xff]
          %v422 = vld [vmem:[%s3 + $0x8] sm:$0xff]
          %v423 = vld [vmem:[%s3 + $0x10] sm:$0xff]
          %v424 = vld [vmem:[%s3 + $0x18] sm:$0xff]
          %v425 = vld [vmem:[%s405] sm:$0xff]
          %v426 = vld [vmem:[%s405 + $0x8] sm:$0xff]
          %v427 = vld [vmem:[%s405 + $0x10] sm:$0xff]
          %v428 = vld [vmem:[%s405 + $0x18] sm:$0xff]
          %vm429 = vcmask 261120
          %v431 = vsel %vm429, %v421, 0
          %v434 = vsel %vm429, %v422, 0
          %v437 = vsel %vm429, %v423, 0
          %v440 = vsel %vm429, %v424, 0
          %442 = vmatprep.subr.mxu0 0.0
          %443 = vmatpush1.msra.mxu0 %v425
          %444 = vmatprep.subr.mxu0 0.0
          %445 = vmatpush1.msra.mxu0 %v426
          %446 = vmatprep.subr.mxu0 0.0
          %447 = vmatpush1.msra.mxu0 %v427
          %448 = vmatprep.subr.mxu0 0.0
          %449 = vmatpush1.msra.mxu0 %v428
          %450 = vmatprep.subr.mxu0 0.0
          %451 = vmatpush1.msra.mxu0 0.0
          %452 = vmatprep.subr.mxu0 0.0
          %453 = vmatpush1.msra.mxu0 0.0
          %454 = vmatprep.subr.mxu0 0.0
          %455 = vmatpush1.msra.mxu0 0.0
          %456 = vmatprep.subr.mxu0 0.0
          %457 = vmatpush1.msra.mxu0 0.0
          %458 = vmatprep.subr.mxu0 0.0
          %459 = vmatpush1.msra.mxu0 0.0
          %460 = vmatprep.subr.mxu0 0.0
          %461 = vmatpush1.msra.mxu0 0.0
          %462 = vmatprep.subr.mxu0 0.0
          %463 = vmatpush1.msra.mxu0 0.0
          %464 = vmatprep.subr.mxu0 0.0
          %465 = vmatpush1.msra.mxu0 0.0
          %466 = vmatprep.subr.mxu0 0.0
          %467 = vmatpush1.msra.mxu0 0.0
          %468 = vmatprep.subr.mxu0 0.0
          %469 = vmatpush1.msra.mxu0 0.0
          %470 = vmatprep.subr.mxu0 0.0
          %471 = vmatpush1.msra.mxu0 0.0
          %472 = vmatprep.subr.mxu0 0.0
          %473 = vmatpush1.msra.mxu0 0.0
          %474 = vmatprep.subr.mxu0 0.0
          %475 = vmatpush1.msra.mxu0 0.0
          %476 = vmatprep.subr.mxu0 0.0
          %477 = vmatpush1.msra.mxu0 0.0
          %478 = vmatprep.subr.mxu0 0.0
          %479 = vmatpush1.msra.mxu0 0.0
          %480 = vmatprep.subr.mxu0 0.0
          %481 = vmatpush1.msra.mxu0 0.0
          %482 = vmatprep.subr.mxu0 0.0
          %483 = vmatpush1.msra.mxu0 0.0
          %484 = vmatprep.subr.mxu0 0.0
          %485 = vmatpush1.msra.mxu0 0.0
          %486 = vmatprep.subr.mxu0 0.0
          %487 = vmatpush1.msra.mxu0 0.0
          %488 = vmatprep.subr.mxu0 0.0
          %489 = vmatpush1.msra.mxu0 0.0
          %490 = vmatprep.subr.mxu0 0.0
          %491 = vmatpush1.msra.mxu0 0.0
          %492 = vmatprep.subr.mxu0 0.0
          %493 = vmatpush1.msra.mxu0 0.0
          %494 = vmatprep.subr.mxu0 0.0
          %495 = vmatpush1.msra.mxu0 0.0
          %496 = vmatprep.subr.mxu0 0.0
          %497 = vmatpush1.msra.mxu0 0.0
          %498 = vmatprep.subr.mxu0 0.0
          %499 = vmatpush1.msra.mxu0 0.0
          %500 = vmatprep.subr.mxu0 0.0
          %501 = vmatpush1.msra.mxu0 0.0
          %502 = vmatprep.subr.mxu0 0.0
          %503 = vmatpush1.msra.mxu0 0.0
          %504 = vmatprep.subr.mxu0 0.0
          %505 = vmatpush1.msra.mxu0 0.0
          %506 = vmatprep.mubr.f32.mxu0 0.0
          %507 = vmatmul.mubr.f32.gmra.mrb[0].mxu0 %v431
          %v508 = vpop.f32.mrb[0].mxu0
          %v509 = vadd.f32 0.0, %v508
          %v510 = vpop.f32.mrb[0].mxu0
          %511 = vmatprep.mubr.f32.mxu0 0.0
          %512 = vmatmul.mubr.f32.gmra.mrb[0].mxu0 %v434
          %v513 = vpop.f32.mrb[0].mxu0
          %v514 = vadd.f32 0.0, %v513
          %v515 = vpop.f32.mrb[0].mxu0
          %516 = vmatprep.mubr.f32.mxu0 0.0
          %517 = vmatmul.mubr.f32.gmra.mrb[0].mxu0 %v437
          %v518 = vpop.f32.mrb[0].mxu0
          %v519 = vadd.f32 0.0, %v518
          %v520 = vpop.f32.mrb[0].mxu0
          %521 = vmatprep.mubr.f32.mxu0 0.0
          %522 = vmatmul.mubr.f32.gmra.mrb[0].mxu0 %v440
          %v523 = vpop.f32.mrb[0].mxu0
          %v524 = vadd.f32 0.0, %v523
          %v525 = vpop.f32.mrb[0].mxu0
          %526 = vdwg.mxu0
          %v527 = vld [vmem:[%s400] sm:$0xff]
          %v528 = vld [vmem:[%s400 + $0x8] sm:$0xff]
          %v529 = vld [vmem:[%s400 + $0x10] sm:$0xff]
          %v530 = vld [vmem:[%s400 + $0x18] sm:$0xff]
          %v531 = vld [vmem:[%s400 + $0x20] sm:$0xff]
          %v532 = vld [vmem:[%s400 + $0x28] sm:$0xff]
          %v533 = vld [vmem:[%s400 + $0x30] sm:$0xff]
          %v534 = vld [vmem:[%s400 + $0x38] sm:$0xff]
          %v535 = vld [vmem:[%s400 + $0x40] sm:$0xff]
          %v536 = vld [vmem:[%s400 + $0x48] sm:$0xff]
          %v537 = vld [vmem:[%s400 + $0x50] sm:$0xff]
          %v538 = vld [vmem:[%s400 + $0x58] sm:$0xff]
          %v539 = vld [vmem:[%s400 + $0x60] sm:$0xff]
          %v540 = vld [vmem:[%s400 + $0x68] sm:$0xff]
          %v541 = vld [vmem:[%s400 + $0x70] sm:$0xff]
          %v542 = vld [vmem:[%s400 + $0x78] sm:$0xff]
          %v543 = vld [vmem:[%s2] sm:$0xff]
          %v544 = vld [vmem:[%s2 + $0x8] sm:$0xff]
          %v545 = vld [vmem:[%s2 + $0x10] sm:$0xff]
          %v546 = vld [vmem:[%s2 + $0x18] sm:$0xff]
          %551 = vrot.lane.b32.xlu0 %v543, 96
          %v552 = vpop.permute.xlu0 %551
          %553 = vrot.lane.b32.xlu0 %v544, 96
          %v554 = vpop.permute.xlu0 %553
          %555 = vrot.lane.b32.xlu0 %v545, 96
          %v556 = vpop.permute.xlu0 %555
          %557 = vrot.lane.b32.xlu0 %v546, 96
          %v558 = vpop.permute.xlu0 %557
          %v564 = vsel %vm429, %v527, 0
          %v567 = vsel %vm429, %v528, 0
          %v570 = vsel %vm429, %v529, 0
          %v573 = vsel %vm429, %v530, 0
          %v576 = vsel %vm429, %v531, 0
          %v579 = vsel %vm429, %v532, 0
          %v582 = vsel %vm429, %v533, 0
          %v585 = vsel %vm429, %v534, 0
          %v588 = vsel %vm429, %v535, 0
          %v591 = vsel %vm429, %v536, 0
          %v594 = vsel %vm429, %v537, 0
          %v597 = vsel %vm429, %v538, 0
          %v600 = vsel %vm429, %v539, 0
          %v603 = vsel %vm429, %v540, 0
          %v606 = vsel %vm429, %v541, 0
          %v609 = vsel %vm429, %v542, 0
          %611 = vmatprep.subr.mxu0 0.0
          %612 = vmatpush1.msra.mxu0 %v552
          %613 = vmatprep.subr.mxu0 0.0
          %614 = vmatpush1.msra.mxu0 %v554
          %615 = vmatprep.subr.mxu0 0.0
          %616 = vmatpush1.msra.mxu0 %v556
          %617 = vmatprep.subr.mxu0 0.0
          %618 = vmatpush1.msra.mxu0 %v558
          %619 = vmatprep.subr.mxu0 0.0
          %620 = vmatpush1.msra.mxu0 0.0
          %621 = vmatprep.subr.mxu0 0.0
          %622 = vmatpush1.msra.mxu0 0.0
          %623 = vmatprep.subr.mxu0 0.0
          %624 = vmatpush1.msra.mxu0 0.0
          %625 = vmatprep.subr.mxu0 0.0
          %626 = vmatpush1.msra.mxu0 0.0
          %627 = vmatprep.subr.mxu0 0.0
          %628 = vmatpush1.msra.mxu0 0.0
          %629 = vmatprep.subr.mxu0 0.0
          %630 = vmatpush1.msra.mxu0 0.0
          %631 = vmatprep.subr.mxu0 0.0
          %632 = vmatpush1.msra.mxu0 0.0
          %633 = vmatprep.subr.mxu0 0.0
          %634 = vmatpush1.msra.mxu0 0.0
          %635 = vmatprep.subr.mxu0 0.0
          %636 = vmatpush1.msra.mxu0 0.0
          %637 = vmatprep.subr.mxu0 0.0
          %638 = vmatpush1.msra.mxu0 0.0
          %639 = vmatprep.subr.mxu0 0.0
          %640 = vmatpush1.msra.mxu0 0.0
          %641 = vmatprep.subr.mxu0 0.0
          %642 = vmatpush1.msra.mxu0 0.0
          %643 = vmatprep.subr.mxu0 0.0
          %644 = vmatpush1.msra.mxu0 0.0
          %645 = vmatprep.subr.mxu0 0.0
          %646 = vmatpush1.msra.mxu0 0.0
          %647 = vmatprep.subr.mxu0 0.0
          %648 = vmatpush1.msra.mxu0 0.0
          %649 = vmatprep.subr.mxu0 0.0
          %650 = vmatpush1.msra.mxu0 0.0
          %651 = vmatprep.subr.mxu0 0.0
          %652 = vmatpush1.msra.mxu0 0.0
          %653 = vmatprep.subr.mxu0 0.0
          %654 = vmatpush1.msra.mxu0 0.0
          %655 = vmatprep.subr.mxu0 0.0
          %656 = vmatpush1.msra.mxu0 0.0
          %657 = vmatprep.subr.mxu0 0.0
          %658 = vmatpush1.msra.mxu0 0.0
          %659 = vmatprep.subr.mxu0 0.0
          %660 = vmatpush1.msra.mxu0 0.0
          %661 = vmatprep.subr.mxu0 0.0
          %662 = vmatpush1.msra.mxu0 0.0
          %663 = vmatprep.subr.mxu0 0.0
          %664 = vmatpush1.msra.mxu0 0.0
          %665 = vmatprep.subr.mxu0 0.0
          %666 = vmatpush1.msra.mxu0 0.0
          %667 = vmatprep.subr.mxu0 0.0
          %668 = vmatpush1.msra.mxu0 0.0
          %669 = vmatprep.subr.mxu0 0.0
          %670 = vmatpush1.msra.mxu0 0.0
          %671 = vmatprep.subr.mxu0 0.0
          %672 = vmatpush1.msra.mxu0 0.0
          %673 = vmatprep.subr.mxu0 0.0
          %674 = vmatpush1.msra.mxu0 0.0
          %675 = vmatprep.mubr.f32.mxu0 0.0
          %676 = vmatmul.mubr.f32.gmra.mrb[0].mxu0 %v564
          %v677 = vpop.f32.mrb[0].mxu0
          %v678 = vadd.f32 0.0, %v677
          %v679 = vpop.f32.mrb[0].mxu0
          %680 = vmatprep.mubr.f32.mxu0 0.0
          %681 = vmatmul.mubr.f32.gmra.mrb[0].mxu0 %v567
          %v682 = vpop.f32.mrb[0].mxu0
          %v683 = vadd.f32 0.0, %v682
          %v684 = vpop.f32.mrb[0].mxu0
          %685 = vmatprep.mubr.f32.mxu0 0.0
          %686 = vmatmul.mubr.f32.gmra.mrb[0].mxu0 %v570
          %v687 = vpop.f32.mrb[0].mxu0
          %v688 = vadd.f32 0.0, %v687
          %v689 = vpop.f32.mrb[0].mxu0
          %690 = vmatprep.mubr.f32.mxu0 0.0
          %691 = vmatmul.mubr.f32.gmra.mrb[0].mxu0 %v573
          %v692 = vpop.f32.mrb[0].mxu0
          %v693 = vadd.f32 0.0, %v692
          %v694 = vpop.f32.mrb[0].mxu0
          %695 = vmatprep.mubr.f32.mxu0 0.0
          %696 = vmatmul.mubr.f32.gmra.mrb[0].mxu0 %v576
          %v697 = vpop.f32.mrb[0].mxu0
          %v698 = vadd.f32 0.0, %v697
          %v699 = vpop.f32.mrb[0].mxu0
          %700 = vmatprep.mubr.f32.mxu0 0.0
          %701 = vmatmul.mubr.f32.gmra.mrb[0].mxu0 %v579
          %v702 = vpop.f32.mrb[0].mxu0
          %v703 = vadd.f32 0.0, %v702
          %v704 = vpop.f32.mrb[0].mxu0
          %705 = vmatprep.mubr.f32.mxu0 0.0
          %706 = vmatmul.mubr.f32.gmra.mrb[0].mxu0 %v582
          %v707 = vpop.f32.mrb[0].mxu0
          %v708 = vadd.f32 0.0, %v707
          %v709 = vpop.f32.mrb[0].mxu0
          %710 = vmatprep.mubr.f32.mxu0 0.0
          %711 = vmatmul.mubr.f32.gmra.mrb[0].mxu0 %v585
          %v712 = vpop.f32.mrb[0].mxu0
          %v713 = vadd.f32 0.0, %v712
          %v714 = vpop.f32.mrb[0].mxu0
          %715 = vmatprep.mubr.f32.mxu0 0.0
          %716 = vmatmul.mubr.f32.gmra.mrb[0].mxu0 %v588
          %v717 = vpop.f32.mrb[0].mxu0
          %v718 = vadd.f32 0.0, %v717
          %v719 = vpop.f32.mrb[0].mxu0
          %720 = vmatprep.mubr.f32.mxu0 0.0
          %721 = vmatmul.mubr.f32.gmra.mrb[0].mxu0 %v591
          %v722 = vpop.f32.mrb[0].mxu0
          %v723 = vadd.f32 0.0, %v722
          %v724 = vpop.f32.mrb[0].mxu0
          %725 = vmatprep.mubr.f32.mxu0 0.0
          %726 = vmatmul.mubr.f32.gmra.mrb[0].mxu0 %v594
          %v727 = vpop.f32.mrb[0].mxu0
          %v728 = vadd.f32 0.0, %v727
          %v729 = vpop.f32.mrb[0].mxu0
          %730 = vmatprep.mubr.f32.mxu0 0.0
          %731 = vmatmul.mubr.f32.gmra.mrb[0].mxu0 %v597
          %v732 = vpop.f32.mrb[0].mxu0
          %v733 = vadd.f32 0.0, %v732
          %v734 = vpop.f32.mrb[0].mxu0
          %735 = vmatprep.mubr.f32.mxu0 0.0
          %736 = vmatmul.mubr.f32.gmra.mrb[0].mxu0 %v600
          %v737 = vpop.f32.mrb[0].mxu0
          %v738 = vadd.f32 0.0, %v737
          %v739 = vpop.f32.mrb[0].mxu0
          %740 = vmatprep.mubr.f32.mxu0 0.0
          %741 = vmatmul.mubr.f32.gmra.mrb[0].mxu0 %v603
          %v742 = vpop.f32.mrb[0].mxu0
          %v743 = vadd.f32 0.0, %v742
          %v744 = vpop.f32.mrb[0].mxu0
          %745 = vmatprep.mubr.f32.mxu0 0.0
          %746 = vmatmul.mubr.f32.gmra.mrb[0].mxu0 %v606
          %v747 = vpop.f32.mrb[0].mxu0
          %v748 = vadd.f32 0.0, %v747
          %v749 = vpop.f32.mrb[0].mxu0
          %750 = vmatprep.mubr.f32.mxu0 0.0
          %751 = vmatmul.mubr.f32.gmra.mrb[0].mxu0 %v609
          %v752 = vpop.f32.mrb[0].mxu0
          %v753 = vadd.f32 0.0, %v752
          %v754 = vpop.f32.mrb[0].mxu0
          %755 = vdwg.mxu0
          %756 = vst [vmem:[#allocation2] sm:$0xff] %v509
          %vm757 = vcmask 64512
          %758 = vst.msk [vmem:[#allocation3] sm:$0xff] %vm757, %v678
          %759 = vst.msk [vmem:[#allocation3 + $0x8] sm:$0xff] %vm757, %v683
          %760 = vst.msk [vmem:[#allocation3 + $0x10] sm:$0xff] %vm757, %v688
          %761 = vst.msk [vmem:[#allocation3 + $0x18] sm:$0xff] %vm757, %v693
          %762 = vst.msk [vmem:[#allocation3 + $0x20] sm:$0xff] %vm757, %v698
          %763 = vst.msk [vmem:[#allocation3 + $0x28] sm:$0xff] %vm757, %v703
          %764 = vst.msk [vmem:[#allocation3 + $0x30] sm:$0xff] %vm757, %v708
          %765 = vst.msk [vmem:[#allocation3 + $0x38] sm:$0xff] %vm757, %v713
          %766 = vst.msk [vmem:[#allocation3 + $0x40] sm:$0xff] %vm757, %v718
          %767 = vst.msk [vmem:[#allocation3 + $0x48] sm:$0xff] %vm757, %v723
          %768 = vst.msk [vmem:[#allocation3 + $0x50] sm:$0xff] %vm757, %v728
          %769 = vst.msk [vmem:[#allocation3 + $0x58] sm:$0xff] %vm757, %v733
          %770 = vst.msk [vmem:[#allocation3 + $0x60] sm:$0xff] %vm757, %v738
          %771 = vst.msk [vmem:[#allocation3 + $0x68] sm:$0xff] %vm757, %v743
          %772 = vst.msk [vmem:[#allocation3 + $0x70] sm:$0xff] %vm757, %v748
          %773 = vst.msk [vmem:[#allocation3 + $0x78] sm:$0xff] %vm757, %v753
          %s774 = scalar_lea.vmem [#allocation2], 8
          %775 = vst [vmem:[%s774] sm:$0xff] %v514
          %792 = vrot.lane.b32.xlu0 %v678, 120
          %v793 = vpop.permute.xlu0 %792
          %794 = vrot.lane.b32.xlu0 %v683, 120
          %v795 = vpop.permute.xlu0 %794
          %796 = vrot.lane.b32.xlu0 %v688, 120
          %v797 = vpop.permute.xlu0 %796
          %798 = vrot.lane.b32.xlu0 %v693, 120
          %v799 = vpop.permute.xlu0 %798
          %800 = vrot.lane.b32.xlu0 %v698, 120
          %v801 = vpop.permute.xlu0 %800
          %802 = vrot.lane.b32.xlu0 %v703, 120
          %v803 = vpop.permute.xlu0 %802
          %804 = vrot.lane.b32.xlu0 %v708, 120
          %v805 = vpop.permute.xlu0 %804
          %806 = vrot.lane.b32.xlu0 %v713, 120
          %v807 = vpop.permute.xlu0 %806
          %808 = vrot.lane.b32.xlu0 %v718, 120
          %v809 = vpop.permute.xlu0 %808
          %810 = vrot.lane.b32.xlu0 %v723, 120
          %v811 = vpop.permute.xlu0 %810
          %812 = vrot.lane.b32.xlu0 %v728, 120
          %v813 = vpop.permute.xlu0 %812
          %814 = vrot.lane.b32.xlu0 %v733, 120
          %v815 = vpop.permute.xlu0 %814
          %816 = vrot.lane.b32.xlu0 %v738, 120
          %v817 = vpop.permute.xlu0 %816
          %818 = vrot.lane.b32.xlu0 %v743, 120
          %v819 = vpop.permute.xlu0 %818
          %820 = vrot.lane.b32.xlu0 %v748, 120
          %v821 = vpop.permute.xlu0 %820
          %822 = vrot.lane.b32.xlu0 %v753, 120
          %v823 = vpop.permute.xlu0 %822
          %s840 = scalar_lea.vmem [#allocation3], 128
          %841 = vst.msk [vmem:[%s840] sm:$0xff] %vm757, %v793
          %842 = vst.msk [vmem:[%s840 + $0x8] sm:$0xff] %vm757, %v795
          %843 = vst.msk [vmem:[%s840 + $0x10] sm:$0xff] %vm757, %v797
          %844 = vst.msk [vmem:[%s840 + $0x18] sm:$0xff] %vm757, %v799
          %845 = vst.msk [vmem:[%s840 + $0x20] sm:$0xff] %vm757, %v801
          %846 = vst.msk [vmem:[%s840 + $0x28] sm:$0xff] %vm757, %v803
          %847 = vst.msk [vmem:[%s840 + $0x30] sm:$0xff] %vm757, %v805
          %848 = vst.msk [vmem:[%s840 + $0x38] sm:$0xff] %vm757, %v807
          %849 = vst.msk [vmem:[%s840 + $0x40] sm:$0xff] %vm757, %v809
          %850 = vst.msk [vmem:[%s840 + $0x48] sm:$0xff] %vm757, %v811
          %851 = vst.msk [vmem:[%s840 + $0x50] sm:$0xff] %vm757, %v813
          %852 = vst.msk [vmem:[%s840 + $0x58] sm:$0xff] %vm757, %v815
          %853 = vst.msk [vmem:[%s840 + $0x60] sm:$0xff] %vm757, %v817
          %854 = vst.msk [vmem:[%s840 + $0x68] sm:$0xff] %vm757, %v819
          %855 = vst.msk [vmem:[%s840 + $0x70] sm:$0xff] %vm757, %v821
          %856 = vst.msk [vmem:[%s840 + $0x78] sm:$0xff] %vm757, %v823
          %s857 = scalar_lea.vmem [#allocation2], 16
          %858 = vst [vmem:[%s857] sm:$0xff] %v519
          %859 = vrot.lane.b32.xlu0 %v678, 112
          %v860 = vpop.permute.xlu0 %859
          %861 = vrot.lane.b32.xlu0 %v683, 112
          %v862 = vpop.permute.xlu0 %861
          %863 = vrot.lane.b32.xlu0 %v688, 112
          %v864 = vpop.permute.xlu0 %863
          %865 = vrot.lane.b32.xlu0 %v693, 112
          %v866 = vpop.permute.xlu0 %865
          %867 = vrot.lane.b32.xlu0 %v698, 112
          %v868 = vpop.permute.xlu0 %867
          %869 = vrot.lane.b32.xlu0 %v703, 112
          %v870 = vpop.permute.xlu0 %869
          %871 = vrot.lane.b32.xlu0 %v708, 112
          %v872 = vpop.permute.xlu0 %871
          %873 = vrot.lane.b32.xlu0 %v713, 112
          %v874 = vpop.permute.xlu0 %873
          %875 = vrot.lane.b32.xlu0 %v718, 112
          %v876 = vpop.permute.xlu0 %875
          %877 = vrot.lane.b32.xlu0 %v723, 112
          %v878 = vpop.permute.xlu0 %877
          %879 = vrot.lane.b32.xlu0 %v728, 112
          %v880 = vpop.permute.xlu0 %879
          %881 = vrot.lane.b32.xlu0 %v733, 112
          %v882 = vpop.permute.xlu0 %881
          %883 = vrot.lane.b32.xlu0 %v738, 112
          %v884 = vpop.permute.xlu0 %883
          %885 = vrot.lane.b32.xlu0 %v743, 112
          %v886 = vpop.permute.xlu0 %885
          %887 = vrot.lane.b32.xlu0 %v748, 112
          %v888 = vpop.permute.xlu0 %887
          %889 = vrot.lane.b32.xlu0 %v753, 112
          %v890 = vpop.permute.xlu0 %889
          %s907 = scalar_lea.vmem [#allocation3], 256
          %908 = vst.msk [vmem:[%s907] sm:$0xff] %vm757, %v860
          %909 = vst.msk [vmem:[%s907 + $0x8] sm:$0xff] %vm757, %v862
          %910 = vst.msk [vmem:[%s907 + $0x10] sm:$0xff] %vm757, %v864
          %911 = vst.msk [vmem:[%s907 + $0x18] sm:$0xff] %vm757, %v866
          %912 = vst.msk [vmem:[%s907 + $0x20] sm:$0xff] %vm757, %v868
          %913 = vst.msk [vmem:[%s907 + $0x28] sm:$0xff] %vm757, %v870
          %914 = vst.msk [vmem:[%s907 + $0x30] sm:$0xff] %vm757, %v872
          %915 = vst.msk [vmem:[%s907 + $0x38] sm:$0xff] %vm757, %v874
          %916 = vst.msk [vmem:[%s907 + $0x40] sm:$0xff] %vm757, %v876
          %917 = vst.msk [vmem:[%s907 + $0x48] sm:$0xff] %vm757, %v878
          %918 = vst.msk [vmem:[%s907 + $0x50] sm:$0xff] %vm757, %v880
          %919 = vst.msk [vmem:[%s907 + $0x58] sm:$0xff] %vm757, %v882
          %920 = vst.msk [vmem:[%s907 + $0x60] sm:$0xff] %vm757, %v884
          %921 = vst.msk [vmem:[%s907 + $0x68] sm:$0xff] %vm757, %v886
          %922 = vst.msk [vmem:[%s907 + $0x70] sm:$0xff] %vm757, %v888
          %923 = vst.msk [vmem:[%s907 + $0x78] sm:$0xff] %vm757, %v890
          %s924 = scalar_lea.vmem [#allocation2], 24
          %925 = vst [vmem:[%s924] sm:$0xff] %v524
          %926 = vrot.lane.b32.xlu0 %v678, 104
          %v927 = vpop.permute.xlu0 %926
          %928 = vrot.lane.b32.xlu0 %v683, 104
          %v929 = vpop.permute.xlu0 %928
          %930 = vrot.lane.b32.xlu0 %v688, 104
          %v931 = vpop.permute.xlu0 %930
          %932 = vrot.lane.b32.xlu0 %v693, 104
          %v933 = vpop.permute.xlu0 %932
          %934 = vrot.lane.b32.xlu0 %v698, 104
          %v935 = vpop.permute.xlu0 %934
          %936 = vrot.lane.b32.xlu0 %v703, 104
          %v937 = vpop.permute.xlu0 %936
          %938 = vrot.lane.b32.xlu0 %v708, 104
          %v939 = vpop.permute.xlu0 %938
          %940 = vrot.lane.b32.xlu0 %v713, 104
          %v941 = vpop.permute.xlu0 %940
          %942 = vrot.lane.b32.xlu0 %v718, 104
          %v943 = vpop.permute.xlu0 %942
          %944 = vrot.lane.b32.xlu0 %v723, 104
          %v945 = vpop.permute.xlu0 %944
          %946 = vrot.lane.b32.xlu0 %v728, 104
          %v947 = vpop.permute.xlu0 %946
          %948 = vrot.lane.b32.xlu0 %v733, 104
          %v949 = vpop.permute.xlu0 %948
          %950 = vrot.lane.b32.xlu0 %v738, 104
          %v951 = vpop.permute.xlu0 %950
          %952 = vrot.lane.b32.xlu0 %v743, 104
          %v953 = vpop.permute.xlu0 %952
          %954 = vrot.lane.b32.xlu0 %v748, 104
          %v955 = vpop.permute.xlu0 %954
          %956 = vrot.lane.b32.xlu0 %v753, 104
          %v957 = vpop.permute.xlu0 %956
          %s974 = scalar_lea.vmem [#allocation3], 384
          %975 = vst.msk [vmem:[%s974] sm:$0xff] %vm757, %v927
          %976 = vst.msk [vmem:[%s974 + $0x8] sm:$0xff] %vm757, %v929
          %977 = vst.msk [vmem:[%s974 + $0x10] sm:$0xff] %vm757, %v931
          %978 = vst.msk [vmem:[%s974 + $0x18] sm:$0xff] %vm757, %v933
          %979 = vst.msk [vmem:[%s974 + $0x20] sm:$0xff] %vm757, %v935
          %980 = vst.msk [vmem:[%s974 + $0x28] sm:$0xff] %vm757, %v937
          %981 = vst.msk [vmem:[%s974 + $0x30] sm:$0xff] %vm757, %v939
          %982 = vst.msk [vmem:[%s974 + $0x38] sm:$0xff] %vm757, %v941
          %983 = vst.msk [vmem:[%s974 + $0x40] sm:$0xff] %vm757, %v943
          %984 = vst.msk [vmem:[%s974 + $0x48] sm:$0xff] %vm757, %v945
          %985 = vst.msk [vmem:[%s974 + $0x50] sm:$0xff] %vm757, %v947
          %986 = vst.msk [vmem:[%s974 + $0x58] sm:$0xff] %vm757, %v949
          %987 = vst.msk [vmem:[%s974 + $0x60] sm:$0xff] %vm757, %v951
          %988 = vst.msk [vmem:[%s974 + $0x68] sm:$0xff] %vm757, %v953
          %989 = vst.msk [vmem:[%s974 + $0x70] sm:$0xff] %vm757, %v955
          %990 = vst.msk [vmem:[%s974 + $0x78] sm:$0xff] %vm757, %v957
        $region64: #{tpu_custom_call.1} parent=51 // pred_fallthru
          _
        %s991 = smul.u32 %s31, 128
        %s992 = scalar_lea.vmem %s400, %s991
        %v993 = vld [vmem:[%s992] sm:$0xff]
        %v994 = vld [vmem:[%s992 + $0x8] sm:$0xff]
        %v995 = vld [vmem:[%s992 + $0x10] sm:$0xff]
        %v996 = vld [vmem:[%s992 + $0x18] sm:$0xff]
        %v997 = vld [vmem:[%s992 + $0x20] sm:$0xff]
        %v998 = vld [vmem:[%s992 + $0x28] sm:$0xff]
        %v999 = vld [vmem:[%s992 + $0x30] sm:$0xff]
        %v1000 = vld [vmem:[%s992 + $0x38] sm:$0xff]
        %v1001 = vld [vmem:[%s992 + $0x40] sm:$0xff]
        %v1002 = vld [vmem:[%s992 + $0x48] sm:$0xff]
        %v1003 = vld [vmem:[%s992 + $0x50] sm:$0xff]
        %v1004 = vld [vmem:[%s992 + $0x58] sm:$0xff]
        %v1005 = vld [vmem:[%s992 + $0x60] sm:$0xff]
        %v1006 = vld [vmem:[%s992 + $0x68] sm:$0xff]
        %v1007 = vld [vmem:[%s992 + $0x70] sm:$0xff]
        %v1008 = vld [vmem:[%s992 + $0x78] sm:$0xff]
        %v1009 = vld [vmem:[%s2] sm:$0xff]
        %v1010 = vld [vmem:[%s2 + $0x8] sm:$0xff]
        %v1011 = vld [vmem:[%s2 + $0x10] sm:$0xff]
        %v1012 = vld [vmem:[%s2 + $0x18] sm:$0xff]
        %vm1013 = vcmask 261120
        %v1015 = vsel %vm1013, %v993, 0
        %v1018 = vsel %vm1013, %v994, 0
        %v1021 = vsel %vm1013, %v995, 0
        %v1024 = vsel %vm1013, %v996, 0
        %v1027 = vsel %vm1013, %v997, 0
        %v1030 = vsel %vm1013, %v998, 0
        %v1033 = vsel %vm1013, %v999, 0
        %v1036 = vsel %vm1013, %v1000, 0
        %v1039 = vsel %vm1013, %v1001, 0
        %v1042 = vsel %vm1013, %v1002, 0
        %v1045 = vsel %vm1013, %v1003, 0
        %v1048 = vsel %vm1013, %v1004, 0
        %v1051 = vsel %vm1013, %v1005, 0
        %v1054 = vsel %vm1013, %v1006, 0
        %v1057 = vsel %vm1013, %v1007, 0
        %v1060 = vsel %vm1013, %v1008, 0
        %1062 = vmatprep.subr.mxu0 0.0
        %1063 = vmatpush1.msra.mxu0 %v1009
        %1064 = vmatprep.subr.mxu0 0.0
        %1065 = vmatpush1.msra.mxu0 %v1010
        %1066 = vmatprep.subr.mxu0 0.0
        %1067 = vmatpush1.msra.mxu0 %v1011
        %1068 = vmatprep.subr.mxu0 0.0
        %1069 = vmatpush1.msra.mxu0 %v1012
        %1070 = vmatprep.subr.mxu0 0.0
        %1071 = vmatpush1.msra.mxu0 0.0
        %1072 = vmatprep.subr.mxu0 0.0
        %1073 = vmatpush1.msra.mxu0 0.0
        %1074 = vmatprep.subr.mxu0 0.0
        %1075 = vmatpush1.msra.mxu0 0.0
        %1076 = vmatprep.subr.mxu0 0.0
        %1077 = vmatpush1.msra.mxu0 0.0
        %1078 = vmatprep.subr.mxu0 0.0
        %1079 = vmatpush1.msra.mxu0 0.0
        %1080 = vmatprep.subr.mxu0 0.0
        %1081 = vmatpush1.msra.mxu0 0.0
        %1082 = vmatprep.subr.mxu0 0.0
        %1083 = vmatpush1.msra.mxu0 0.0
        %1084 = vmatprep.subr.mxu0 0.0
        %1085 = vmatpush1.msra.mxu0 0.0
        %1086 = vmatprep.subr.mxu0 0.0
        %1087 = vmatpush1.msra.mxu0 0.0
        %1088 = vmatprep.subr.mxu0 0.0
        %1089 = vmatpush1.msra.mxu0 0.0
        %1090 = vmatprep.subr.mxu0 0.0
        %1091 = vmatpush1.msra.mxu0 0.0
        %1092 = vmatprep.subr.mxu0 0.0
        %1093 = vmatpush1.msra.mxu0 0.0
        %1094 = vmatprep.subr.mxu0 0.0
        %1095 = vmatpush1.msra.mxu0 0.0
        %1096 = vmatprep.subr.mxu0 0.0
        %1097 = vmatpush1.msra.mxu0 0.0
        %1098 = vmatprep.subr.mxu0 0.0
        %1099 = vmatpush1.msra.mxu0 0.0
        %1100 = vmatprep.subr.mxu0 0.0
        %1101 = vmatpush1.msra.mxu0 0.0
        %1102 = vmatprep.subr.mxu0 0.0
        %1103 = vmatpush1.msra.mxu0 0.0
        %1104 = vmatprep.subr.mxu0 0.0
        %1105 = vmatpush1.msra.mxu0 0.0
        %1106 = vmatprep.subr.mxu0 0.0
        %1107 = vmatpush1.msra.mxu0 0.0
        %1108 = vmatprep.subr.mxu0 0.0
        %1109 = vmatpush1.msra.mxu0 0.0
        %1110 = vmatprep.subr.mxu0 0.0
        %1111 = vmatpush1.msra.mxu0 0.0
        %1112 = vmatprep.subr.mxu0 0.0
        %1113 = vmatpush1.msra.mxu0 0.0
        %1114 = vmatprep.subr.mxu0 0.0
        %1115 = vmatpush1.msra.mxu0 0.0
        %1116 = vmatprep.subr.mxu0 0.0
        %1117 = vmatpush1.msra.mxu0 0.0
        %1118 = vmatprep.subr.mxu0 0.0
        %1119 = vmatpush1.msra.mxu0 0.0
        %1120 = vmatprep.subr.mxu0 0.0
        %1121 = vmatpush1.msra.mxu0 0.0
        %1122 = vmatprep.subr.mxu0 0.0
        %1123 = vmatpush1.msra.mxu0 0.0
        %1124 = vmatprep.subr.mxu0 0.0
        %1125 = vmatpush1.msra.mxu0 0.0
        %1126 = vmatprep.mubr.f32.mxu0 0.0
        %1127 = vmatmul.mubr.f32.gmra.mrb[0].mxu0 %v1015
        %v1128 = vpop.f32.mrb[0].mxu0
        %v1129 = vadd.f32 0.0, %v1128
        %v1130 = vpop.f32.mrb[0].mxu0
        %1131 = vmatprep.mubr.f32.mxu0 0.0
        %1132 = vmatmul.mubr.f32.gmra.mrb[0].mxu0 %v1018
        %v1133 = vpop.f32.mrb[0].mxu0
        %v1134 = vadd.f32 0.0, %v1133
        %v1135 = vpop.f32.mrb[0].mxu0
        %1136 = vmatprep.mubr.f32.mxu0 0.0
        %1137 = vmatmul.mubr.f32.gmra.mrb[0].mxu0 %v1021
        %v1138 = vpop.f32.mrb[0].mxu0
        %v1139 = vadd.f32 0.0, %v1138
        %v1140 = vpop.f32.mrb[0].mxu0
        %1141 = vmatprep.mubr.f32.mxu0 0.0
        %1142 = vmatmul.mubr.f32.gmra.mrb[0].mxu0 %v1024
        %v1143 = vpop.f32.mrb[0].mxu0
        %v1144 = vadd.f32 0.0, %v1143
        %v1145 = vpop.f32.mrb[0].mxu0
        %1146 = vmatprep.mubr.f32.mxu0 0.0
        %1147 = vmatmul.mubr.f32.gmra.mrb[0].mxu0 %v1027
        %v1148 = vpop.f32.mrb[0].mxu0
        %v1149 = vadd.f32 0.0, %v1148
        %v1150 = vpop.f32.mrb[0].mxu0
        %1151 = vmatprep.mubr.f32.mxu0 0.0
        %1152 = vmatmul.mubr.f32.gmra.mrb[0].mxu0 %v1030
        %v1153 = vpop.f32.mrb[0].mxu0
        %v1154 = vadd.f32 0.0, %v1153
        %v1155 = vpop.f32.mrb[0].mxu0
        %1156 = vmatprep.mubr.f32.mxu0 0.0
        %1157 = vmatmul.mubr.f32.gmra.mrb[0].mxu0 %v1033
        %v1158 = vpop.f32.mrb[0].mxu0
        %v1159 = vadd.f32 0.0, %v1158
        %v1160 = vpop.f32.mrb[0].mxu0
        %1161 = vmatprep.mubr.f32.mxu0 0.0
        %1162 = vmatmul.mubr.f32.gmra.mrb[0].mxu0 %v1036
        %v1163 = vpop.f32.mrb[0].mxu0
        %v1164 = vadd.f32 0.0, %v1163
        %v1165 = vpop.f32.mrb[0].mxu0
        %1166 = vmatprep.mubr.f32.mxu0 0.0
        %1167 = vmatmul.mubr.f32.gmra.mrb[0].mxu0 %v1039
        %v1168 = vpop.f32.mrb[0].mxu0
        %v1169 = vadd.f32 0.0, %v1168
        %v1170 = vpop.f32.mrb[0].mxu0
        %1171 = vmatprep.mubr.f32.mxu0 0.0
        %1172 = vmatmul.mubr.f32.gmra.mrb[0].mxu0 %v1042
        %v1173 = vpop.f32.mrb[0].mxu0
        %v1174 = vadd.f32 0.0, %v1173
        %v1175 = vpop.f32.mrb[0].mxu0
        %1176 = vmatprep.mubr.f32.mxu0 0.0
        %1177 = vmatmul.mubr.f32.gmra.mrb[0].mxu0 %v1045
        %v1178 = vpop.f32.mrb[0].mxu0
        %v1179 = vadd.f32 0.0, %v1178
        %v1180 = vpop.f32.mrb[0].mxu0
        %1181 = vmatprep.mubr.f32.mxu0 0.0
        %1182 = vmatmul.mubr.f32.gmra.mrb[0].mxu0 %v1048
        %v1183 = vpop.f32.mrb[0].mxu0
        %v1184 = vadd.f32 0.0, %v1183
        %v1185 = vpop.f32.mrb[0].mxu0
        %1186 = vmatprep.mubr.f32.mxu0 0.0
        %1187 = vmatmul.mubr.f32.gmra.mrb[0].mxu0 %v1051
        %v1188 = vpop.f32.mrb[0].mxu0
        %v1189 = vadd.f32 0.0, %v1188
        %v1190 = vpop.f32.mrb[0].mxu0
        %1191 = vmatprep.mubr.f32.mxu0 0.0
        %1192 = vmatmul.mubr.f32.gmra.mrb[0].mxu0 %v1054
        %v1193 = vpop.f32.mrb[0].mxu0
        %v1194 = vadd.f32 0.0, %v1193
        %v1195 = vpop.f32.mrb[0].mxu0
        %1196 = vmatprep.mubr.f32.mxu0 0.0
        %1197 = vmatmul.mubr.f32.gmra.mrb[0].mxu0 %v1057
        %v1198 = vpop.f32.mrb[0].mxu0
        %v1199 = vadd.f32 0.0, %v1198
        %v1200 = vpop.f32.mrb[0].mxu0
        %1201 = vmatprep.mubr.f32.mxu0 0.0
        %1202 = vmatmul.mubr.f32.gmra.mrb[0].mxu0 %v1060
        %v1203 = vpop.f32.mrb[0].mxu0
        %v1204 = vadd.f32 0.0, %v1203
        %v1205 = vpop.f32.mrb[0].mxu0
        %1206 = vdwg.mxu0
        %v1207 = vmul.f32 %v1129, 0.35355338
        %v1208 = vmul.f32 %v1134, 0.35355338
        %v1209 = vmul.f32 %v1139, 0.35355338
        %v1210 = vmul.f32 %v1144, 0.35355338
        %v1211 = vmul.f32 %v1149, 0.35355338
        %v1212 = vmul.f32 %v1154, 0.35355338
        %v1213 = vmul.f32 %v1159, 0.35355338
        %v1214 = vmul.f32 %v1164, 0.35355338
        %v1215 = vmul.f32 %v1169, 0.35355338
        %v1216 = vmul.f32 %v1174, 0.35355338
        %v1217 = vmul.f32 %v1179, 0.35355338
        %v1218 = vmul.f32 %v1184, 0.35355338
        %v1219 = vmul.f32 %v1189, 0.35355338
        %v1220 = vmul.f32 %v1194, 0.35355338
        %v1221 = vmul.f32 %v1199, 0.35355338
        %v1222 = vmul.f32 %v1204, 0.35355338
        %v1223 = vlaneseq
        %v1224 = vand.u32 %v1223, 127
        %vm1225 = vcmp.lt.s32.totalorder %v1224, 16
        %v1226 = vld [vmem:[#allocation2] sm:$0xff]
        %vm1227 = vcmask 64512
        %v1229 = vsel %vm1227, %v1207, 0
        %v1232 = vsel %vm1227, %v1208, 0
        %v1235 = vsel %vm1227, %v1209, 0
        %v1238 = vsel %vm1227, %v1210, 0
        %v1241 = vsel %vm1227, %v1211, 0
        %v1244 = vsel %vm1227, %v1212, 0
        %v1247 = vsel %vm1227, %v1213, 0
        %v1250 = vsel %vm1227, %v1214, 0
        %v1253 = vsel %vm1227, %v1215, 0
        %v1256 = vsel %vm1227, %v1216, 0
        %v1259 = vsel %vm1227, %v1217, 0
        %v1262 = vsel %vm1227, %v1218, 0
        %v1265 = vsel %vm1227, %v1219, 0
        %v1268 = vsel %vm1227, %v1220, 0
        %v1271 = vsel %vm1227, %v1221, 0
        %v1274 = vsel %vm1227, %v1222, 0
        %1276 = vmatprep.subr.mxu0 0.0
        %1277 = vmatpush1.msra.mxu0 %v1226
        %1278 = vmatprep.subr.mxu0 0.0
        %1279 = vmatpush1.msra.mxu0 0.0
        %1280 = vmatprep.subr.mxu0 0.0
        %1281 = vmatpush1.msra.mxu0 0.0
        %1282 = vmatprep.subr.mxu0 0.0
        %1283 = vmatpush1.msra.mxu0 0.0
        %1284 = vmatprep.subr.mxu0 0.0
        %1285 = vmatpush1.msra.mxu0 0.0
        %1286 = vmatprep.subr.mxu0 0.0
        %1287 = vmatpush1.msra.mxu0 0.0
        %1288 = vmatprep.subr.mxu0 0.0
        %1289 = vmatpush1.msra.mxu0 0.0
        %1290 = vmatprep.subr.mxu0 0.0
        %1291 = vmatpush1.msra.mxu0 0.0
        %1292 = vmatprep.subr.mxu0 0.0
        %1293 = vmatpush1.msra.mxu0 0.0
        %1294 = vmatprep.subr.mxu0 0.0
        %1295 = vmatpush1.msra.mxu0 0.0
        %1296 = vmatprep.subr.mxu0 0.0
        %1297 = vmatpush1.msra.mxu0 0.0
        %1298 = vmatprep.subr.mxu0 0.0
        %1299 = vmatpush1.msra.mxu0 0.0
        %1300 = vmatprep.subr.mxu0 0.0
        %1301 = vmatpush1.msra.mxu0 0.0
        %1302 = vmatprep.subr.mxu0 0.0
        %1303 = vmatpush1.msra.mxu0 0.0
        %1304 = vmatprep.subr.mxu0 0.0
        %1305 = vmatpush1.msra.mxu0 0.0
        %1306 = vmatprep.subr.mxu0 0.0
        %1307 = vmatpush1.msra.mxu0 0.0
        %1308 = vmatprep.subr.mxu0 0.0
        %1309 = vmatpush1.msra.mxu0 0.0
        %1310 = vmatprep.subr.mxu0 0.0
        %1311 = vmatpush1.msra.mxu0 0.0
        %1312 = vmatprep.subr.mxu0 0.0
        %1313 = vmatpush1.msra.mxu0 0.0
        %1314 = vmatprep.subr.mxu0 0.0
        %1315 = vmatpush1.msra.mxu0 0.0
        %1316 = vmatprep.subr.mxu0 0.0
        %1317 = vmatpush1.msra.mxu0 0.0
        %1318 = vmatprep.subr.mxu0 0.0
        %1319 = vmatpush1.msra.mxu0 0.0
        %1320 = vmatprep.subr.mxu0 0.0
        %1321 = vmatpush1.msra.mxu0 0.0
        %1322 = vmatprep.subr.mxu0 0.0
        %1323 = vmatpush1.msra.mxu0 0.0
        %1324 = vmatprep.subr.mxu0 0.0
        %1325 = vmatpush1.msra.mxu0 0.0
        %1326 = vmatprep.subr.mxu0 0.0
        %1327 = vmatpush1.msra.mxu0 0.0
        %1328 = vmatprep.subr.mxu0 0.0
        %1329 = vmatpush1.msra.mxu0 0.0
        %1330 = vmatprep.subr.mxu0 0.0
        %1331 = vmatpush1.msra.mxu0 0.0
        %1332 = vmatprep.subr.mxu0 0.0
        %1333 = vmatpush1.msra.mxu0 0.0
        %1334 = vmatprep.subr.mxu0 0.0
        %1335 = vmatpush1.msra.mxu0 0.0
        %1336 = vmatprep.subr.mxu0 0.0
        %1337 = vmatpush1.msra.mxu0 0.0
        %1338 = vmatprep.subr.mxu0 0.0
        %1339 = vmatpush1.msra.mxu0 0.0
        %1340 = vmatprep.mubr.f32.mxu0 0.0
        %1341 = vmatmul.mubr.f32.gmra.mrb[0].mxu0 %v1229
        %v1342 = vpop.f32.mrb[0].mxu0
        %v1343 = vadd.f32 0.0, %v1342
        %v1344 = vpop.f32.mrb[0].mxu0
        %1345 = vmatprep.mubr.f32.mxu0 0.0
        %1346 = vmatmul.mubr.f32.gmra.mrb[0].mxu0 %v1232
        %v1347 = vpop.f32.mrb[0].mxu0
        %v1348 = vadd.f32 0.0, %v1347
        %v1349 = vpop.f32.mrb[0].mxu0
        %1350 = vmatprep.mubr.f32.mxu0 0.0
        %1351 = vmatmul.mubr.f32.gmra.mrb[0].mxu0 %v1235
        %v1352 = vpop.f32.mrb[0].mxu0
        %v1353 = vadd.f32 0.0, %v1352
        %v1354 = vpop.f32.mrb[0].mxu0
        %1355 = vmatprep.mubr.f32.mxu0 0.0
        %1356 = vmatmul.mubr.f32.gmra.mrb[0].mxu0 %v1238
        %v1357 = vpop.f32.mrb[0].mxu0
        %v1358 = vadd.f32 0.0, %v1357
        %v1359 = vpop.f32.mrb[0].mxu0
        %1360 = vmatprep.mubr.f32.mxu0 0.0
        %1361 = vmatmul.mubr.f32.gmra.mrb[0].mxu0 %v1241
        %v1362 = vpop.f32.mrb[0].mxu0
        %v1363 = vadd.f32 0.0, %v1362
        %v1364 = vpop.f32.mrb[0].mxu0
        %1365 = vmatprep.mubr.f32.mxu0 0.0
        %1366 = vmatmul.mubr.f32.gmra.mrb[0].mxu0 %v1244
        %v1367 = vpop.f32.mrb[0].mxu0
        %v1368 = vadd.f32 0.0, %v1367
        %v1369 = vpop.f32.mrb[0].mxu0
        %1370 = vmatprep.mubr.f32.mxu0 0.0
        %1371 = vmatmul.mubr.f32.gmra.mrb[0].mxu0 %v1247
        %v1372 = vpop.f32.mrb[0].mxu0
        %v1373 = vadd.f32 0.0, %v1372
        %v1374 = vpop.f32.mrb[0].mxu0
        %1375 = vmatprep.mubr.f32.mxu0 0.0
        %1376 = vmatmul.mubr.f32.gmra.mrb[0].mxu0 %v1250
        %v1377 = vpop.f32.mrb[0].mxu0
        %v1378 = vadd.f32 0.0, %v1377
        %v1379 = vpop.f32.mrb[0].mxu0
        %1380 = vmatprep.mubr.f32.mxu0 0.0
        %1381 = vmatmul.mubr.f32.gmra.mrb[0].mxu0 %v1253
        %v1382 = vpop.f32.mrb[0].mxu0
        %v1383 = vadd.f32 0.0, %v1382
        %v1384 = vpop.f32.mrb[0].mxu0
        %1385 = vmatprep.mubr.f32.mxu0 0.0
        %1386 = vmatmul.mubr.f32.gmra.mrb[0].mxu0 %v1256
        %v1387 = vpop.f32.mrb[0].mxu0
        %v1388 = vadd.f32 0.0, %v1387
        %v1389 = vpop.f32.mrb[0].mxu0
        %1390 = vmatprep.mubr.f32.mxu0 0.0
        %1391 = vmatmul.mubr.f32.gmra.mrb[0].mxu0 %v1259
        %v1392 = vpop.f32.mrb[0].mxu0
        %v1393 = vadd.f32 0.0, %v1392
        %v1394 = vpop.f32.mrb[0].mxu0
        %1395 = vmatprep.mubr.f32.mxu0 0.0
        %1396 = vmatmul.mubr.f32.gmra.mrb[0].mxu0 %v1262
        %v1397 = vpop.f32.mrb[0].mxu0
        %v1398 = vadd.f32 0.0, %v1397
        %v1399 = vpop.f32.mrb[0].mxu0
        %1400 = vmatprep.mubr.f32.mxu0 0.0
        %1401 = vmatmul.mubr.f32.gmra.mrb[0].mxu0 %v1265
        %v1402 = vpop.f32.mrb[0].mxu0
        %v1403 = vadd.f32 0.0, %v1402
        %v1404 = vpop.f32.mrb[0].mxu0
        %1405 = vmatprep.mubr.f32.mxu0 0.0
        %1406 = vmatmul.mubr.f32.gmra.mrb[0].mxu0 %v1268
        %v1407 = vpop.f32.mrb[0].mxu0
        %v1408 = vadd.f32 0.0, %v1407
        %v1409 = vpop.f32.mrb[0].mxu0
        %1410 = vmatprep.mubr.f32.mxu0 0.0
        %1411 = vmatmul.mubr.f32.gmra.mrb[0].mxu0 %v1271
        %v1412 = vpop.f32.mrb[0].mxu0
        %v1413 = vadd.f32 0.0, %v1412
        %v1414 = vpop.f32.mrb[0].mxu0
        %1415 = vmatprep.mubr.f32.mxu0 0.0
        %1416 = vmatmul.mubr.f32.gmra.mrb[0].mxu0 %v1274
        %v1417 = vpop.f32.mrb[0].mxu0
        %v1418 = vadd.f32 0.0, %v1417
        %v1419 = vpop.f32.mrb[0].mxu0
        %1420 = vdwg.mxu0
        %v1421 = vsel %vm1225, %v1343, -1e+30
        %v1422 = vsel %vm1225, %v1348, -1e+30
        %v1423 = vsel %vm1225, %v1353, -1e+30
        %v1424 = vsel %vm1225, %v1358, -1e+30
        %v1425 = vsel %vm1225, %v1363, -1e+30
        %v1426 = vsel %vm1225, %v1368, -1e+30
        %v1427 = vsel %vm1225, %v1373, -1e+30
        %v1428 = vsel %vm1225, %v1378, -1e+30
        %v1429 = vsel %vm1225, %v1383, -1e+30
        %v1430 = vsel %vm1225, %v1388, -1e+30
        %v1431 = vsel %vm1225, %v1393, -1e+30
        %v1432 = vsel %vm1225, %v1398, -1e+30
        %v1433 = vsel %vm1225, %v1403, -1e+30
        %v1434 = vsel %vm1225, %v1408, -1e+30
        %v1435 = vsel %vm1225, %v1413, -1e+30
        %v1436 = vsel %vm1225, %v1418, -1e+30
        %1437 = vmax.xlane.f32.xlu0 %v1421
        %v1438 = vpop.xlane.xlu0 %1437
        %1439 = vmax.xlane.f32.xlu0 %v1422
        %v1440 = vpop.xlane.xlu0 %1439
        %1441 = vmax.xlane.f32.xlu0 %v1423
        %v1442 = vpop.xlane.xlu0 %1441
        %1443 = vmax.xlane.f32.xlu0 %v1424
        %v1444 = vpop.xlane.xlu0 %1443
        %1445 = vmax.xlane.f32.xlu0 %v1425
        %v1446 = vpop.xlane.xlu0 %1445
        %1447 = vmax.xlane.f32.xlu0 %v1426
        %v1448 = vpop.xlane.xlu0 %1447
        %1449 = vmax.xlane.f32.xlu0 %v1427
        %v1450 = vpop.xlane.xlu0 %1449
        %1451 = vmax.xlane.f32.xlu0 %v1428
        %v1452 = vpop.xlane.xlu0 %1451
        %1453 = vmax.xlane.f32.xlu0 %v1429
        %v1454 = vpop.xlane.xlu0 %1453
        %1455 = vmax.xlane.f32.xlu0 %v1430
        %v1456 = vpop.xlane.xlu0 %1455
        %1457 = vmax.xlane.f32.xlu0 %v1431
        %v1458 = vpop.xlane.xlu0 %1457
        %1459 = vmax.xlane.f32.xlu0 %v1432
        %v1460 = vpop.xlane.xlu0 %1459
        %1461 = vmax.xlane.f32.xlu0 %v1433
        %v1462 = vpop.xlane.xlu0 %1461
        %1463 = vmax.xlane.f32.xlu0 %v1434
        %v1464 = vpop.xlane.xlu0 %1463
        %1465 = vmax.xlane.f32.xlu0 %v1435
        %v1466 = vpop.xlane.xlu0 %1465
        %1467 = vmax.xlane.f32.xlu0 %v1436
        %v1468 = vpop.xlane.xlu0 %1467
        %v1469 = vsub.f32 %v1421, %v1438
        %v1470 = vsub.f32 %v1422, %v1440
        %v1471 = vsub.f32 %v1423, %v1442
        %v1472 = vsub.f32 %v1424, %v1444
        %v1473 = vsub.f32 %v1425, %v1446
        %v1474 = vsub.f32 %v1426, %v1448
        %v1475 = vsub.f32 %v1427, %v1450
        %v1476 = vsub.f32 %v1428, %v1452
        %v1477 = vsub.f32 %v1429, %v1454
        %v1478 = vsub.f32 %v1430, %v1456
        %v1479 = vsub.f32 %v1431, %v1458
        %v1480 = vsub.f32 %v1432, %v1460
        %v1481 = vsub.f32 %v1433, %v1462
        %v1482 = vsub.f32 %v1434, %v1464
        %v1483 = vsub.f32 %v1435, %v1466
        %v1484 = vsub.f32 %v1436, %v1468
        %v1485 = vmul.f32 %v1469, 1.442695
        %v1486 = vpow.pop %v1485
        %v1487 = vmul.f32 %v1470, 1.442695
        %v1488 = vpow.pop %v1487
        %v1489 = vmul.f32 %v1471, 1.442695
        %v1490 = vpow.pop %v1489
        %v1491 = vmul.f32 %v1472, 1.442695
        %v1492 = vpow.pop %v1491
        %v1493 = vmul.f32 %v1473, 1.442695
        %v1494 = vpow.pop %v1493
        %v1495 = vmul.f32 %v1474, 1.442695
        %v1496 = vpow.pop %v1495
        %v1497 = vmul.f32 %v1475, 1.442695
        %v1498 = vpow.pop %v1497
        %v1499 = vmul.f32 %v1476, 1.442695
        %v1500 = vpow.pop %v1499
        %v1501 = vmul.f32 %v1477, 1.442695
        %v1502 = vpow.pop %v1501
        %v1503 = vmul.f32 %v1478, 1.442695
        %v1504 = vpow.pop %v1503
        %v1505 = vmul.f32 %v1479, 1.442695
        %v1506 = vpow.pop %v1505
        %v1507 = vmul.f32 %v1480, 1.442695
        %v1508 = vpow.pop %v1507
        %v1509 = vmul.f32 %v1481, 1.442695
        %v1510 = vpow.pop %v1509
        %v1511 = vmul.f32 %v1482, 1.442695
        %v1512 = vpow.pop %v1511
        %v1513 = vmul.f32 %v1483, 1.442695
        %v1514 = vpow.pop %v1513
        %v1515 = vmul.f32 %v1484, 1.442695
        %v1516 = vpow.pop %v1515
        %1517 = vadd.xlane.f32.xlu0 %v1486
        %v1518 = vpop.xlane.xlu0 %1517
        %1519 = vadd.xlane.f32.xlu0 %v1488
        %v1520 = vpop.xlane.xlu0 %1519
        %1521 = vadd.xlane.f32.xlu0 %v1490
        %v1522 = vpop.xlane.xlu0 %1521
        %1523 = vadd.xlane.f32.xlu0 %v1492
        %v1524 = vpop.xlane.xlu0 %1523
        %1525 = vadd.xlane.f32.xlu0 %v1494
        %v1526 = vpop.xlane.xlu0 %1525
        %1527 = vadd.xlane.f32.xlu0 %v1496
        %v1528 = vpop.xlane.xlu0 %1527
        %1529 = vadd.xlane.f32.xlu0 %v1498
        %v1530 = vpop.xlane.xlu0 %1529
        %1531 = vadd.xlane.f32.xlu0 %v1500
        %v1532 = vpop.xlane.xlu0 %1531
        %1533 = vadd.xlane.f32.xlu0 %v1502
        %v1534 = vpop.xlane.xlu0 %1533
        %1535 = vadd.xlane.f32.xlu0 %v1504
        %v1536 = vpop.xlane.xlu0 %1535
        %1537 = vadd.xlane.f32.xlu0 %v1506
        %v1538 = vpop.xlane.xlu0 %1537
        %1539 = vadd.xlane.f32.xlu0 %v1508
        %v1540 = vpop.xlane.xlu0 %1539
        %1541 = vadd.xlane.f32.xlu0 %v1510
        %v1542 = vpop.xlane.xlu0 %1541
        %1543 = vadd.xlane.f32.xlu0 %v1512
        %v1544 = vpop.xlane.xlu0 %1543
        %1545 = vadd.xlane.f32.xlu0 %v1514
        %v1546 = vpop.xlane.xlu0 %1545
        %1547 = vadd.xlane.f32.xlu0 %v1516
        %v1548 = vpop.xlane.xlu0 %1547
        %v1549 = vrcp.pop %v1518
        %v1550 = vrcp.pop %v1520
        %v1551 = vrcp.pop %v1522
        %v1552 = vrcp.pop %v1524
        %v1553 = vrcp.pop %v1526
        %v1554 = vrcp.pop %v1528
        %v1555 = vrcp.pop %v1530
        %v1556 = vrcp.pop %v1532
        %v1557 = vrcp.pop %v1534
        %v1558 = vrcp.pop %v1536
        %v1559 = vrcp.pop %v1538
        %v1560 = vrcp.pop %v1540
        %v1561 = vrcp.pop %v1542
        %v1562 = vrcp.pop %v1544
        %v1563 = vrcp.pop %v1546
        %v1564 = vrcp.pop %v1548
        %v1565 = vmul.f32 %v1486, %v1549
        %v1566 = vmul.f32 %v1488, %v1550
        %v1567 = vmul.f32 %v1490, %v1551
        %v1568 = vmul.f32 %v1492, %v1552
        %v1569 = vmul.f32 %v1494, %v1553
        %v1570 = vmul.f32 %v1496, %v1554
        %v1571 = vmul.f32 %v1498, %v1555
        %v1572 = vmul.f32 %v1500, %v1556
        %v1573 = vmul.f32 %v1502, %v1557
        %v1574 = vmul.f32 %v1504, %v1558
        %v1575 = vmul.f32 %v1506, %v1559
        %v1576 = vmul.f32 %v1508, %v1560
        %v1577 = vmul.f32 %v1510, %v1561
        %v1578 = vmul.f32 %v1512, %v1562
        %v1579 = vmul.f32 %v1514, %v1563
        %v1580 = vmul.f32 %v1516, %v1564
        %s1581 = scalar_lea.vmem [#allocation2], 8
        %v1582 = vld [vmem:[%s1581] sm:$0xff]
        %1583 = vrot.lane.b32.xlu0 %v1207, 120
        %v1584 = vpop.permute.xlu0 %1583
        %1585 = vrot.lane.b32.xlu0 %v1208, 120
        %v1586 = vpop.permute.xlu0 %1585
        %1587 = vrot.lane.b32.xlu0 %v1209, 120
        %v1588 = vpop.permute.xlu0 %1587
        %1589 = vrot.lane.b32.xlu0 %v1210, 120
        %v1590 = vpop.permute.xlu0 %1589
        %1591 = vrot.lane.b32.xlu0 %v1211, 120
        %v1592 = vpop.permute.xlu0 %1591
        %1593 = vrot.lane.b32.xlu0 %v1212, 120
        %v1594 = vpop.permute.xlu0 %1593
        %1595 = vrot.lane.b32.xlu0 %v1213, 120
        %v1596 = vpop.permute.xlu0 %1595
        %1597 = vrot.lane.b32.xlu0 %v1214, 120
        %v1598 = vpop.permute.xlu0 %1597
        %1599 = vrot.lane.b32.xlu0 %v1215, 120
        %v1600 = vpop.permute.xlu0 %1599
        %1601 = vrot.lane.b32.xlu0 %v1216, 120
        %v1602 = vpop.permute.xlu0 %1601
        %1603 = vrot.lane.b32.xlu0 %v1217, 120
        %v1604 = vpop.permute.xlu0 %1603
        %1605 = vrot.lane.b32.xlu0 %v1218, 120
        %v1606 = vpop.permute.xlu0 %1605
        %1607 = vrot.lane.b32.xlu0 %v1219, 120
        %v1608 = vpop.permute.xlu0 %1607
        %1609 = vrot.lane.b32.xlu0 %v1220, 120
        %v1610 = vpop.permute.xlu0 %1609
        %1611 = vrot.lane.b32.xlu0 %v1221, 120
        %v1612 = vpop.permute.xlu0 %1611
        %1613 = vrot.lane.b32.xlu0 %v1222, 120
        %v1614 = vpop.permute.xlu0 %1613
        %v1615 = vsel %vm1227, %v1584, 0
        %v1617 = vsel %vm1227, %v1586, 0
        %v1619 = vsel %vm1227, %v1588, 0
        %v1621 = vsel %vm1227, %v1590, 0
        %v1623 = vsel %vm1227, %v1592, 0
        %v1625 = vsel %vm1227, %v1594, 0
        %v1627 = vsel %vm1227, %v1596, 0
        %v1629 = vsel %vm1227, %v1598, 0
        %v1631 = vsel %vm1227, %v1600, 0
        %v1633 = vsel %vm1227, %v1602, 0
        %v1635 = vsel %vm1227, %v1604, 0
        %v1637 = vsel %vm1227, %v1606, 0
        %v1639 = vsel %vm1227, %v1608, 0
        %v1641 = vsel %vm1227, %v1610, 0
        %v1643 = vsel %vm1227, %v1612, 0
        %v1645 = vsel %vm1227, %v1614, 0
        %1647 = vmatprep.subr.mxu0 0.0
        %1648 = vmatpush1.msra.mxu0 %v1582
        %1649 = vmatprep.subr.mxu0 0.0
        %1650 = vmatpush1.msra.mxu0 0.0
        %1651 = vmatprep.subr.mxu0 0.0
        %1652 = vmatpush1.msra.mxu0 0.0
        %1653 = vmatprep.subr.mxu0 0.0
        %1654 = vmatpush1.msra.mxu0 0.0
        %1655 = vmatprep.subr.mxu0 0.0
        %1656 = vmatpush1.msra.mxu0 0.0
        %1657 = vmatprep.subr.mxu0 0.0
        %1658 = vmatpush1.msra.mxu0 0.0
        %1659 = vmatprep.subr.mxu0 0.0
        %1660 = vmatpush1.msra.mxu0 0.0
        %1661 = vmatprep.subr.mxu0 0.0
        %1662 = vmatpush1.msra.mxu0 0.0
        %1663 = vmatprep.subr.mxu0 0.0
        %1664 = vmatpush1.msra.mxu0 0.0
        %1665 = vmatprep.subr.mxu0 0.0
        %1666 = vmatpush1.msra.mxu0 0.0
        %1667 = vmatprep.subr.mxu0 0.0
        %1668 = vmatpush1.msra.mxu0 0.0
        %1669 = vmatprep.subr.mxu0 0.0
        %1670 = vmatpush1.msra.mxu0 0.0
        %1671 = vmatprep.subr.mxu0 0.0
        %1672 = vmatpush1.msra.mxu0 0.0
        %1673 = vmatprep.subr.mxu0 0.0
        %1674 = vmatpush1.msra.mxu0 0.0
        %1675 = vmatprep.subr.mxu0 0.0
        %1676 = vmatpush1.msra.mxu0 0.0
        %1677 = vmatprep.subr.mxu0 0.0
        %1678 = vmatpush1.msra.mxu0 0.0
        %1679 = vmatprep.subr.mxu0 0.0
        %1680 = vmatpush1.msra.mxu0 0.0
        %1681 = vmatprep.subr.mxu0 0.0
        %1682 = vmatpush1.msra.mxu0 0.0
        %1683 = vmatprep.subr.mxu0 0.0
        %1684 = vmatpush1.msra.mxu0 0.0
        %1685 = vmatprep.subr.mxu0 0.0
        %1686 = vmatpush1.msra.mxu0 0.0
        %1687 = vmatprep.subr.mxu0 0.0
        %1688 = vmatpush1.msra.mxu0 0.0
        %1689 = vmatprep.subr.mxu0 0.0
        %1690 = vmatpush1.msra.mxu0 0.0
        %1691 = vmatprep.subr.mxu0 0.0
        %1692 = vmatpush1.msra.mxu0 0.0
        %1693 = vmatprep.subr.mxu0 0.0
        %1694 = vmatpush1.msra.mxu0 0.0
        %1695 = vmatprep.subr.mxu0 0.0
        %1696 = vmatpush1.msra.mxu0 0.0
        %1697 = vmatprep.subr.mxu0 0.0
        %1698 = vmatpush1.msra.mxu0 0.0
        %1699 = vmatprep.subr.mxu0 0.0
        %1700 = vmatpush1.msra.mxu0 0.0
        %1701 = vmatprep.subr.mxu0 0.0
        %1702 = vmatpush1.msra.mxu0 0.0
        %1703 = vmatprep.subr.mxu0 0.0
        %1704 = vmatpush1.msra.mxu0 0.0
        %1705 = vmatprep.subr.mxu0 0.0
        %1706 = vmatpush1.msra.mxu0 0.0
        %1707 = vmatprep.subr.mxu0 0.0
        %1708 = vmatpush1.msra.mxu0 0.0
        %1709 = vmatprep.subr.mxu0 0.0
        %1710 = vmatpush1.msra.mxu0 0.0
        %1711 = vmatprep.mubr.f32.mxu0 0.0
        %1712 = vmatmul.mubr.f32.gmra.mrb[0].mxu0 %v1615
        %v1713 = vpop.f32.mrb[0].mxu0
        %v1714 = vadd.f32 0.0, %v1713
        %v1715 = vpop.f32.mrb[0].mxu0
        %1716 = vmatprep.mubr.f32.mxu0 0.0
        %1717 = vmatmul.mubr.f32.gmra.mrb[0].mxu0 %v1617
        %v1718 = vpop.f32.mrb[0].mxu0
        %v1719 = vadd.f32 0.0, %v1718
        %v1720 = vpop.f32.mrb[0].mxu0
        %1721 = vmatprep.mubr.f32.mxu0 0.0
        %1722 = vmatmul.mubr.f32.gmra.mrb[0].mxu0 %v1619
        %v1723 = vpop.f32.mrb[0].mxu0
        %v1724 = vadd.f32 0.0, %v1723
        %v1725 = vpop.f32.mrb[0].mxu0
        %1726 = vmatprep.mubr.f32.mxu0 0.0
        %1727 = vmatmul.mubr.f32.gmra.mrb[0].mxu0 %v1621
        %v1728 = vpop.f32.mrb[0].mxu0
        %v1729 = vadd.f32 0.0, %v1728
        %v1730 = vpop.f32.mrb[0].mxu0
        %1731 = vmatprep.mubr.f32.mxu0 0.0
        %1732 = vmatmul.mubr.f32.gmra.mrb[0].mxu0 %v1623
        %v1733 = vpop.f32.mrb[0].mxu0
        %v1734 = vadd.f32 0.0, %v1733
        %v1735 = vpop.f32.mrb[0].mxu0
        %1736 = vmatprep.mubr.f32.mxu0 0.0
        %1737 = vmatmul.mubr.f32.gmra.mrb[0].mxu0 %v1625
        %v1738 = vpop.f32.mrb[0].mxu0
        %v1739 = vadd.f32 0.0, %v1738
        %v1740 = vpop.f32.mrb[0].mxu0
        %1741 = vmatprep.mubr.f32.mxu0 0.0
        %1742 = vmatmul.mubr.f32.gmra.mrb[0].mxu0 %v1627
        %v1743 = vpop.f32.mrb[0].mxu0
        %v1744 = vadd.f32 0.0, %v1743
        %v1745 = vpop.f32.mrb[0].mxu0
        %1746 = vmatprep.mubr.f32.mxu0 0.0
        %1747 = vmatmul.mubr.f32.gmra.mrb[0].mxu0 %v1629
        %v1748 = vpop.f32.mrb[0].mxu0
        %v1749 = vadd.f32 0.0, %v1748
        %v1750 = vpop.f32.mrb[0].mxu0
        %1751 = vmatprep.mubr.f32.mxu0 0.0
        %1752 = vmatmul.mubr.f32.gmra.mrb[0].mxu0 %v1631
        %v1753 = vpop.f32.mrb[0].mxu0
        %v1754 = vadd.f32 0.0, %v1753
        %v1755 = vpop.f32.mrb[0].mxu0
        %1756 = vmatprep.mubr.f32.mxu0 0.0
        %1757 = vmatmul.mubr.f32.gmra.mrb[0].mxu0 %v1633
        %v1758 = vpop.f32.mrb[0].mxu0
        %v1759 = vadd.f32 0.0, %v1758
        %v1760 = vpop.f32.mrb[0].mxu0
        %1761 = vmatprep.mubr.f32.mxu0 0.0
        %1762 = vmatmul.mubr.f32.gmra.mrb[0].mxu0 %v1635
        %v1763 = vpop.f32.mrb[0].mxu0
        %v1764 = vadd.f32 0.0, %v1763
        %v1765 = vpop.f32.mrb[0].mxu0
        %1766 = vmatprep.mubr.f32.mxu0 0.0
        %1767 = vmatmul.mubr.f32.gmra.mrb[0].mxu0 %v1637
        %v1768 = vpop.f32.mrb[0].mxu0
        %v1769 = vadd.f32 0.0, %v1768
        %v1770 = vpop.f32.mrb[0].mxu0
        %1771 = vmatprep.mubr.f32.mxu0 0.0
        %1772 = vmatmul.mubr.f32.gmra.mrb[0].mxu0 %v1639
        %v1773 = vpop.f32.mrb[0].mxu0
        %v1774 = vadd.f32 0.0, %v1773
        %v1775 = vpop.f32.mrb[0].mxu0
        %1776 = vmatprep.mubr.f32.mxu0 0.0
        %1777 = vmatmul.mubr.f32.gmra.mrb[0].mxu0 %v1641
        %v1778 = vpop.f32.mrb[0].mxu0
        %v1779 = vadd.f32 0.0, %v1778
        %v1780 = vpop.f32.mrb[0].mxu0
        %1781 = vmatprep.mubr.f32.mxu0 0.0
        %1782 = vmatmul.mubr.f32.gmra.mrb[0].mxu0 %v1643
        %v1783 = vpop.f32.mrb[0].mxu0
        %v1784 = vadd.f32 0.0, %v1783
        %v1785 = vpop.f32.mrb[0].mxu0
        %1786 = vmatprep.mubr.f32.mxu0 0.0
        %1787 = vmatmul.mubr.f32.gmra.mrb[0].mxu0 %v1645
        %v1788 = vpop.f32.mrb[0].mxu0
        %v1789 = vadd.f32 0.0, %v1788
        %v1790 = vpop.f32.mrb[0].mxu0
        %1791 = vdwg.mxu0
        %v1792 = vsel %vm1225, %v1714, -1e+30
        %v1793 = vsel %vm1225, %v1719, -1e+30
        %v1794 = vsel %vm1225, %v1724, -1e+30
        %v1795 = vsel %vm1225, %v1729, -1e+30
        %v1796 = vsel %vm1225, %v1734, -1e+30
        %v1797 = vsel %vm1225, %v1739, -1e+30
        %v1798 = vsel %vm1225, %v1744, -1e+30
        %v1799 = vsel %vm1225, %v1749, -1e+30
        %v1800 = vsel %vm1225, %v1754, -1e+30
        %v1801 = vsel %vm1225, %v1759, -1e+30
        %v1802 = vsel %vm1225, %v1764, -1e+30
        %v1803 = vsel %vm1225, %v1769, -1e+30
        %v1804 = vsel %vm1225, %v1774, -1e+30
        %v1805 = vsel %vm1225, %v1779, -1e+30
        %v1806 = vsel %vm1225, %v1784, -1e+30
        %v1807 = vsel %vm1225, %v1789, -1e+30
        %1808 = vmax.xlane.f32.xlu0 %v1792
        %v1809 = vpop.xlane.xlu0 %1808
        %1810 = vmax.xlane.f32.xlu0 %v1793
        %v1811 = vpop.xlane.xlu0 %1810
        %1812 = vmax.xlane.f32.xlu0 %v1794
        %v1813 = vpop.xlane.xlu0 %1812
        %1814 = vmax.xlane.f32.xlu0 %v1795
        %v1815 = vpop.xlane.xlu0 %1814
        %1816 = vmax.xlane.f32.xlu0 %v1796
        %v1817 = vpop.xlane.xlu0 %1816
        %1818 = vmax.xlane.f32.xlu0 %v1797
        %v1819 = vpop.xlane.xlu0 %1818
        %1820 = vmax.xlane.f32.xlu0 %v1798
        %v1821 = vpop.xlane.xlu0 %1820
        %1822 = vmax.xlane.f32.xlu0 %v1799
        %v1823 = vpop.xlane.xlu0 %1822
        %1824 = vmax.xlane.f32.xlu0 %v1800
        %v1825 = vpop.xlane.xlu0 %1824
        %1826 = vmax.xlane.f32.xlu0 %v1801
        %v1827 = vpop.xlane.xlu0 %1826
        %1828 = vmax.xlane.f32.xlu0 %v1802
        %v1829 = vpop.xlane.xlu0 %1828
        %1830 = vmax.xlane.f32.xlu0 %v1803
        %v1831 = vpop.xlane.xlu0 %1830
        %1832 = vmax.xlane.f32.xlu0 %v1804
        %v1833 = vpop.xlane.xlu0 %1832
        %1834 = vmax.xlane.f32.xlu0 %v1805
        %v1835 = vpop.xlane.xlu0 %1834
        %1836 = vmax.xlane.f32.xlu0 %v1806
        %v1837 = vpop.xlane.xlu0 %1836
        %1838 = vmax.xlane.f32.xlu0 %v1807
        %v1839 = vpop.xlane.xlu0 %1838
        %v1840 = vsub.f32 %v1792, %v1809
        %v1841 = vsub.f32 %v1793, %v1811
        %v1842 = vsub.f32 %v1794, %v1813
        %v1843 = vsub.f32 %v1795, %v1815
        %v1844 = vsub.f32 %v1796, %v1817
        %v1845 = vsub.f32 %v1797, %v1819
        %v1846 = vsub.f32 %v1798, %v1821
        %v1847 = vsub.f32 %v1799, %v1823
        %v1848 = vsub.f32 %v1800, %v1825
        %v1849 = vsub.f32 %v1801, %v1827
        %v1850 = vsub.f32 %v1802, %v1829
        %v1851 = vsub.f32 %v1803, %v1831
        %v1852 = vsub.f32 %v1804, %v1833
        %v1853 = vsub.f32 %v1805, %v1835
        %v1854 = vsub.f32 %v1806, %v1837
        %v1855 = vsub.f32 %v1807, %v1839
        %v1856 = vmul.f32 %v1840, 1.442695
        %v1857 = vpow.pop %v1856
        %v1858 = vmul.f32 %v1841, 1.442695
        %v1859 = vpow.pop %v1858
        %v1860 = vmul.f32 %v1842, 1.442695
        %v1861 = vpow.pop %v1860
        %v1862 = vmul.f32 %v1843, 1.442695
        %v1863 = vpow.pop %v1862
        %v1864 = vmul.f32 %v1844, 1.442695
        %v1865 = vpow.pop %v1864
        %v1866 = vmul.f32 %v1845, 1.442695
        %v1867 = vpow.pop %v1866
        %v1868 = vmul.f32 %v1846, 1.442695
        %v1869 = vpow.pop %v1868
        %v1870 = vmul.f32 %v1847, 1.442695
        %v1871 = vpow.pop %v1870
        %v1872 = vmul.f32 %v1848, 1.442695
        %v1873 = vpow.pop %v1872
        %v1874 = vmul.f32 %v1849, 1.442695
        %v1875 = vpow.pop %v1874
        %v1876 = vmul.f32 %v1850, 1.442695
        %v1877 = vpow.pop %v1876
        %v1878 = vmul.f32 %v1851, 1.442695
        %v1879 = vpow.pop %v1878
        %v1880 = vmul.f32 %v1852, 1.442695
        %v1881 = vpow.pop %v1880
        %v1882 = vmul.f32 %v1853, 1.442695
        %v1883 = vpow.pop %v1882
        %v1884 = vmul.f32 %v1854, 1.442695
        %v1885 = vpow.pop %v1884
        %v1886 = vmul.f32 %v1855, 1.442695
        %v1887 = vpow.pop %v1886
        %1888 = vadd.xlane.f32.xlu0 %v1857
        %v1889 = vpop.xlane.xlu0 %1888
        %1890 = vadd.xlane.f32.xlu0 %v1859
        %v1891 = vpop.xlane.xlu0 %1890
        %1892 = vadd.xlane.f32.xlu0 %v1861
        %v1893 = vpop.xlane.xlu0 %1892
        %1894 = vadd.xlane.f32.xlu0 %v1863
        %v1895 = vpop.xlane.xlu0 %1894
        %1896 = vadd.xlane.f32.xlu0 %v1865
        %v1897 = vpop.xlane.xlu0 %1896
        %1898 = vadd.xlane.f32.xlu0 %v1867
        %v1899 = vpop.xlane.xlu0 %1898
        %1900 = vadd.xlane.f32.xlu0 %v1869
        %v1901 = vpop.xlane.xlu0 %1900
        %1902 = vadd.xlane.f32.xlu0 %v1871
        %v1903 = vpop.xlane.xlu0 %1902
        %1904 = vadd.xlane.f32.xlu0 %v1873
        %v1905 = vpop.xlane.xlu0 %1904
        %1906 = vadd.xlane.f32.xlu0 %v1875
        %v1907 = vpop.xlane.xlu0 %1906
        %1908 = vadd.xlane.f32.xlu0 %v1877
        %v1909 = vpop.xlane.xlu0 %1908
        %1910 = vadd.xlane.f32.xlu0 %v1879
        %v1911 = vpop.xlane.xlu0 %1910
        %1912 = vadd.xlane.f32.xlu0 %v1881
        %v1913 = vpop.xlane.xlu0 %1912
        %1914 = vadd.xlane.f32.xlu0 %v1883
        %v1915 = vpop.xlane.xlu0 %1914
        %1916 = vadd.xlane.f32.xlu0 %v1885
        %v1917 = vpop.xlane.xlu0 %1916
        %1918 = vadd.xlane.f32.xlu0 %v1887
        %v1919 = vpop.xlane.xlu0 %1918
        %v1920 = vrcp.pop %v1889
        %v1921 = vrcp.pop %v1891
        %v1922 = vrcp.pop %v1893
        %v1923 = vrcp.pop %v1895
        %v1924 = vrcp.pop %v1897
        %v1925 = vrcp.pop %v1899
        %v1926 = vrcp.pop %v1901
        %v1927 = vrcp.pop %v1903
        %v1928 = vrcp.pop %v1905
        %v1929 = vrcp.pop %v1907
        %v1930 = vrcp.pop %v1909
        %v1931 = vrcp.pop %v1911
        %v1932 = vrcp.pop %v1913
        %v1933 = vrcp.pop %v1915
        %v1934 = vrcp.pop %v1917
        %v1935 = vrcp.pop %v1919
        %v1936 = vmul.f32 %v1857, %v1920
        %v1937 = vmul.f32 %v1859, %v1921
        %v1938 = vmul.f32 %v1861, %v1922
        %v1939 = vmul.f32 %v1863, %v1923
        %v1940 = vmul.f32 %v1865, %v1924
        %v1941 = vmul.f32 %v1867, %v1925
        %v1942 = vmul.f32 %v1869, %v1926
        %v1943 = vmul.f32 %v1871, %v1927
        %v1944 = vmul.f32 %v1873, %v1928
        %v1945 = vmul.f32 %v1875, %v1929
        %v1946 = vmul.f32 %v1877, %v1930
        %v1947 = vmul.f32 %v1879, %v1931
        %v1948 = vmul.f32 %v1881, %v1932
        %v1949 = vmul.f32 %v1883, %v1933
        %v1950 = vmul.f32 %v1885, %v1934
        %v1951 = vmul.f32 %v1887, %v1935
        %s1952 = scalar_lea.vmem [#allocation2], 16
        %v1953 = vld [vmem:[%s1952] sm:$0xff]
        %1954 = vrot.lane.b32.xlu0 %v1207, 112
        %v1955 = vpop.permute.xlu0 %1954
        %1956 = vrot.lane.b32.xlu0 %v1208, 112
        %v1957 = vpop.permute.xlu0 %1956
        %1958 = vrot.lane.b32.xlu0 %v1209, 112
        %v1959 = vpop.permute.xlu0 %1958
        %1960 = vrot.lane.b32.xlu0 %v1210, 112
        %v1961 = vpop.permute.xlu0 %1960
        %1962 = vrot.lane.b32.xlu0 %v1211, 112
        %v1963 = vpop.permute.xlu0 %1962
        %1964 = vrot.lane.b32.xlu0 %v1212, 112
        %v1965 = vpop.permute.xlu0 %1964
        %1966 = vrot.lane.b32.xlu0 %v1213, 112
        %v1967 = vpop.permute.xlu0 %1966
        %1968 = vrot.lane.b32.xlu0 %v1214, 112
        %v1969 = vpop.permute.xlu0 %1968
        %1970 = vrot.lane.b32.xlu0 %v1215, 112
        %v1971 = vpop.permute.xlu0 %1970
        %1972 = vrot.lane.b32.xlu0 %v1216, 112
        %v1973 = vpop.permute.xlu0 %1972
        %1974 = vrot.lane.b32.xlu0 %v1217, 112
        %v1975 = vpop.permute.xlu0 %1974
        %1976 = vrot.lane.b32.xlu0 %v1218, 112
        %v1977 = vpop.permute.xlu0 %1976
        %1978 = vrot.lane.b32.xlu0 %v1219, 112
        %v1979 = vpop.permute.xlu0 %1978
        %1980 = vrot.lane.b32.xlu0 %v1220, 112
        %v1981 = vpop.permute.xlu0 %1980
        %1982 = vrot.lane.b32.xlu0 %v1221, 112
        %v1983 = vpop.permute.xlu0 %1982
        %1984 = vrot.lane.b32.xlu0 %v1222, 112
        %v1985 = vpop.permute.xlu0 %1984
        %v1986 = vsel %vm1227, %v1955, 0
        %v1988 = vsel %vm1227, %v1957, 0
        %v1990 = vsel %vm1227, %v1959, 0
        %v1992 = vsel %vm1227, %v1961, 0
        %v1994 = vsel %vm1227, %v1963, 0
        %v1996 = vsel %vm1227, %v1965, 0
        %v1998 = vsel %vm1227, %v1967, 0
        %v2000 = vsel %vm1227, %v1969, 0
        %v2002 = vsel %vm1227, %v1971, 0
        %v2004 = vsel %vm1227, %v1973, 0
        %v2006 = vsel %vm1227, %v1975, 0
        %v2008 = vsel %vm1227, %v1977, 0
        %v2010 = vsel %vm1227, %v1979, 0
        %v2012 = vsel %vm1227, %v1981, 0
        %v2014 = vsel %vm1227, %v1983, 0
        %v2016 = vsel %vm1227, %v1985, 0
        %2018 = vmatprep.subr.mxu0 0.0
        %2019 = vmatpush1.msra.mxu0 %v1953
        %2020 = vmatprep.subr.mxu0 0.0
        %2021 = vmatpush1.msra.mxu0 0.0
        %2022 = vmatprep.subr.mxu0 0.0
        %2023 = vmatpush1.msra.mxu0 0.0
        %2024 = vmatprep.subr.mxu0 0.0
        %2025 = vmatpush1.msra.mxu0 0.0
        %2026 = vmatprep.subr.mxu0 0.0
        %2027 = vmatpush1.msra.mxu0 0.0
        %2028 = vmatprep.subr.mxu0 0.0
        %2029 = vmatpush1.msra.mxu0 0.0
        %2030 = vmatprep.subr.mxu0 0.0
        %2031 = vmatpush1.msra.mxu0 0.0
        %2032 = vmatprep.subr.mxu0 0.0
        %2033 = vmatpush1.msra.mxu0 0.0
        %2034 = vmatprep.subr.mxu0 0.0
        %2035 = vmatpush1.msra.mxu0 0.0
        %2036 = vmatprep.subr.mxu0 0.0
        %2037 = vmatpush1.msra.mxu0 0.0
        %2038 = vmatprep.subr.mxu0 0.0
        %2039 = vmatpush1.msra.mxu0 0.0
        %2040 = vmatprep.subr.mxu0 0.0
        %2041 = vmatpush1.msra.mxu0 0.0
        %2042 = vmatprep.subr.mxu0 0.0
        %2043 = vmatpush1.msra.mxu0 0.0
        %2044 = vmatprep.subr.mxu0 0.0
        %2045 = vmatpush1.msra.mxu0 0.0
        %2046 = vmatprep.subr.mxu0 0.0
        %2047 = vmatpush1.msra.mxu0 0.0
        %2048 = vmatprep.subr.mxu0 0.0
        %2049 = vmatpush1.msra.mxu0 0.0
        %2050 = vmatprep.subr.mxu0 0.0
        %2051 = vmatpush1.msra.mxu0 0.0
        %2052 = vmatprep.subr.mxu0 0.0
        %2053 = vmatpush1.msra.mxu0 0.0
        %2054 = vmatprep.subr.mxu0 0.0
        %2055 = vmatpush1.msra.mxu0 0.0
        %2056 = vmatprep.subr.mxu0 0.0
        %2057 = vmatpush1.msra.mxu0 0.0
        %2058 = vmatprep.subr.mxu0 0.0
        %2059 = vmatpush1.msra.mxu0 0.0
        %2060 = vmatprep.subr.mxu0 0.0
        %2061 = vmatpush1.msra.mxu0 0.0
        %2062 = vmatprep.subr.mxu0 0.0
        %2063 = vmatpush1.msra.mxu0 0.0
        %2064 = vmatprep.subr.mxu0 0.0
        %2065 = vmatpush1.msra.mxu0 0.0
        %2066 = vmatprep.subr.mxu0 0.0
        %2067 = vmatpush1.msra.mxu0 0.0
        %2068 = vmatprep.subr.mxu0 0.0
        %2069 = vmatpush1.msra.mxu0 0.0
        %2070 = vmatprep.subr.mxu0 0.0
        %2071 = vmatpush1.msra.mxu0 0.0
        %2072 = vmatprep.subr.mxu0 0.0
        %2073 = vmatpush1.msra.mxu0 0.0
        %2074 = vmatprep.subr.mxu0 0.0
        %2075 = vmatpush1.msra.mxu0 0.0
        %2076 = vmatprep.subr.mxu0 0.0
        %2077 = vmatpush1.msra.mxu0 0.0
        %2078 = vmatprep.subr.mxu0 0.0
        %2079 = vmatpush1.msra.mxu0 0.0
        %2080 = vmatprep.subr.mxu0 0.0
        %2081 = vmatpush1.msra.mxu0 0.0
        %2082 = vmatprep.mubr.f32.mxu0 0.0
        %2083 = vmatmul.mubr.f32.gmra.mrb[0].mxu0 %v1986
        %v2084 = vpop.f32.mrb[0].mxu0
        %v2085 = vadd.f32 0.0, %v2084
        %v2086 = vpop.f32.mrb[0].mxu0
        %2087 = vmatprep.mubr.f32.mxu0 0.0
        %2088 = vmatmul.mubr.f32.gmra.mrb[0].mxu0 %v1988
        %v2089 = vpop.f32.mrb[0].mxu0
        %v2090 = vadd.f32 0.0, %v2089
        %v2091 = vpop.f32.mrb[0].mxu0
        %2092 = vmatprep.mubr.f32.mxu0 0.0
        %2093 = vmatmul.mubr.f32.gmra.mrb[0].mxu0 %v1990
        %v2094 = vpop.f32.mrb[0].mxu0
        %v2095 = vadd.f32 0.0, %v2094
        %v2096 = vpop.f32.mrb[0].mxu0
        %2097 = vmatprep.mubr.f32.mxu0 0.0
        %2098 = vmatmul.mubr.f32.gmra.mrb[0].mxu0 %v1992
        %v2099 = vpop.f32.mrb[0].mxu0
        %v2100 = vadd.f32 0.0, %v2099
        %v2101 = vpop.f32.mrb[0].mxu0
        %2102 = vmatprep.mubr.f32.mxu0 0.0
        %2103 = vmatmul.mubr.f32.gmra.mrb[0].mxu0 %v1994
        %v2104 = vpop.f32.mrb[0].mxu0
        %v2105 = vadd.f32 0.0, %v2104
        %v2106 = vpop.f32.mrb[0].mxu0
        %2107 = vmatprep.mubr.f32.mxu0 0.0
        %2108 = vmatmul.mubr.f32.gmra.mrb[0].mxu0 %v1996
        %v2109 = vpop.f32.mrb[0].mxu0
        %v2110 = vadd.f32 0.0, %v2109
        %v2111 = vpop.f32.mrb[0].mxu0
        %2112 = vmatprep.mubr.f32.mxu0 0.0
        %2113 = vmatmul.mubr.f32.gmra.mrb[0].mxu0 %v1998
        %v2114 = vpop.f32.mrb[0].mxu0
        %v2115 = vadd.f32 0.0, %v2114
        %v2116 = vpop.f32.mrb[0].mxu0
        %2117 = vmatprep.mubr.f32.mxu0 0.0
        %2118 = vmatmul.mubr.f32.gmra.mrb[0].mxu0 %v2000
        %v2119 = vpop.f32.mrb[0].mxu0
        %v2120 = vadd.f32 0.0, %v2119
        %v2121 = vpop.f32.mrb[0].mxu0
        %2122 = vmatprep.mubr.f32.mxu0 0.0
        %2123 = vmatmul.mubr.f32.gmra.mrb[0].mxu0 %v2002
        %v2124 = vpop.f32.mrb[0].mxu0
        %v2125 = vadd.f32 0.0, %v2124
        %v2126 = vpop.f32.mrb[0].mxu0
        %2127 = vmatprep.mubr.f32.mxu0 0.0
        %2128 = vmatmul.mubr.f32.gmra.mrb[0].mxu0 %v2004
        %v2129 = vpop.f32.mrb[0].mxu0
        %v2130 = vadd.f32 0.0, %v2129
        %v2131 = vpop.f32.mrb[0].mxu0
        %2132 = vmatprep.mubr.f32.mxu0 0.0
        %2133 = vmatmul.mubr.f32.gmra.mrb[0].mxu0 %v2006
        %v2134 = vpop.f32.mrb[0].mxu0
        %v2135 = vadd.f32 0.0, %v2134
        %v2136 = vpop.f32.mrb[0].mxu0
        %2137 = vmatprep.mubr.f32.mxu0 0.0
        %2138 = vmatmul.mubr.f32.gmra.mrb[0].mxu0 %v2008
        %v2139 = vpop.f32.mrb[0].mxu0
        %v2140 = vadd.f32 0.0, %v2139
        %v2141 = vpop.f32.mrb[0].mxu0
        %2142 = vmatprep.mubr.f32.mxu0 0.0
        %2143 = vmatmul.mubr.f32.gmra.mrb[0].mxu0 %v2010
        %v2144 = vpop.f32.mrb[0].mxu0
        %v2145 = vadd.f32 0.0, %v2144
        %v2146 = vpop.f32.mrb[0].mxu0
        %2147 = vmatprep.mubr.f32.mxu0 0.0
        %2148 = vmatmul.mubr.f32.gmra.mrb[0].mxu0 %v2012
        %v2149 = vpop.f32.mrb[0].mxu0
        %v2150 = vadd.f32 0.0, %v2149
        %v2151 = vpop.f32.mrb[0].mxu0
        %2152 = vmatprep.mubr.f32.mxu0 0.0
        %2153 = vmatmul.mubr.f32.gmra.mrb[0].mxu0 %v2014
        %v2154 = vpop.f32.mrb[0].mxu0
        %v2155 = vadd.f32 0.0, %v2154
        %v2156 = vpop.f32.mrb[0].mxu0
        %2157 = vmatprep.mubr.f32.mxu0 0.0
        %2158 = vmatmul.mubr.f32.gmra.mrb[0].mxu0 %v2016
        %v2159 = vpop.f32.mrb[0].mxu0
        %v2160 = vadd.f32 0.0, %v2159
        %v2161 = vpop.f32.mrb[0].mxu0
        %2162 = vdwg.mxu0
        %v2163 = vsel %vm1225, %v2085, -1e+30
        %v2164 = vsel %vm1225, %v2090, -1e+30
        %v2165 = vsel %vm1225, %v2095, -1e+30
        %v2166 = vsel %vm1225, %v2100, -1e+30
        %v2167 = vsel %vm1225, %v2105, -1e+30
        %v2168 = vsel %vm1225, %v2110, -1e+30
        %v2169 = vsel %vm1225, %v2115, -1e+30
        %v2170 = vsel %vm1225, %v2120, -1e+30
        %v2171 = vsel %vm1225, %v2125, -1e+30
        %v2172 = vsel %vm1225, %v2130, -1e+30
        %v2173 = vsel %vm1225, %v2135, -1e+30
        %v2174 = vsel %vm1225, %v2140, -1e+30
        %v2175 = vsel %vm1225, %v2145, -1e+30
        %v2176 = vsel %vm1225, %v2150, -1e+30
        %v2177 = vsel %vm1225, %v2155, -1e+30
        %v2178 = vsel %vm1225, %v2160, -1e+30
        %2179 = vmax.xlane.f32.xlu0 %v2163
        %v2180 = vpop.xlane.xlu0 %2179
        %2181 = vmax.xlane.f32.xlu0 %v2164
        %v2182 = vpop.xlane.xlu0 %2181
        %2183 = vmax.xlane.f32.xlu0 %v2165
        %v2184 = vpop.xlane.xlu0 %2183
        %2185 = vmax.xlane.f32.xlu0 %v2166
        %v2186 = vpop.xlane.xlu0 %2185
        %2187 = vmax.xlane.f32.xlu0 %v2167
        %v2188 = vpop.xlane.xlu0 %2187
        %2189 = vmax.xlane.f32.xlu0 %v2168
        %v2190 = vpop.xlane.xlu0 %2189
        %2191 = vmax.xlane.f32.xlu0 %v2169
        %v2192 = vpop.xlane.xlu0 %2191
        %2193 = vmax.xlane.f32.xlu0 %v2170
        %v2194 = vpop.xlane.xlu0 %2193
        %2195 = vmax.xlane.f32.xlu0 %v2171
        %v2196 = vpop.xlane.xlu0 %2195
        %2197 = vmax.xlane.f32.xlu0 %v2172
        %v2198 = vpop.xlane.xlu0 %2197
        %2199 = vmax.xlane.f32.xlu0 %v2173
        %v2200 = vpop.xlane.xlu0 %2199
        %2201 = vmax.xlane.f32.xlu0 %v2174
        %v2202 = vpop.xlane.xlu0 %2201
        %2203 = vmax.xlane.f32.xlu0 %v2175
        %v2204 = vpop.xlane.xlu0 %2203
        %2205 = vmax.xlane.f32.xlu0 %v2176
        %v2206 = vpop.xlane.xlu0 %2205
        %2207 = vmax.xlane.f32.xlu0 %v2177
        %v2208 = vpop.xlane.xlu0 %2207
        %2209 = vmax.xlane.f32.xlu0 %v2178
        %v2210 = vpop.xlane.xlu0 %2209
        %v2211 = vsub.f32 %v2163, %v2180
        %v2212 = vsub.f32 %v2164, %v2182
        %v2213 = vsub.f32 %v2165, %v2184
        %v2214 = vsub.f32 %v2166, %v2186
        %v2215 = vsub.f32 %v2167, %v2188
        %v2216 = vsub.f32 %v2168, %v2190
        %v2217 = vsub.f32 %v2169, %v2192
        %v2218 = vsub.f32 %v2170, %v2194
        %v2219 = vsub.f32 %v2171, %v2196
        %v2220 = vsub.f32 %v2172, %v2198
        %v2221 = vsub.f32 %v2173, %v2200
        %v2222 = vsub.f32 %v2174, %v2202
        %v2223 = vsub.f32 %v2175, %v2204
        %v2224 = vsub.f32 %v2176, %v2206
        %v2225 = vsub.f32 %v2177, %v2208
        %v2226 = vsub.f32 %v2178, %v2210
        %v2227 = vmul.f32 %v2211, 1.442695
        %v2228 = vpow.pop %v2227
        %v2229 = vmul.f32 %v2212, 1.442695
        %v2230 = vpow.pop %v2229
        %v2231 = vmul.f32 %v2213, 1.442695
        %v2232 = vpow.pop %v2231
        %v2233 = vmul.f32 %v2214, 1.442695
        %v2234 = vpow.pop %v2233
        %v2235 = vmul.f32 %v2215, 1.442695
        %v2236 = vpow.pop %v2235
        %v2237 = vmul.f32 %v2216, 1.442695
        %v2238 = vpow.pop %v2237
        %v2239 = vmul.f32 %v2217, 1.442695
        %v2240 = vpow.pop %v2239
        %v2241 = vmul.f32 %v2218, 1.442695
        %v2242 = vpow.pop %v2241
        %v2243 = vmul.f32 %v2219, 1.442695
        %v2244 = vpow.pop %v2243
        %v2245 = vmul.f32 %v2220, 1.442695
        %v2246 = vpow.pop %v2245
        %v2247 = vmul.f32 %v2221, 1.442695
        %v2248 = vpow.pop %v2247
        %v2249 = vmul.f32 %v2222, 1.442695
        %v2250 = vpow.pop %v2249
        %v2251 = vmul.f32 %v2223, 1.442695
        %v2252 = vpow.pop %v2251
        %v2253 = vmul.f32 %v2224, 1.442695
        %v2254 = vpow.pop %v2253
        %v2255 = vmul.f32 %v2225, 1.442695
        %v2256 = vpow.pop %v2255
        %v2257 = vmul.f32 %v2226, 1.442695
        %v2258 = vpow.pop %v2257
        %2259 = vadd.xlane.f32.xlu0 %v2228
        %v2260 = vpop.xlane.xlu0 %2259
        %2261 = vadd.xlane.f32.xlu0 %v2230
        %v2262 = vpop.xlane.xlu0 %2261
        %2263 = vadd.xlane.f32.xlu0 %v2232
        %v2264 = vpop.xlane.xlu0 %2263
        %2265 = vadd.xlane.f32.xlu0 %v2234
        %v2266 = vpop.xlane.xlu0 %2265
        %2267 = vadd.xlane.f32.xlu0 %v2236
        %v2268 = vpop.xlane.xlu0 %2267
        %2269 = vadd.xlane.f32.xlu0 %v2238
        %v2270 = vpop.xlane.xlu0 %2269
        %2271 = vadd.xlane.f32.xlu0 %v2240
        %v2272 = vpop.xlane.xlu0 %2271
        %2273 = vadd.xlane.f32.xlu0 %v2242
        %v2274 = vpop.xlane.xlu0 %2273
        %2275 = vadd.xlane.f32.xlu0 %v2244
        %v2276 = vpop.xlane.xlu0 %2275
        %2277 = vadd.xlane.f32.xlu0 %v2246
        %v2278 = vpop.xlane.xlu0 %2277
        %2279 = vadd.xlane.f32.xlu0 %v2248
        %v2280 = vpop.xlane.xlu0 %2279
        %2281 = vadd.xlane.f32.xlu0 %v2250
        %v2282 = vpop.xlane.xlu0 %2281
        %2283 = vadd.xlane.f32.xlu0 %v2252
        %v2284 = vpop.xlane.xlu0 %2283
        %2285 = vadd.xlane.f32.xlu0 %v2254
        %v2286 = vpop.xlane.xlu0 %2285
        %2287 = vadd.xlane.f32.xlu0 %v2256
        %v2288 = vpop.xlane.xlu0 %2287
        %2289 = vadd.xlane.f32.xlu0 %v2258
        %v2290 = vpop.xlane.xlu0 %2289
        %v2291 = vrcp.pop %v2260
        %v2292 = vrcp.pop %v2262
        %v2293 = vrcp.pop %v2264
        %v2294 = vrcp.pop %v2266
        %v2295 = vrcp.pop %v2268
        %v2296 = vrcp.pop %v2270
        %v2297 = vrcp.pop %v2272
        %v2298 = vrcp.pop %v2274
        %v2299 = vrcp.pop %v2276
        %v2300 = vrcp.pop %v2278
        %v2301 = vrcp.pop %v2280
        %v2302 = vrcp.pop %v2282
        %v2303 = vrcp.pop %v2284
        %v2304 = vrcp.pop %v2286
        %v2305 = vrcp.pop %v2288
        %v2306 = vrcp.pop %v2290
        %v2307 = vmul.f32 %v2228, %v2291
        %v2308 = vmul.f32 %v2230, %v2292
        %v2309 = vmul.f32 %v2232, %v2293
        %v2310 = vmul.f32 %v2234, %v2294
        %v2311 = vmul.f32 %v2236, %v2295
        %v2312 = vmul.f32 %v2238, %v2296
        %v2313 = vmul.f32 %v2240, %v2297
        %v2314 = vmul.f32 %v2242, %v2298
        %v2315 = vmul.f32 %v2244, %v2299
        %v2316 = vmul.f32 %v2246, %v2300
        %v2317 = vmul.f32 %v2248, %v2301
        %v2318 = vmul.f32 %v2250, %v2302
        %v2319 = vmul.f32 %v2252, %v2303
        %v2320 = vmul.f32 %v2254, %v2304
        %v2321 = vmul.f32 %v2256, %v2305
        %v2322 = vmul.f32 %v2258, %v2306
        %s2323 = scalar_lea.vmem [#allocation2], 24
        %v2324 = vld [vmem:[%s2323] sm:$0xff]
        %2325 = vrot.lane.b32.xlu0 %v1207, 104
        %v2326 = vpop.permute.xlu0 %2325
        %2327 = vrot.lane.b32.xlu0 %v1208, 104
        %v2328 = vpop.permute.xlu0 %2327
        %2329 = vrot.lane.b32.xlu0 %v1209, 104
        %v2330 = vpop.permute.xlu0 %2329
        %2331 = vrot.lane.b32.xlu0 %v1210, 104
        %v2332 = vpop.permute.xlu0 %2331
        %2333 = vrot.lane.b32.xlu0 %v1211, 104
        %v2334 = vpop.permute.xlu0 %2333
        %2335 = vrot.lane.b32.xlu0 %v1212, 104
        %v2336 = vpop.permute.xlu0 %2335
        %2337 = vrot.lane.b32.xlu0 %v1213, 104
        %v2338 = vpop.permute.xlu0 %2337
        %2339 = vrot.lane.b32.xlu0 %v1214, 104
        %v2340 = vpop.permute.xlu0 %2339
        %2341 = vrot.lane.b32.xlu0 %v1215, 104
        %v2342 = vpop.permute.xlu0 %2341
        %2343 = vrot.lane.b32.xlu0 %v1216, 104
        %v2344 = vpop.permute.xlu0 %2343
        %2345 = vrot.lane.b32.xlu0 %v1217, 104
        %v2346 = vpop.permute.xlu0 %2345
        %2347 = vrot.lane.b32.xlu0 %v1218, 104
        %v2348 = vpop.permute.xlu0 %2347
        %2349 = vrot.lane.b32.xlu0 %v1219, 104
        %v2350 = vpop.permute.xlu0 %2349
        %2351 = vrot.lane.b32.xlu0 %v1220, 104
        %v2352 = vpop.permute.xlu0 %2351
        %2353 = vrot.lane.b32.xlu0 %v1221, 104
        %v2354 = vpop.permute.xlu0 %2353
        %2355 = vrot.lane.b32.xlu0 %v1222, 104
        %v2356 = vpop.permute.xlu0 %2355
        %v2357 = vsel %vm1227, %v2326, 0
        %v2359 = vsel %vm1227, %v2328, 0
        %v2361 = vsel %vm1227, %v2330, 0
        %v2363 = vsel %vm1227, %v2332, 0
        %v2365 = vsel %vm1227, %v2334, 0
        %v2367 = vsel %vm1227, %v2336, 0
        %v2369 = vsel %vm1227, %v2338, 0
        %v2371 = vsel %vm1227, %v2340, 0
        %v2373 = vsel %vm1227, %v2342, 0
        %v2375 = vsel %vm1227, %v2344, 0
        %v2377 = vsel %vm1227, %v2346, 0
        %v2379 = vsel %vm1227, %v2348, 0
        %v2381 = vsel %vm1227, %v2350, 0
        %v2383 = vsel %vm1227, %v2352, 0
        %v2385 = vsel %vm1227, %v2354, 0
        %v2387 = vsel %vm1227, %v2356, 0
        %2389 = vmatprep.subr.mxu0 0.0
        %2390 = vmatpush1.msra.mxu0 %v2324
        %2391 = vmatprep.subr.mxu0 0.0
        %2392 = vmatpush1.msra.mxu0 0.0
        %2393 = vmatprep.subr.mxu0 0.0
        %2394 = vmatpush1.msra.mxu0 0.0
        %2395 = vmatprep.subr.mxu0 0.0
        %2396 = vmatpush1.msra.mxu0 0.0
        %2397 = vmatprep.subr.mxu0 0.0
        %2398 = vmatpush1.msra.mxu0 0.0
        %2399 = vmatprep.subr.mxu0 0.0
        %2400 = vmatpush1.msra.mxu0 0.0
        %2401 = vmatprep.subr.mxu0 0.0
        %2402 = vmatpush1.msra.mxu0 0.0
        %2403 = vmatprep.subr.mxu0 0.0
        %2404 = vmatpush1.msra.mxu0 0.0
        %2405 = vmatprep.subr.mxu0 0.0
        %2406 = vmatpush1.msra.mxu0 0.0
        %2407 = vmatprep.subr.mxu0 0.0
        %2408 = vmatpush1.msra.mxu0 0.0
        %2409 = vmatprep.subr.mxu0 0.0
        %2410 = vmatpush1.msra.mxu0 0.0
        %2411 = vmatprep.subr.mxu0 0.0
        %2412 = vmatpush1.msra.mxu0 0.0
        %2413 = vmatprep.subr.mxu0 0.0
        %2414 = vmatpush1.msra.mxu0 0.0
        %2415 = vmatprep.subr.mxu0 0.0
        %2416 = vmatpush1.msra.mxu0 0.0
        %2417 = vmatprep.subr.mxu0 0.0
        %2418 = vmatpush1.msra.mxu0 0.0
        %2419 = vmatprep.subr.mxu0 0.0
        %2420 = vmatpush1.msra.mxu0 0.0
        %2421 = vmatprep.subr.mxu0 0.0
        %2422 = vmatpush1.msra.mxu0 0.0
        %2423 = vmatprep.subr.mxu0 0.0
        %2424 = vmatpush1.msra.mxu0 0.0
        %2425 = vmatprep.subr.mxu0 0.0
        %2426 = vmatpush1.msra.mxu0 0.0
        %2427 = vmatprep.subr.mxu0 0.0
        %2428 = vmatpush1.msra.mxu0 0.0
        %2429 = vmatprep.subr.mxu0 0.0
        %2430 = vmatpush1.msra.mxu0 0.0
        %2431 = vmatprep.subr.mxu0 0.0
        %2432 = vmatpush1.msra.mxu0 0.0
        %2433 = vmatprep.subr.mxu0 0.0
        %2434 = vmatpush1.msra.mxu0 0.0
        %2435 = vmatprep.subr.mxu0 0.0
        %2436 = vmatpush1.msra.mxu0 0.0
        %2437 = vmatprep.subr.mxu0 0.0
        %2438 = vmatpush1.msra.mxu0 0.0
        %2439 = vmatprep.subr.mxu0 0.0
        %2440 = vmatpush1.msra.mxu0 0.0
        %2441 = vmatprep.subr.mxu0 0.0
        %2442 = vmatpush1.msra.mxu0 0.0
        %2443 = vmatprep.subr.mxu0 0.0
        %2444 = vmatpush1.msra.mxu0 0.0
        %2445 = vmatprep.subr.mxu0 0.0
        %2446 = vmatpush1.msra.mxu0 0.0
        %2447 = vmatprep.subr.mxu0 0.0
        %2448 = vmatpush1.msra.mxu0 0.0
        %2449 = vmatprep.subr.mxu0 0.0
        %2450 = vmatpush1.msra.mxu0 0.0
        %2451 = vmatprep.subr.mxu0 0.0
        %2452 = vmatpush1.msra.mxu0 0.0
        %2453 = vmatprep.mubr.f32.mxu0 0.0
        %2454 = vmatmul.mubr.f32.gmra.mrb[0].mxu0 %v2357
        %v2455 = vpop.f32.mrb[0].mxu0
        %v2456 = vadd.f32 0.0, %v2455
        %v2457 = vpop.f32.mrb[0].mxu0
        %2458 = vmatprep.mubr.f32.mxu0 0.0
        %2459 = vmatmul.mubr.f32.gmra.mrb[0].mxu0 %v2359
        %v2460 = vpop.f32.mrb[0].mxu0
        %v2461 = vadd.f32 0.0, %v2460
        %v2462 = vpop.f32.mrb[0].mxu0
        %2463 = vmatprep.mubr.f32.mxu0 0.0
        %2464 = vmatmul.mubr.f32.gmra.mrb[0].mxu0 %v2361
        %v2465 = vpop.f32.mrb[0].mxu0
        %v2466 = vadd.f32 0.0, %v2465
        %v2467 = vpop.f32.mrb[0].mxu0
        %2468 = vmatprep.mubr.f32.mxu0 0.0
        %2469 = vmatmul.mubr.f32.gmra.mrb[0].mxu0 %v2363
        %v2470 = vpop.f32.mrb[0].mxu0
        %v2471 = vadd.f32 0.0, %v2470
        %v2472 = vpop.f32.mrb[0].mxu0
        %2473 = vmatprep.mubr.f32.mxu0 0.0
        %2474 = vmatmul.mubr.f32.gmra.mrb[0].mxu0 %v2365
        %v2475 = vpop.f32.mrb[0].mxu0
        %v2476 = vadd.f32 0.0, %v2475
        %v2477 = vpop.f32.mrb[0].mxu0
        %2478 = vmatprep.mubr.f32.mxu0 0.0
        %2479 = vmatmul.mubr.f32.gmra.mrb[0].mxu0 %v2367
        %v2480 = vpop.f32.mrb[0].mxu0
        %v2481 = vadd.f32 0.0, %v2480
        %v2482 = vpop.f32.mrb[0].mxu0
        %2483 = vmatprep.mubr.f32.mxu0 0.0
        %2484 = vmatmul.mubr.f32.gmra.mrb[0].mxu0 %v2369
        %v2485 = vpop.f32.mrb[0].mxu0
        %v2486 = vadd.f32 0.0, %v2485
        %v2487 = vpop.f32.mrb[0].mxu0
        %2488 = vmatprep.mubr.f32.mxu0 0.0
        %2489 = vmatmul.mubr.f32.gmra.mrb[0].mxu0 %v2371
        %v2490 = vpop.f32.mrb[0].mxu0
        %v2491 = vadd.f32 0.0, %v2490
        %v2492 = vpop.f32.mrb[0].mxu0
        %2493 = vmatprep.mubr.f32.mxu0 0.0
        %2494 = vmatmul.mubr.f32.gmra.mrb[0].mxu0 %v2373
        %v2495 = vpop.f32.mrb[0].mxu0
        %v2496 = vadd.f32 0.0, %v2495
        %v2497 = vpop.f32.mrb[0].mxu0
        %2498 = vmatprep.mubr.f32.mxu0 0.0
        %2499 = vmatmul.mubr.f32.gmra.mrb[0].mxu0 %v2375
        %v2500 = vpop.f32.mrb[0].mxu0
        %v2501 = vadd.f32 0.0, %v2500
        %v2502 = vpop.f32.mrb[0].mxu0
        %2503 = vmatprep.mubr.f32.mxu0 0.0
        %2504 = vmatmul.mubr.f32.gmra.mrb[0].mxu0 %v2377
        %v2505 = vpop.f32.mrb[0].mxu0
        %v2506 = vadd.f32 0.0, %v2505
        %v2507 = vpop.f32.mrb[0].mxu0
        %2508 = vmatprep.mubr.f32.mxu0 0.0
        %2509 = vmatmul.mubr.f32.gmra.mrb[0].mxu0 %v2379
        %v2510 = vpop.f32.mrb[0].mxu0
        %v2511 = vadd.f32 0.0, %v2510
        %v2512 = vpop.f32.mrb[0].mxu0
        %2513 = vmatprep.mubr.f32.mxu0 0.0
        %2514 = vmatmul.mubr.f32.gmra.mrb[0].mxu0 %v2381
        %v2515 = vpop.f32.mrb[0].mxu0
        %v2516 = vadd.f32 0.0, %v2515
        %v2517 = vpop.f32.mrb[0].mxu0
        %2518 = vmatprep.mubr.f32.mxu0 0.0
        %2519 = vmatmul.mubr.f32.gmra.mrb[0].mxu0 %v2383
        %v2520 = vpop.f32.mrb[0].mxu0
        %v2521 = vadd.f32 0.0, %v2520
        %v2522 = vpop.f32.mrb[0].mxu0
        %2523 = vmatprep.mubr.f32.mxu0 0.0
        %2524 = vmatmul.mubr.f32.gmra.mrb[0].mxu0 %v2385
        %v2525 = vpop.f32.mrb[0].mxu0
        %v2526 = vadd.f32 0.0, %v2525
        %v2527 = vpop.f32.mrb[0].mxu0
        %2528 = vmatprep.mubr.f32.mxu0 0.0
        %2529 = vmatmul.mubr.f32.gmra.mrb[0].mxu0 %v2387
        %v2530 = vpop.f32.mrb[0].mxu0
        %v2531 = vadd.f32 0.0, %v2530
        %v2532 = vpop.f32.mrb[0].mxu0
        %2533 = vdwg.mxu0
        %v2534 = vsel %vm1225, %v2456, -1e+30
        %v2535 = vsel %vm1225, %v2461, -1e+30
        %v2536 = vsel %vm1225, %v2466, -1e+30
        %v2537 = vsel %vm1225, %v2471, -1e+30
        %v2538 = vsel %vm1225, %v2476, -1e+30
        %v2539 = vsel %vm1225, %v2481, -1e+30
        %v2540 = vsel %vm1225, %v2486, -1e+30
        %v2541 = vsel %vm1225, %v2491, -1e+30
        %v2542 = vsel %vm1225, %v2496, -1e+30
        %v2543 = vsel %vm1225, %v2501, -1e+30
        %v2544 = vsel %vm1225, %v2506, -1e+30
        %v2545 = vsel %vm1225, %v2511, -1e+30
        %v2546 = vsel %vm1225, %v2516, -1e+30
        %v2547 = vsel %vm1225, %v2521, -1e+30
        %v2548 = vsel %vm1225, %v2526, -1e+30
        %v2549 = vsel %vm1225, %v2531, -1e+30
        %2550 = vmax.xlane.f32.xlu0 %v2534
        %v2551 = vpop.xlane.xlu0 %2550
        %2552 = vmax.xlane.f32.xlu0 %v2535
        %v2553 = vpop.xlane.xlu0 %2552
        %2554 = vmax.xlane.f32.xlu0 %v2536
        %v2555 = vpop.xlane.xlu0 %2554
        %2556 = vmax.xlane.f32.xlu0 %v2537
        %v2557 = vpop.xlane.xlu0 %2556
        %2558 = vmax.xlane.f32.xlu0 %v2538
        %v2559 = vpop.xlane.xlu0 %2558
        %2560 = vmax.xlane.f32.xlu0 %v2539
        %v2561 = vpop.xlane.xlu0 %2560
        %2562 = vmax.xlane.f32.xlu0 %v2540
        %v2563 = vpop.xlane.xlu0 %2562
        %2564 = vmax.xlane.f32.xlu0 %v2541
        %v2565 = vpop.xlane.xlu0 %2564
        %2566 = vmax.xlane.f32.xlu0 %v2542
        %v2567 = vpop.xlane.xlu0 %2566
        %2568 = vmax.xlane.f32.xlu0 %v2543
        %v2569 = vpop.xlane.xlu0 %2568
        %2570 = vmax.xlane.f32.xlu0 %v2544
        %v2571 = vpop.xlane.xlu0 %2570
        %2572 = vmax.xlane.f32.xlu0 %v2545
        %v2573 = vpop.xlane.xlu0 %2572
        %2574 = vmax.xlane.f32.xlu0 %v2546
        %v2575 = vpop.xlane.xlu0 %2574
        %2576 = vmax.xlane.f32.xlu0 %v2547
        %v2577 = vpop.xlane.xlu0 %2576
        %2578 = vmax.xlane.f32.xlu0 %v2548
        %v2579 = vpop.xlane.xlu0 %2578
        %2580 = vmax.xlane.f32.xlu0 %v2549
        %v2581 = vpop.xlane.xlu0 %2580
        %v2582 = vsub.f32 %v2534, %v2551
        %v2583 = vsub.f32 %v2535, %v2553
        %v2584 = vsub.f32 %v2536, %v2555
        %v2585 = vsub.f32 %v2537, %v2557
        %v2586 = vsub.f32 %v2538, %v2559
        %v2587 = vsub.f32 %v2539, %v2561
        %v2588 = vsub.f32 %v2540, %v2563
        %v2589 = vsub.f32 %v2541, %v2565
        %v2590 = vsub.f32 %v2542, %v2567
        %v2591 = vsub.f32 %v2543, %v2569
        %v2592 = vsub.f32 %v2544, %v2571
        %v2593 = vsub.f32 %v2545, %v2573
        %v2594 = vsub.f32 %v2546, %v2575
        %v2595 = vsub.f32 %v2547, %v2577
        %v2596 = vsub.f32 %v2548, %v2579
        %v2597 = vsub.f32 %v2549, %v2581
        %v2598 = vmul.f32 %v2582, 1.442695
        %v2599 = vpow.pop %v2598
        %v2600 = vmul.f32 %v2583, 1.442695
        %v2601 = vpow.pop %v2600
        %v2602 = vmul.f32 %v2584, 1.442695
        %v2603 = vpow.pop %v2602
        %v2604 = vmul.f32 %v2585, 1.442695
        %v2605 = vpow.pop %v2604
        %v2606 = vmul.f32 %v2586, 1.442695
        %v2607 = vpow.pop %v2606
        %v2608 = vmul.f32 %v2587, 1.442695
        %v2609 = vpow.pop %v2608
        %v2610 = vmul.f32 %v2588, 1.442695
        %v2611 = vpow.pop %v2610
        %v2612 = vmul.f32 %v2589, 1.442695
        %v2613 = vpow.pop %v2612
        %v2614 = vmul.f32 %v2590, 1.442695
        %v2615 = vpow.pop %v2614
        %v2616 = vmul.f32 %v2591, 1.442695
        %v2617 = vpow.pop %v2616
        %v2618 = vmul.f32 %v2592, 1.442695
        %v2619 = vpow.pop %v2618
        %v2620 = vmul.f32 %v2593, 1.442695
        %v2621 = vpow.pop %v2620
        %v2622 = vmul.f32 %v2594, 1.442695
        %v2623 = vpow.pop %v2622
        %v2624 = vmul.f32 %v2595, 1.442695
        %v2625 = vpow.pop %v2624
        %v2626 = vmul.f32 %v2596, 1.442695
        %v2627 = vpow.pop %v2626
        %v2628 = vmul.f32 %v2597, 1.442695
        %v2629 = vpow.pop %v2628
        %2630 = vadd.xlane.f32.xlu0 %v2599
        %v2631 = vpop.xlane.xlu0 %2630
        %2632 = vadd.xlane.f32.xlu0 %v2601
        %v2633 = vpop.xlane.xlu0 %2632
        %2634 = vadd.xlane.f32.xlu0 %v2603
        %v2635 = vpop.xlane.xlu0 %2634
        %2636 = vadd.xlane.f32.xlu0 %v2605
        %v2637 = vpop.xlane.xlu0 %2636
        %2638 = vadd.xlane.f32.xlu0 %v2607
        %v2639 = vpop.xlane.xlu0 %2638
        %2640 = vadd.xlane.f32.xlu0 %v2609
        %v2641 = vpop.xlane.xlu0 %2640
        %2642 = vadd.xlane.f32.xlu0 %v2611
        %v2643 = vpop.xlane.xlu0 %2642
        %2644 = vadd.xlane.f32.xlu0 %v2613
        %v2645 = vpop.xlane.xlu0 %2644
        %2646 = vadd.xlane.f32.xlu0 %v2615
        %v2647 = vpop.xlane.xlu0 %2646
        %2648 = vadd.xlane.f32.xlu0 %v2617
        %v2649 = vpop.xlane.xlu0 %2648
        %2650 = vadd.xlane.f32.xlu0 %v2619
        %v2651 = vpop.xlane.xlu0 %2650
        %2652 = vadd.xlane.f32.xlu0 %v2621
        %v2653 = vpop.xlane.xlu0 %2652
        %2654 = vadd.xlane.f32.xlu0 %v2623
        %v2655 = vpop.xlane.xlu0 %2654
        %2656 = vadd.xlane.f32.xlu0 %v2625
        %v2657 = vpop.xlane.xlu0 %2656
        %2658 = vadd.xlane.f32.xlu0 %v2627
        %v2659 = vpop.xlane.xlu0 %2658
        %2660 = vadd.xlane.f32.xlu0 %v2629
        %v2661 = vpop.xlane.xlu0 %2660
        %v2662 = vrcp.pop %v2631
        %v2663 = vrcp.pop %v2633
        %v2664 = vrcp.pop %v2635
        %v2665 = vrcp.pop %v2637
        %v2666 = vrcp.pop %v2639
        %v2667 = vrcp.pop %v2641
        %v2668 = vrcp.pop %v2643
        %v2669 = vrcp.pop %v2645
        %v2670 = vrcp.pop %v2647
        %v2671 = vrcp.pop %v2649
        %v2672 = vrcp.pop %v2651
        %v2673 = vrcp.pop %v2653
        %v2674 = vrcp.pop %v2655
        %v2675 = vrcp.pop %v2657
        %v2676 = vrcp.pop %v2659
        %v2677 = vrcp.pop %v2661
        %v2678 = vmul.f32 %v2599, %v2662
        %v2679 = vmul.f32 %v2601, %v2663
        %v2680 = vmul.f32 %v2603, %v2664
        %v2681 = vmul.f32 %v2605, %v2665
        %v2682 = vmul.f32 %v2607, %v2666
        %v2683 = vmul.f32 %v2609, %v2667
        %v2684 = vmul.f32 %v2611, %v2668
        %v2685 = vmul.f32 %v2613, %v2669
        %v2686 = vmul.f32 %v2615, %v2670
        %v2687 = vmul.f32 %v2617, %v2671
        %v2688 = vmul.f32 %v2619, %v2672
        %v2689 = vmul.f32 %v2621, %v2673
        %v2690 = vmul.f32 %v2623, %v2674
        %v2691 = vmul.f32 %v2625, %v2675
        %v2692 = vmul.f32 %v2627, %v2676
        %v2693 = vmul.f32 %v2629, %v2677
        %s2694 = sld [smem:[#allocation4]]
        %s2695 = sld [smem:[#allocation4 + $0x1]]
        %s2696 = sld [smem:[#allocation4 + $0x2]]
        %s2697 = sld [smem:[#allocation4 + $0x3]]
        %s2698 = sld [smem:[#allocation4 + $0x80]]
        %s2699 = sld [smem:[#allocation4 + $0x81]]
        %s2700 = sld [smem:[#allocation4 + $0x82]]
        %s2701 = sld [smem:[#allocation4 + $0x83]]
        %s2702 = sld [smem:[#allocation4 + $0x100]]
        %s2703 = sld [smem:[#allocation4 + $0x101]]
        %s2704 = sld [smem:[#allocation4 + $0x102]]
        %s2705 = sld [smem:[#allocation4 + $0x103]]
        %s2706 = sld [smem:[#allocation4 + $0x180]]
        %s2707 = sld [smem:[#allocation4 + $0x181]]
        %s2708 = sld [smem:[#allocation4 + $0x182]]
        %s2709 = sld [smem:[#allocation4 + $0x183]]
        %s2710 = sld [smem:[#allocation7]]
        %s2711 = sld [smem:[#allocation7 + $0x1]]
        %s2712 = sld [smem:[#allocation7 + $0x2]]
        %s2713 = sld [smem:[#allocation7 + $0x3]]
        %v2714 = vstv %s2694
        %v2715 = vmul.f32 %v2714, %v1565
        %v2716 = vmul.f32 %v2714, %v1566
        %v2717 = vmul.f32 %v2714, %v1567
        %v2718 = vmul.f32 %v2714, %v1568
        %v2719 = vmul.f32 %v2714, %v1569
        %v2720 = vmul.f32 %v2714, %v1570
        %v2721 = vmul.f32 %v2714, %v1571
        %v2722 = vmul.f32 %v2714, %v1572
        %v2723 = vmul.f32 %v2714, %v1573
        %v2724 = vmul.f32 %v2714, %v1574
        %v2725 = vmul.f32 %v2714, %v1575
        %v2726 = vmul.f32 %v2714, %v1576
        %v2727 = vmul.f32 %v2714, %v1577
        %v2728 = vmul.f32 %v2714, %v1578
        %v2729 = vmul.f32 %v2714, %v1579
        %v2730 = vmul.f32 %v2714, %v1580
        %v2731 = vstv %s2695
        %v2732 = vmul.f32 %v2731, %v1936
        %v2733 = vmul.f32 %v2731, %v1937
        %v2734 = vmul.f32 %v2731, %v1938
        %v2735 = vmul.f32 %v2731, %v1939
        %v2736 = vmul.f32 %v2731, %v1940
        %v2737 = vmul.f32 %v2731, %v1941
        %v2738 = vmul.f32 %v2731, %v1942
        %v2739 = vmul.f32 %v2731, %v1943
        %v2740 = vmul.f32 %v2731, %v1944
        %v2741 = vmul.f32 %v2731, %v1945
        %v2742 = vmul.f32 %v2731, %v1946
        %v2743 = vmul.f32 %v2731, %v1947
        %v2744 = vmul.f32 %v2731, %v1948
        %v2745 = vmul.f32 %v2731, %v1949
        %v2746 = vmul.f32 %v2731, %v1950
        %v2747 = vmul.f32 %v2731, %v1951
        %v2748 = vadd.f32 %v2715, %v2732
        %v2749 = vadd.f32 %v2716, %v2733
        %v2750 = vadd.f32 %v2717, %v2734
        %v2751 = vadd.f32 %v2718, %v2735
        %v2752 = vadd.f32 %v2719, %v2736
        %v2753 = vadd.f32 %v2720, %v2737
        %v2754 = vadd.f32 %v2721, %v2738
        %v2755 = vadd.f32 %v2722, %v2739
        %v2756 = vadd.f32 %v2723, %v2740
        %v2757 = vadd.f32 %v2724, %v2741
        %v2758 = vadd.f32 %v2725, %v2742
        %v2759 = vadd.f32 %v2726, %v2743
        %v2760 = vadd.f32 %v2727, %v2744
        %v2761 = vadd.f32 %v2728, %v2745
        %v2762 = vadd.f32 %v2729, %v2746
        %v2763 = vadd.f32 %v2730, %v2747
        %v2764 = vstv %s2696
        %v2765 = vmul.f32 %v2764, %v2307
        %v2766 = vmul.f32 %v2764, %v2308
        %v2767 = vmul.f32 %v2764, %v2309
        %v2768 = vmul.f32 %v2764, %v2310
        %v2769 = vmul.f32 %v2764, %v2311
        %v2770 = vmul.f32 %v2764, %v2312
        %v2771 = vmul.f32 %v2764, %v2313
        %v2772 = vmul.f32 %v2764, %v2314
        %v2773 = vmul.f32 %v2764, %v2315
        %v2774 = vmul.f32 %v2764, %v2316
        %v2775 = vmul.f32 %v2764, %v2317
        %v2776 = vmul.f32 %v2764, %v2318
        %v2777 = vmul.f32 %v2764, %v2319
        %v2778 = vmul.f32 %v2764, %v2320
        %v2779 = vmul.f32 %v2764, %v2321
        %v2780 = vmul.f32 %v2764, %v2322
        %v2781 = vadd.f32 %v2748, %v2765
        %v2782 = vadd.f32 %v2749, %v2766
        %v2783 = vadd.f32 %v2750, %v2767
        %v2784 = vadd.f32 %v2751, %v2768
        %v2785 = vadd.f32 %v2752, %v2769
        %v2786 = vadd.f32 %v2753, %v2770
        %v2787 = vadd.f32 %v2754, %v2771
        %v2788 = vadd.f32 %v2755, %v2772
        %v2789 = vadd.f32 %v2756, %v2773
        %v2790 = vadd.f32 %v2757, %v2774
        %v2791 = vadd.f32 %v2758, %v2775
        %v2792 = vadd.f32 %v2759, %v2776
        %v2793 = vadd.f32 %v2760, %v2777
        %v2794 = vadd.f32 %v2761, %v2778
        %v2795 = vadd.f32 %v2762, %v2779
        %v2796 = vadd.f32 %v2763, %v2780
        %v2797 = vstv %s2697
        %v2798 = vmul.f32 %v2797, %v2678
        %v2799 = vmul.f32 %v2797, %v2679
        %v2800 = vmul.f32 %v2797, %v2680
        %v2801 = vmul.f32 %v2797, %v2681
        %v2802 = vmul.f32 %v2797, %v2682
        %v2803 = vmul.f32 %v2797, %v2683
        %v2804 = vmul.f32 %v2797, %v2684
        %v2805 = vmul.f32 %v2797, %v2685
        %v2806 = vmul.f32 %v2797, %v2686
        %v2807 = vmul.f32 %v2797, %v2687
        %v2808 = vmul.f32 %v2797, %v2688
        %v2809 = vmul.f32 %v2797, %v2689
        %v2810 = vmul.f32 %v2797, %v2690
        %v2811 = vmul.f32 %v2797, %v2691
        %v2812 = vmul.f32 %v2797, %v2692
        %v2813 = vmul.f32 %v2797, %v2693
        %v2814 = vadd.f32 %v2781, %v2798
        %v2815 = vadd.f32 %v2782, %v2799
        %v2816 = vadd.f32 %v2783, %v2800
        %v2817 = vadd.f32 %v2784, %v2801
        %v2818 = vadd.f32 %v2785, %v2802
        %v2819 = vadd.f32 %v2786, %v2803
        %v2820 = vadd.f32 %v2787, %v2804
        %v2821 = vadd.f32 %v2788, %v2805
        %v2822 = vadd.f32 %v2789, %v2806
        %v2823 = vadd.f32 %v2790, %v2807
        %v2824 = vadd.f32 %v2791, %v2808
        %v2825 = vadd.f32 %v2792, %v2809
        %v2826 = vadd.f32 %v2793, %v2810
        %v2827 = vadd.f32 %v2794, %v2811
        %v2828 = vadd.f32 %v2795, %v2812
        %v2829 = vadd.f32 %v2796, %v2813
        %v2830 = vstv %s2710
        %v2831 = vadd.f32 %v2814, %v2830
        %v2832 = vadd.f32 %v2815, %v2830
        %v2833 = vadd.f32 %v2816, %v2830
        %v2834 = vadd.f32 %v2817, %v2830
        %v2835 = vadd.f32 %v2818, %v2830
        %v2836 = vadd.f32 %v2819, %v2830
        %v2837 = vadd.f32 %v2820, %v2830
        %v2838 = vadd.f32 %v2821, %v2830
        %v2839 = vadd.f32 %v2822, %v2830
        %v2840 = vadd.f32 %v2823, %v2830
        %v2841 = vadd.f32 %v2824, %v2830
        %v2842 = vadd.f32 %v2825, %v2830
        %v2843 = vadd.f32 %v2826, %v2830
        %v2844 = vadd.f32 %v2827, %v2830
        %v2845 = vadd.f32 %v2828, %v2830
        %v2846 = vadd.f32 %v2829, %v2830
        %2847 = vst [vmem:[%s395] sm:$0xff] %v2831
        %2848 = vst [vmem:[%s395 + $0x8] sm:$0xff] %v2832
        %2849 = vst [vmem:[%s395 + $0x10] sm:$0xff] %v2833
        %2850 = vst [vmem:[%s395 + $0x18] sm:$0xff] %v2834
        %2851 = vst [vmem:[%s395 + $0x20] sm:$0xff] %v2835
        %2852 = vst [vmem:[%s395 + $0x28] sm:$0xff] %v2836
        %2853 = vst [vmem:[%s395 + $0x30] sm:$0xff] %v2837
        %2854 = vst [vmem:[%s395 + $0x38] sm:$0xff] %v2838
        %2855 = vst [vmem:[%s395 + $0x40] sm:$0xff] %v2839
        %2856 = vst [vmem:[%s395 + $0x48] sm:$0xff] %v2840
        %2857 = vst [vmem:[%s395 + $0x50] sm:$0xff] %v2841
        %2858 = vst [vmem:[%s395 + $0x58] sm:$0xff] %v2842
        %2859 = vst [vmem:[%s395 + $0x60] sm:$0xff] %v2843
        %2860 = vst [vmem:[%s395 + $0x68] sm:$0xff] %v2844
        %2861 = vst [vmem:[%s395 + $0x70] sm:$0xff] %v2845
        %2862 = vst [vmem:[%s395 + $0x78] sm:$0xff] %v2846
        %v2863 = vld [vmem:[#allocation3] sm:$0xff]
        %v2864 = vld [vmem:[#allocation3 + $0x8] sm:$0xff]
        %v2865 = vld [vmem:[#allocation3 + $0x10] sm:$0xff]
        %v2866 = vld [vmem:[#allocation3 + $0x18] sm:$0xff]
        %v2867 = vld [vmem:[#allocation3 + $0x20] sm:$0xff]
        %v2868 = vld [vmem:[#allocation3 + $0x28] sm:$0xff]
        %v2869 = vld [vmem:[#allocation3 + $0x30] sm:$0xff]
        %v2870 = vld [vmem:[#allocation3 + $0x38] sm:$0xff]
        %v2871 = vld [vmem:[#allocation3 + $0x40] sm:$0xff]
        %v2872 = vld [vmem:[#allocation3 + $0x48] sm:$0xff]
        %v2873 = vld [vmem:[#allocation3 + $0x50] sm:$0xff]
        %v2874 = vld [vmem:[#allocation3 + $0x58] sm:$0xff]
        %v2875 = vld [vmem:[#allocation3 + $0x60] sm:$0xff]
        %v2876 = vld [vmem:[#allocation3 + $0x68] sm:$0xff]
        %v2877 = vld [vmem:[#allocation3 + $0x70] sm:$0xff]
        %v2878 = vld [vmem:[#allocation3 + $0x78] sm:$0xff]
        %2879 = vmatprep.subr.mxu0 0.0
        %2880 = vmatpush1.msra.mxu0 %v2863
        %2881 = vmatprep.subr.mxu0 0.0
        %2882 = vmatpush1.msra.mxu0 %v2864
        %2883 = vmatprep.subr.mxu0 0.0
        %2884 = vmatpush1.msra.mxu0 %v2865
        %2885 = vmatprep.subr.mxu0 0.0
        %2886 = vmatpush1.msra.mxu0 %v2866
        %2887 = vmatprep.subr.mxu0 0.0
        %2888 = vmatpush1.msra.mxu0 %v2867
        %2889 = vmatprep.subr.mxu0 0.0
        %2890 = vmatpush1.msra.mxu0 %v2868
        %2891 = vmatprep.subr.mxu0 0.0
        %2892 = vmatpush1.msra.mxu0 %v2869
        %2893 = vmatprep.subr.mxu0 0.0
        %2894 = vmatpush1.msra.mxu0 %v2870
        %2895 = vmatprep.subr.mxu0 0.0
        %2896 = vmatpush1.msra.mxu0 %v2871
        %2897 = vmatprep.subr.mxu0 0.0
        %2898 = vmatpush1.msra.mxu0 %v2872
        %2899 = vmatprep.subr.mxu0 0.0
        %2900 = vmatpush1.msra.mxu0 %v2873
        %2901 = vmatprep.subr.mxu0 0.0
        %2902 = vmatpush1.msra.mxu0 %v2874
        %2903 = vmatprep.subr.mxu0 0.0
        %2904 = vmatpush1.msra.mxu0 %v2875
        %2905 = vmatprep.subr.mxu0 0.0
        %2906 = vmatpush1.msra.mxu0 %v2876
        %2907 = vmatprep.subr.mxu0 0.0
        %2908 = vmatpush1.msra.mxu0 %v2877
        %2909 = vmatprep.subr.mxu0 0.0
        %2910 = vmatpush1.msra.mxu0 %v2878
        %2911 = vmatprep.subr.mxu0 0.0
        %2912 = vmatpush1.msra.mxu0 0.0
        %2913 = vmatprep.subr.mxu0 0.0
        %2914 = vmatpush1.msra.mxu0 0.0
        %2915 = vmatprep.subr.mxu0 0.0
        %2916 = vmatpush1.msra.mxu0 0.0
        %2917 = vmatprep.subr.mxu0 0.0
        %2918 = vmatpush1.msra.mxu0 0.0
        %2919 = vmatprep.subr.mxu0 0.0
        %2920 = vmatpush1.msra.mxu0 0.0
        %2921 = vmatprep.subr.mxu0 0.0
        %2922 = vmatpush1.msra.mxu0 0.0
        %2923 = vmatprep.subr.mxu0 0.0
        %2924 = vmatpush1.msra.mxu0 0.0
        %2925 = vmatprep.subr.mxu0 0.0
        %2926 = vmatpush1.msra.mxu0 0.0
        %2927 = vmatprep.subr.mxu0 0.0
        %2928 = vmatpush1.msra.mxu0 0.0
        %2929 = vmatprep.subr.mxu0 0.0
        %2930 = vmatpush1.msra.mxu0 0.0
        %2931 = vmatprep.subr.mxu0 0.0
        %2932 = vmatpush1.msra.mxu0 0.0
        %2933 = vmatprep.subr.mxu0 0.0
        %2934 = vmatpush1.msra.mxu0 0.0
        %2935 = vmatprep.subr.mxu0 0.0
        %2936 = vmatpush1.msra.mxu0 0.0
        %2937 = vmatprep.subr.mxu0 0.0
        %2938 = vmatpush1.msra.mxu0 0.0
        %2939 = vmatprep.subr.mxu0 0.0
        %2940 = vmatpush1.msra.mxu0 0.0
        %2941 = vmatprep.subr.mxu0 0.0
        %2942 = vmatpush1.msra.mxu0 0.0
        %2943 = vmatprep.mubr.f32.mxu0 0.0
        %2944 = vmatmul.mubr.f32.gmra.mrb[0].mxu0 %v2831
        %v2945 = vpop.f32.mrb[0].mxu0
        %v2946 = vadd.f32 0.0, %v2945
        %v2947 = vpop.f32.mrb[0].mxu0
        %2948 = vmatprep.mubr.f32.mxu0 0.0
        %2949 = vmatmul.mubr.f32.gmra.mrb[0].mxu0 %v2832
        %v2950 = vpop.f32.mrb[0].mxu0
        %v2951 = vadd.f32 0.0, %v2950
        %v2952 = vpop.f32.mrb[0].mxu0
        %2953 = vmatprep.mubr.f32.mxu0 0.0
        %2954 = vmatmul.mubr.f32.gmra.mrb[0].mxu0 %v2833
        %v2955 = vpop.f32.mrb[0].mxu0
        %v2956 = vadd.f32 0.0, %v2955
        %v2957 = vpop.f32.mrb[0].mxu0
        %2958 = vmatprep.mubr.f32.mxu0 0.0
        %2959 = vmatmul.mubr.f32.gmra.mrb[0].mxu0 %v2834
        %v2960 = vpop.f32.mrb[0].mxu0
        %v2961 = vadd.f32 0.0, %v2960
        %v2962 = vpop.f32.mrb[0].mxu0
        %2963 = vmatprep.mubr.f32.mxu0 0.0
        %2964 = vmatmul.mubr.f32.gmra.mrb[0].mxu0 %v2835
        %v2965 = vpop.f32.mrb[0].mxu0
        %v2966 = vadd.f32 0.0, %v2965
        %v2967 = vpop.f32.mrb[0].mxu0
        %2968 = vmatprep.mubr.f32.mxu0 0.0
        %2969 = vmatmul.mubr.f32.gmra.mrb[0].mxu0 %v2836
        %v2970 = vpop.f32.mrb[0].mxu0
        %v2971 = vadd.f32 0.0, %v2970
        %v2972 = vpop.f32.mrb[0].mxu0
        %2973 = vmatprep.mubr.f32.mxu0 0.0
        %2974 = vmatmul.mubr.f32.gmra.mrb[0].mxu0 %v2837
        %v2975 = vpop.f32.mrb[0].mxu0
        %v2976 = vadd.f32 0.0, %v2975
        %v2977 = vpop.f32.mrb[0].mxu0
        %2978 = vmatprep.mubr.f32.mxu0 0.0
        %2979 = vmatmul.mubr.f32.gmra.mrb[0].mxu0 %v2838
        %v2980 = vpop.f32.mrb[0].mxu0
        %v2981 = vadd.f32 0.0, %v2980
        %v2982 = vpop.f32.mrb[0].mxu0
        %2983 = vmatprep.mubr.f32.mxu0 0.0
        %2984 = vmatmul.mubr.f32.gmra.mrb[0].mxu0 %v2839
        %v2985 = vpop.f32.mrb[0].mxu0
        %v2986 = vadd.f32 0.0, %v2985
        %v2987 = vpop.f32.mrb[0].mxu0
        %2988 = vmatprep.mubr.f32.mxu0 0.0
        %2989 = vmatmul.mubr.f32.gmra.mrb[0].mxu0 %v2840
        %v2990 = vpop.f32.mrb[0].mxu0
        %v2991 = vadd.f32 0.0, %v2990
        %v2992 = vpop.f32.mrb[0].mxu0
        %2993 = vmatprep.mubr.f32.mxu0 0.0
        %2994 = vmatmul.mubr.f32.gmra.mrb[0].mxu0 %v2841
        %v2995 = vpop.f32.mrb[0].mxu0
        %v2996 = vadd.f32 0.0, %v2995
        %v2997 = vpop.f32.mrb[0].mxu0
        %2998 = vmatprep.mubr.f32.mxu0 0.0
        %2999 = vmatmul.mubr.f32.gmra.mrb[0].mxu0 %v2842
        %v3000 = vpop.f32.mrb[0].mxu0
        %v3001 = vadd.f32 0.0, %v3000
        %v3002 = vpop.f32.mrb[0].mxu0
        %3003 = vmatprep.mubr.f32.mxu0 0.0
        %3004 = vmatmul.mubr.f32.gmra.mrb[0].mxu0 %v2843
        %v3005 = vpop.f32.mrb[0].mxu0
        %v3006 = vadd.f32 0.0, %v3005
        %v3007 = vpop.f32.mrb[0].mxu0
        %3008 = vmatprep.mubr.f32.mxu0 0.0
        %3009 = vmatmul.mubr.f32.gmra.mrb[0].mxu0 %v2844
        %v3010 = vpop.f32.mrb[0].mxu0
        %v3011 = vadd.f32 0.0, %v3010
        %v3012 = vpop.f32.mrb[0].mxu0
        %3013 = vmatprep.mubr.f32.mxu0 0.0
        %3014 = vmatmul.mubr.f32.gmra.mrb[0].mxu0 %v2845
        %v3015 = vpop.f32.mrb[0].mxu0
        %v3016 = vadd.f32 0.0, %v3015
        %v3017 = vpop.f32.mrb[0].mxu0
        %3018 = vmatprep.mubr.f32.mxu0 0.0
        %3019 = vmatmul.mubr.f32.gmra.mrb[0].mxu0 %v2846
        %v3020 = vpop.f32.mrb[0].mxu0
        %v3021 = vadd.f32 0.0, %v3020
        %v3022 = vpop.f32.mrb[0].mxu0
        %3023 = vdwg.mxu0
        %v3024 = vstv %s2698
        %v3025 = vmul.f32 %v3024, %v1565
        %v3026 = vmul.f32 %v3024, %v1566
        %v3027 = vmul.f32 %v3024, %v1567
        %v3028 = vmul.f32 %v3024, %v1568
        %v3029 = vmul.f32 %v3024, %v1569
        %v3030 = vmul.f32 %v3024, %v1570
        %v3031 = vmul.f32 %v3024, %v1571
        %v3032 = vmul.f32 %v3024, %v1572
        %v3033 = vmul.f32 %v3024, %v1573
        %v3034 = vmul.f32 %v3024, %v1574
        %v3035 = vmul.f32 %v3024, %v1575
        %v3036 = vmul.f32 %v3024, %v1576
        %v3037 = vmul.f32 %v3024, %v1577
        %v3038 = vmul.f32 %v3024, %v1578
        %v3039 = vmul.f32 %v3024, %v1579
        %v3040 = vmul.f32 %v3024, %v1580
        %v3041 = vstv %s2699
        %v3042 = vmul.f32 %v3041, %v1936
        %v3043 = vmul.f32 %v3041, %v1937
        %v3044 = vmul.f32 %v3041, %v1938
        %v3045 = vmul.f32 %v3041, %v1939
        %v3046 = vmul.f32 %v3041, %v1940
        %v3047 = vmul.f32 %v3041, %v1941
        %v3048 = vmul.f32 %v3041, %v1942
        %v3049 = vmul.f32 %v3041, %v1943
        %v3050 = vmul.f32 %v3041, %v1944
        %v3051 = vmul.f32 %v3041, %v1945
        %v3052 = vmul.f32 %v3041, %v1946
        %v3053 = vmul.f32 %v3041, %v1947
        %v3054 = vmul.f32 %v3041, %v1948
        %v3055 = vmul.f32 %v3041, %v1949
        %v3056 = vmul.f32 %v3041, %v1950
        %v3057 = vmul.f32 %v3041, %v1951
        %v3058 = vadd.f32 %v3025, %v3042
        %v3059 = vadd.f32 %v3026, %v3043
        %v3060 = vadd.f32 %v3027, %v3044
        %v3061 = vadd.f32 %v3028, %v3045
        %v3062 = vadd.f32 %v3029, %v3046
        %v3063 = vadd.f32 %v3030, %v3047
        %v3064 = vadd.f32 %v3031, %v3048
        %v3065 = vadd.f32 %v3032, %v3049
        %v3066 = vadd.f32 %v3033, %v3050
        %v3067 = vadd.f32 %v3034, %v3051
        %v3068 = vadd.f32 %v3035, %v3052
        %v3069 = vadd.f32 %v3036, %v3053
        %v3070 = vadd.f32 %v3037, %v3054
        %v3071 = vadd.f32 %v3038, %v3055
        %v3072 = vadd.f32 %v3039, %v3056
        %v3073 = vadd.f32 %v3040, %v3057
        %v3074 = vstv %s2700
        %v3075 = vmul.f32 %v3074, %v2307
        %v3076 = vmul.f32 %v3074, %v2308
        %v3077 = vmul.f32 %v3074, %v2309
        %v3078 = vmul.f32 %v3074, %v2310
        %v3079 = vmul.f32 %v3074, %v2311
        %v3080 = vmul.f32 %v3074, %v2312
        %v3081 = vmul.f32 %v3074, %v2313
        %v3082 = vmul.f32 %v3074, %v2314
        %v3083 = vmul.f32 %v3074, %v2315
        %v3084 = vmul.f32 %v3074, %v2316
        %v3085 = vmul.f32 %v3074, %v2317
        %v3086 = vmul.f32 %v3074, %v2318
        %v3087 = vmul.f32 %v3074, %v2319
        %v3088 = vmul.f32 %v3074, %v2320
        %v3089 = vmul.f32 %v3074, %v2321
        %v3090 = vmul.f32 %v3074, %v2322
        %v3091 = vadd.f32 %v3058, %v3075
        %v3092 = vadd.f32 %v3059, %v3076
        %v3093 = vadd.f32 %v3060, %v3077
        %v3094 = vadd.f32 %v3061, %v3078
        %v3095 = vadd.f32 %v3062, %v3079
        %v3096 = vadd.f32 %v3063, %v3080
        %v3097 = vadd.f32 %v3064, %v3081
        %v3098 = vadd.f32 %v3065, %v3082
        %v3099 = vadd.f32 %v3066, %v3083
        %v3100 = vadd.f32 %v3067, %v3084
        %v3101 = vadd.f32 %v3068, %v3085
        %v3102 = vadd.f32 %v3069, %v3086
        %v3103 = vadd.f32 %v3070, %v3087
        %v3104 = vadd.f32 %v3071, %v3088
        %v3105 = vadd.f32 %v3072, %v3089
        %v3106 = vadd.f32 %v3073, %v3090
        %v3107 = vstv %s2701
        %v3108 = vmul.f32 %v3107, %v2678
        %v3109 = vmul.f32 %v3107, %v2679
        %v3110 = vmul.f32 %v3107, %v2680
        %v3111 = vmul.f32 %v3107, %v2681
        %v3112 = vmul.f32 %v3107, %v2682
        %v3113 = vmul.f32 %v3107, %v2683
        %v3114 = vmul.f32 %v3107, %v2684
        %v3115 = vmul.f32 %v3107, %v2685
        %v3116 = vmul.f32 %v3107, %v2686
        %v3117 = vmul.f32 %v3107, %v2687
        %v3118 = vmul.f32 %v3107, %v2688
        %v3119 = vmul.f32 %v3107, %v2689
        %v3120 = vmul.f32 %v3107, %v2690
        %v3121 = vmul.f32 %v3107, %v2691
        %v3122 = vmul.f32 %v3107, %v2692
        %v3123 = vmul.f32 %v3107, %v2693
        %v3124 = vadd.f32 %v3091, %v3108
        %v3125 = vadd.f32 %v3092, %v3109
        %v3126 = vadd.f32 %v3093, %v3110
        %v3127 = vadd.f32 %v3094, %v3111
        %v3128 = vadd.f32 %v3095, %v3112
        %v3129 = vadd.f32 %v3096, %v3113
        %v3130 = vadd.f32 %v3097, %v3114
        %v3131 = vadd.f32 %v3098, %v3115
        %v3132 = vadd.f32 %v3099, %v3116
        %v3133 = vadd.f32 %v3100, %v3117
        %v3134 = vadd.f32 %v3101, %v3118
        %v3135 = vadd.f32 %v3102, %v3119
        %v3136 = vadd.f32 %v3103, %v3120
        %v3137 = vadd.f32 %v3104, %v3121
        %v3138 = vadd.f32 %v3105, %v3122
        %v3139 = vadd.f32 %v3106, %v3123
        %v3140 = vstv %s2711
        %v3141 = vadd.f32 %v3124, %v3140
        %v3142 = vadd.f32 %v3125, %v3140
        %v3143 = vadd.f32 %v3126, %v3140
        %v3144 = vadd.f32 %v3127, %v3140
        %v3145 = vadd.f32 %v3128, %v3140
        %v3146 = vadd.f32 %v3129, %v3140
        %v3147 = vadd.f32 %v3130, %v3140
        %v3148 = vadd.f32 %v3131, %v3140
        %v3149 = vadd.f32 %v3132, %v3140
        %v3150 = vadd.f32 %v3133, %v3140
        %v3151 = vadd.f32 %v3134, %v3140
        %v3152 = vadd.f32 %v3135, %v3140
        %v3153 = vadd.f32 %v3136, %v3140
        %v3154 = vadd.f32 %v3137, %v3140
        %v3155 = vadd.f32 %v3138, %v3140
        %v3156 = vadd.f32 %v3139, %v3140
        %s3157 = scalar_lea.vmem %s395, 128 [#allocation9]
        %3158 = vst [vmem:[%s3157] sm:$0xff] %v3141
        %3159 = vst [vmem:[%s3157 + $0x8] sm:$0xff] %v3142
        %3160 = vst [vmem:[%s3157 + $0x10] sm:$0xff] %v3143
        %3161 = vst [vmem:[%s3157 + $0x18] sm:$0xff] %v3144
        %3162 = vst [vmem:[%s3157 + $0x20] sm:$0xff] %v3145
        %3163 = vst [vmem:[%s3157 + $0x28] sm:$0xff] %v3146
        %3164 = vst [vmem:[%s3157 + $0x30] sm:$0xff] %v3147
        %3165 = vst [vmem:[%s3157 + $0x38] sm:$0xff] %v3148
        %3166 = vst [vmem:[%s3157 + $0x40] sm:$0xff] %v3149
        %3167 = vst [vmem:[%s3157 + $0x48] sm:$0xff] %v3150
        %3168 = vst [vmem:[%s3157 + $0x50] sm:$0xff] %v3151
        %3169 = vst [vmem:[%s3157 + $0x58] sm:$0xff] %v3152
        %3170 = vst [vmem:[%s3157 + $0x60] sm:$0xff] %v3153
        %3171 = vst [vmem:[%s3157 + $0x68] sm:$0xff] %v3154
        %3172 = vst [vmem:[%s3157 + $0x70] sm:$0xff] %v3155
        %3173 = vst [vmem:[%s3157 + $0x78] sm:$0xff] %v3156
        %s3174 = scalar_lea.vmem [#allocation3], 128
        %v3175 = vld [vmem:[%s3174] sm:$0xff]
        %v3176 = vld [vmem:[%s3174 + $0x8] sm:$0xff]
        %v3177 = vld [vmem:[%s3174 + $0x10] sm:$0xff]
        %v3178 = vld [vmem:[%s3174 + $0x18] sm:$0xff]
        %v3179 = vld [vmem:[%s3174 + $0x20] sm:$0xff]
        %v3180 = vld [vmem:[%s3174 + $0x28] sm:$0xff]
        %v3181 = vld [vmem:[%s3174 + $0x30] sm:$0xff]
        %v3182 = vld [vmem:[%s3174 + $0x38] sm:$0xff]
        %v3183 = vld [vmem:[%s3174 + $0x40] sm:$0xff]
        %v3184 = vld [vmem:[%s3174 + $0x48] sm:$0xff]
        %v3185 = vld [vmem:[%s3174 + $0x50] sm:$0xff]
        %v3186 = vld [vmem:[%s3174 + $0x58] sm:$0xff]
        %v3187 = vld [vmem:[%s3174 + $0x60] sm:$0xff]
        %v3188 = vld [vmem:[%s3174 + $0x68] sm:$0xff]
        %v3189 = vld [vmem:[%s3174 + $0x70] sm:$0xff]
        %v3190 = vld [vmem:[%s3174 + $0x78] sm:$0xff]
        %3191 = vmatprep.subr.mxu0 0.0
        %3192 = vmatpush1.msra.mxu0 %v3175
        %3193 = vmatprep.subr.mxu0 0.0
        %3194 = vmatpush1.msra.mxu0 %v3176
        %3195 = vmatprep.subr.mxu0 0.0
        %3196 = vmatpush1.msra.mxu0 %v3177
        %3197 = vmatprep.subr.mxu0 0.0
        %3198 = vmatpush1.msra.mxu0 %v3178
        %3199 = vmatprep.subr.mxu0 0.0
        %3200 = vmatpush1.msra.mxu0 %v3179
        %3201 = vmatprep.subr.mxu0 0.0
        %3202 = vmatpush1.msra.mxu0 %v3180
        %3203 = vmatprep.subr.mxu0 0.0
        %3204 = vmatpush1.msra.mxu0 %v3181
        %3205 = vmatprep.subr.mxu0 0.0
        %3206 = vmatpush1.msra.mxu0 %v3182
        %3207 = vmatprep.subr.mxu0 0.0
        %3208 = vmatpush1.msra.mxu0 %v3183
        %3209 = vmatprep.subr.mxu0 0.0
        %3210 = vmatpush1.msra.mxu0 %v3184
        %3211 = vmatprep.subr.mxu0 0.0
        %3212 = vmatpush1.msra.mxu0 %v3185
        %3213 = vmatprep.subr.mxu0 0.0
        %3214 = vmatpush1.msra.mxu0 %v3186
        %3215 = vmatprep.subr.mxu0 0.0
        %3216 = vmatpush1.msra.mxu0 %v3187
        %3217 = vmatprep.subr.mxu0 0.0
        %3218 = vmatpush1.msra.mxu0 %v3188
        %3219 = vmatprep.subr.mxu0 0.0
        %3220 = vmatpush1.msra.mxu0 %v3189
        %3221 = vmatprep.subr.mxu0 0.0
        %3222 = vmatpush1.msra.mxu0 %v3190
        %3223 = vmatprep.subr.mxu0 0.0
        %3224 = vmatpush1.msra.mxu0 0.0
        %3225 = vmatprep.subr.mxu0 0.0
        %3226 = vmatpush1.msra.mxu0 0.0
        %3227 = vmatprep.subr.mxu0 0.0
        %3228 = vmatpush1.msra.mxu0 0.0
        %3229 = vmatprep.subr.mxu0 0.0
        %3230 = vmatpush1.msra.mxu0 0.0
        %3231 = vmatprep.subr.mxu0 0.0
        %3232 = vmatpush1.msra.mxu0 0.0
        %3233 = vmatprep.subr.mxu0 0.0
        %3234 = vmatpush1.msra.mxu0 0.0
        %3235 = vmatprep.subr.mxu0 0.0
        %3236 = vmatpush1.msra.mxu0 0.0
        %3237 = vmatprep.subr.mxu0 0.0
        %3238 = vmatpush1.msra.mxu0 0.0
        %3239 = vmatprep.subr.mxu0 0.0
        %3240 = vmatpush1.msra.mxu0 0.0
        %3241 = vmatprep.subr.mxu0 0.0
        %3242 = vmatpush1.msra.mxu0 0.0
        %3243 = vmatprep.subr.mxu0 0.0
        %3244 = vmatpush1.msra.mxu0 0.0
        %3245 = vmatprep.subr.mxu0 0.0
        %3246 = vmatpush1.msra.mxu0 0.0
        %3247 = vmatprep.subr.mxu0 0.0
        %3248 = vmatpush1.msra.mxu0 0.0
        %3249 = vmatprep.subr.mxu0 0.0
        %3250 = vmatpush1.msra.mxu0 0.0
        %3251 = vmatprep.subr.mxu0 0.0
        %3252 = vmatpush1.msra.mxu0 0.0
        %3253 = vmatprep.subr.mxu0 0.0
        %3254 = vmatpush1.msra.mxu0 0.0
        %3255 = vmatprep.mubr.f32.mxu0 0.0
        %3256 = vmatmul.mubr.f32.gmra.mrb[0].mxu0 %v3141
        %v3257 = vpop.f32.mrb[0].mxu0
        %v3258 = vadd.f32 0.0, %v3257
        %v3259 = vpop.f32.mrb[0].mxu0
        %3260 = vmatprep.mubr.f32.mxu0 0.0
        %3261 = vmatmul.mubr.f32.gmra.mrb[0].mxu0 %v3142
        %v3262 = vpop.f32.mrb[0].mxu0
        %v3263 = vadd.f32 0.0, %v3262
        %v3264 = vpop.f32.mrb[0].mxu0
        %3265 = vmatprep.mubr.f32.mxu0 0.0
        %3266 = vmatmul.mubr.f32.gmra.mrb[0].mxu0 %v3143
        %v3267 = vpop.f32.mrb[0].mxu0
        %v3268 = vadd.f32 0.0, %v3267
        %v3269 = vpop.f32.mrb[0].mxu0
        %3270 = vmatprep.mubr.f32.mxu0 0.0
        %3271 = vmatmul.mubr.f32.gmra.mrb[0].mxu0 %v3144
        %v3272 = vpop.f32.mrb[0].mxu0
        %v3273 = vadd.f32 0.0, %v3272
        %v3274 = vpop.f32.mrb[0].mxu0
        %3275 = vmatprep.mubr.f32.mxu0 0.0
        %3276 = vmatmul.mubr.f32.gmra.mrb[0].mxu0 %v3145
        %v3277 = vpop.f32.mrb[0].mxu0
        %v3278 = vadd.f32 0.0, %v3277
        %v3279 = vpop.f32.mrb[0].mxu0
        %3280 = vmatprep.mubr.f32.mxu0 0.0
        %3281 = vmatmul.mubr.f32.gmra.mrb[0].mxu0 %v3146
        %v3282 = vpop.f32.mrb[0].mxu0
        %v3283 = vadd.f32 0.0, %v3282
        %v3284 = vpop.f32.mrb[0].mxu0
        %3285 = vmatprep.mubr.f32.mxu0 0.0
        %3286 = vmatmul.mubr.f32.gmra.mrb[0].mxu0 %v3147
        %v3287 = vpop.f32.mrb[0].mxu0
        %v3288 = vadd.f32 0.0, %v3287
        %v3289 = vpop.f32.mrb[0].mxu0
        %3290 = vmatprep.mubr.f32.mxu0 0.0
        %3291 = vmatmul.mubr.f32.gmra.mrb[0].mxu0 %v3148
        %v3292 = vpop.f32.mrb[0].mxu0
        %v3293 = vadd.f32 0.0, %v3292
        %v3294 = vpop.f32.mrb[0].mxu0
        %3295 = vmatprep.mubr.f32.mxu0 0.0
        %3296 = vmatmul.mubr.f32.gmra.mrb[0].mxu0 %v3149
        %v3297 = vpop.f32.mrb[0].mxu0
        %v3298 = vadd.f32 0.0, %v3297
        %v3299 = vpop.f32.mrb[0].mxu0
        %3300 = vmatprep.mubr.f32.mxu0 0.0
        %3301 = vmatmul.mubr.f32.gmra.mrb[0].mxu0 %v3150
        %v3302 = vpop.f32.mrb[0].mxu0
        %v3303 = vadd.f32 0.0, %v3302
        %v3304 = vpop.f32.mrb[0].mxu0
        %3305 = vmatprep.mubr.f32.mxu0 0.0
        %3306 = vmatmul.mubr.f32.gmra.mrb[0].mxu0 %v3151
        %v3307 = vpop.f32.mrb[0].mxu0
        %v3308 = vadd.f32 0.0, %v3307
        %v3309 = vpop.f32.mrb[0].mxu0
        %3310 = vmatprep.mubr.f32.mxu0 0.0
        %3311 = vmatmul.mubr.f32.gmra.mrb[0].mxu0 %v3152
        %v3312 = vpop.f32.mrb[0].mxu0
        %v3313 = vadd.f32 0.0, %v3312
        %v3314 = vpop.f32.mrb[0].mxu0
        %3315 = vmatprep.mubr.f32.mxu0 0.0
        %3316 = vmatmul.mubr.f32.gmra.mrb[0].mxu0 %v3153
        %v3317 = vpop.f32.mrb[0].mxu0
        %v3318 = vadd.f32 0.0, %v3317
        %v3319 = vpop.f32.mrb[0].mxu0
        %3320 = vmatprep.mubr.f32.mxu0 0.0
        %3321 = vmatmul.mubr.f32.gmra.mrb[0].mxu0 %v3154
        %v3322 = vpop.f32.mrb[0].mxu0
        %v3323 = vadd.f32 0.0, %v3322
        %v3324 = vpop.f32.mrb[0].mxu0
        %3325 = vmatprep.mubr.f32.mxu0 0.0
        %3326 = vmatmul.mubr.f32.gmra.mrb[0].mxu0 %v3155
        %v3327 = vpop.f32.mrb[0].mxu0
        %v3328 = vadd.f32 0.0, %v3327
        %v3329 = vpop.f32.mrb[0].mxu0
        %3330 = vmatprep.mubr.f32.mxu0 0.0
        %3331 = vmatmul.mubr.f32.gmra.mrb[0].mxu0 %v3156
        %v3332 = vpop.f32.mrb[0].mxu0
        %v3333 = vadd.f32 0.0, %v3332
        %v3334 = vpop.f32.mrb[0].mxu0
        %3335 = vdwg.mxu0
        %v3336 = vstv %s2702
        %v3337 = vmul.f32 %v3336, %v1565
        %v3338 = vmul.f32 %v3336, %v1566
        %v3339 = vmul.f32 %v3336, %v1567
        %v3340 = vmul.f32 %v3336, %v1568
        %v3341 = vmul.f32 %v3336, %v1569
        %v3342 = vmul.f32 %v3336, %v1570
        %v3343 = vmul.f32 %v3336, %v1571
        %v3344 = vmul.f32 %v3336, %v1572
        %v3345 = vmul.f32 %v3336, %v1573
        %v3346 = vmul.f32 %v3336, %v1574
        %v3347 = vmul.f32 %v3336, %v1575
        %v3348 = vmul.f32 %v3336, %v1576
        %v3349 = vmul.f32 %v3336, %v1577
        %v3350 = vmul.f32 %v3336, %v1578
        %v3351 = vmul.f32 %v3336, %v1579
        %v3352 = vmul.f32 %v3336, %v1580
        %v3353 = vstv %s2703
        %v3354 = vmul.f32 %v3353, %v1936
        %v3355 = vmul.f32 %v3353, %v1937
        %v3356 = vmul.f32 %v3353, %v1938
        %v3357 = vmul.f32 %v3353, %v1939
        %v3358 = vmul.f32 %v3353, %v1940
        %v3359 = vmul.f32 %v3353, %v1941
        %v3360 = vmul.f32 %v3353, %v1942
        %v3361 = vmul.f32 %v3353, %v1943
        %v3362 = vmul.f32 %v3353, %v1944
        %v3363 = vmul.f32 %v3353, %v1945
        %v3364 = vmul.f32 %v3353, %v1946
        %v3365 = vmul.f32 %v3353, %v1947
        %v3366 = vmul.f32 %v3353, %v1948
        %v3367 = vmul.f32 %v3353, %v1949
        %v3368 = vmul.f32 %v3353, %v1950
        %v3369 = vmul.f32 %v3353, %v1951
        %v3370 = vadd.f32 %v3337, %v3354
        %v3371 = vadd.f32 %v3338, %v3355
        %v3372 = vadd.f32 %v3339, %v3356
        %v3373 = vadd.f32 %v3340, %v3357
        %v3374 = vadd.f32 %v3341, %v3358
        %v3375 = vadd.f32 %v3342, %v3359
        %v3376 = vadd.f32 %v3343, %v3360
        %v3377 = vadd.f32 %v3344, %v3361
        %v3378 = vadd.f32 %v3345, %v3362
        %v3379 = vadd.f32 %v3346, %v3363
        %v3380 = vadd.f32 %v3347, %v3364
        %v3381 = vadd.f32 %v3348, %v3365
        %v3382 = vadd.f32 %v3349, %v3366
        %v3383 = vadd.f32 %v3350, %v3367
        %v3384 = vadd.f32 %v3351, %v3368
        %v3385 = vadd.f32 %v3352, %v3369
        %v3386 = vstv %s2704
        %v3387 = vmul.f32 %v3386, %v2307
        %v3388 = vmul.f32 %v3386, %v2308
        %v3389 = vmul.f32 %v3386, %v2309
        %v3390 = vmul.f32 %v3386, %v2310
        %v3391 = vmul.f32 %v3386, %v2311
        %v3392 = vmul.f32 %v3386, %v2312
        %v3393 = vmul.f32 %v3386, %v2313
        %v3394 = vmul.f32 %v3386, %v2314
        %v3395 = vmul.f32 %v3386, %v2315
        %v3396 = vmul.f32 %v3386, %v2316
        %v3397 = vmul.f32 %v3386, %v2317
        %v3398 = vmul.f32 %v3386, %v2318
        %v3399 = vmul.f32 %v3386, %v2319
        %v3400 = vmul.f32 %v3386, %v2320
        %v3401 = vmul.f32 %v3386, %v2321
        %v3402 = vmul.f32 %v3386, %v2322
        %v3403 = vadd.f32 %v3370, %v3387
        %v3404 = vadd.f32 %v3371, %v3388
        %v3405 = vadd.f32 %v3372, %v3389
        %v3406 = vadd.f32 %v3373, %v3390
        %v3407 = vadd.f32 %v3374, %v3391
        %v3408 = vadd.f32 %v3375, %v3392
        %v3409 = vadd.f32 %v3376, %v3393
        %v3410 = vadd.f32 %v3377, %v3394
        %v3411 = vadd.f32 %v3378, %v3395
        %v3412 = vadd.f32 %v3379, %v3396
        %v3413 = vadd.f32 %v3380, %v3397
        %v3414 = vadd.f32 %v3381, %v3398
        %v3415 = vadd.f32 %v3382, %v3399
        %v3416 = vadd.f32 %v3383, %v3400
        %v3417 = vadd.f32 %v3384, %v3401
        %v3418 = vadd.f32 %v3385, %v3402
        %v3419 = vstv %s2705
        %v3420 = vmul.f32 %v3419, %v2678
        %v3421 = vmul.f32 %v3419, %v2679
        %v3422 = vmul.f32 %v3419, %v2680
        %v3423 = vmul.f32 %v3419, %v2681
        %v3424 = vmul.f32 %v3419, %v2682
        %v3425 = vmul.f32 %v3419, %v2683
        %v3426 = vmul.f32 %v3419, %v2684
        %v3427 = vmul.f32 %v3419, %v2685
        %v3428 = vmul.f32 %v3419, %v2686
        %v3429 = vmul.f32 %v3419, %v2687
        %v3430 = vmul.f32 %v3419, %v2688
        %v3431 = vmul.f32 %v3419, %v2689
        %v3432 = vmul.f32 %v3419, %v2690
        %v3433 = vmul.f32 %v3419, %v2691
        %v3434 = vmul.f32 %v3419, %v2692
        %v3435 = vmul.f32 %v3419, %v2693
        %v3436 = vadd.f32 %v3403, %v3420
        %v3437 = vadd.f32 %v3404, %v3421
        %v3438 = vadd.f32 %v3405, %v3422
        %v3439 = vadd.f32 %v3406, %v3423
        %v3440 = vadd.f32 %v3407, %v3424
        %v3441 = vadd.f32 %v3408, %v3425
        %v3442 = vadd.f32 %v3409, %v3426
        %v3443 = vadd.f32 %v3410, %v3427
        %v3444 = vadd.f32 %v3411, %v3428
        %v3445 = vadd.f32 %v3412, %v3429
        %v3446 = vadd.f32 %v3413, %v3430
        %v3447 = vadd.f32 %v3414, %v3431
        %v3448 = vadd.f32 %v3415, %v3432
        %v3449 = vadd.f32 %v3416, %v3433
        %v3450 = vadd.f32 %v3417, %v3434
        %v3451 = vadd.f32 %v3418, %v3435
        %v3452 = vstv %s2712
        %v3453 = vadd.f32 %v3436, %v3452
        %v3454 = vadd.f32 %v3437, %v3452
        %v3455 = vadd.f32 %v3438, %v3452
        %v3456 = vadd.f32 %v3439, %v3452
        %v3457 = vadd.f32 %v3440, %v3452
        %v3458 = vadd.f32 %v3441, %v3452
        %v3459 = vadd.f32 %v3442, %v3452
        %v3460 = vadd.f32 %v3443, %v3452
        %v3461 = vadd.f32 %v3444, %v3452
        %v3462 = vadd.f32 %v3445, %v3452
        %v3463 = vadd.f32 %v3446, %v3452
        %v3464 = vadd.f32 %v3447, %v3452
        %v3465 = vadd.f32 %v3448, %v3452
        %v3466 = vadd.f32 %v3449, %v3452
        %v3467 = vadd.f32 %v3450, %v3452
        %v3468 = vadd.f32 %v3451, %v3452
        %s3469 = scalar_lea.vmem %s395, 256 [#allocation9]
        %3470 = vst [vmem:[%s3469] sm:$0xff] %v3453
        %3471 = vst [vmem:[%s3469 + $0x8] sm:$0xff] %v3454
        %3472 = vst [vmem:[%s3469 + $0x10] sm:$0xff] %v3455
        %3473 = vst [vmem:[%s3469 + $0x18] sm:$0xff] %v3456
        %3474 = vst [vmem:[%s3469 + $0x20] sm:$0xff] %v3457
        %3475 = vst [vmem:[%s3469 + $0x28] sm:$0xff] %v3458
        %3476 = vst [vmem:[%s3469 + $0x30] sm:$0xff] %v3459
        %3477 = vst [vmem:[%s3469 + $0x38] sm:$0xff] %v3460
        %3478 = vst [vmem:[%s3469 + $0x40] sm:$0xff] %v3461
        %3479 = vst [vmem:[%s3469 + $0x48] sm:$0xff] %v3462
        %3480 = vst [vmem:[%s3469 + $0x50] sm:$0xff] %v3463
        %3481 = vst [vmem:[%s3469 + $0x58] sm:$0xff] %v3464
        %3482 = vst [vmem:[%s3469 + $0x60] sm:$0xff] %v3465
        %3483 = vst [vmem:[%s3469 + $0x68] sm:$0xff] %v3466
        %3484 = vst [vmem:[%s3469 + $0x70] sm:$0xff] %v3467
        %3485 = vst [vmem:[%s3469 + $0x78] sm:$0xff] %v3468
        %s3486 = scalar_lea.vmem [#allocation3], 256
        %v3487 = vld [vmem:[%s3486] sm:$0xff]
        %v3488 = vld [vmem:[%s3486 + $0x8] sm:$0xff]
        %v3489 = vld [vmem:[%s3486 + $0x10] sm:$0xff]
        %v3490 = vld [vmem:[%s3486 + $0x18] sm:$0xff]
        %v3491 = vld [vmem:[%s3486 + $0x20] sm:$0xff]
        %v3492 = vld [vmem:[%s3486 + $0x28] sm:$0xff]
        %v3493 = vld [vmem:[%s3486 + $0x30] sm:$0xff]
        %v3494 = vld [vmem:[%s3486 + $0x38] sm:$0xff]
        %v3495 = vld [vmem:[%s3486 + $0x40] sm:$0xff]
        %v3496 = vld [vmem:[%s3486 + $0x48] sm:$0xff]
        %v3497 = vld [vmem:[%s3486 + $0x50] sm:$0xff]
        %v3498 = vld [vmem:[%s3486 + $0x58] sm:$0xff]
        %v3499 = vld [vmem:[%s3486 + $0x60] sm:$0xff]
        %v3500 = vld [vmem:[%s3486 + $0x68] sm:$0xff]
        %v3501 = vld [vmem:[%s3486 + $0x70] sm:$0xff]
        %v3502 = vld [vmem:[%s3486 + $0x78] sm:$0xff]
        %3503 = vmatprep.subr.mxu0 0.0
        %3504 = vmatpush1.msra.mxu0 %v3487
        %3505 = vmatprep.subr.mxu0 0.0
        %3506 = vmatpush1.msra.mxu0 %v3488
        %3507 = vmatprep.subr.mxu0 0.0
        %3508 = vmatpush1.msra.mxu0 %v3489
        %3509 = vmatprep.subr.mxu0 0.0
        %3510 = vmatpush1.msra.mxu0 %v3490
        %3511 = vmatprep.subr.mxu0 0.0
        %3512 = vmatpush1.msra.mxu0 %v3491
        %3513 = vmatprep.subr.mxu0 0.0
        %3514 = vmatpush1.msra.mxu0 %v3492
        %3515 = vmatprep.subr.mxu0 0.0
        %3516 = vmatpush1.msra.mxu0 %v3493
        %3517 = vmatprep.subr.mxu0 0.0
        %3518 = vmatpush1.msra.mxu0 %v3494
        %3519 = vmatprep.subr.mxu0 0.0
        %3520 = vmatpush1.msra.mxu0 %v3495
        %3521 = vmatprep.subr.mxu0 0.0
        %3522 = vmatpush1.msra.mxu0 %v3496
        %3523 = vmatprep.subr.mxu0 0.0
        %3524 = vmatpush1.msra.mxu0 %v3497
        %3525 = vmatprep.subr.mxu0 0.0
        %3526 = vmatpush1.msra.mxu0 %v3498
        %3527 = vmatprep.subr.mxu0 0.0
        %3528 = vmatpush1.msra.mxu0 %v3499
        %3529 = vmatprep.subr.mxu0 0.0
        %3530 = vmatpush1.msra.mxu0 %v3500
        %3531 = vmatprep.subr.mxu0 0.0
        %3532 = vmatpush1.msra.mxu0 %v3501
        %3533 = vmatprep.subr.mxu0 0.0
        %3534 = vmatpush1.msra.mxu0 %v3502
        %3535 = vmatprep.subr.mxu0 0.0
        %3536 = vmatpush1.msra.mxu0 0.0
        %3537 = vmatprep.subr.mxu0 0.0
        %3538 = vmatpush1.msra.mxu0 0.0
        %3539 = vmatprep.subr.mxu0 0.0
        %3540 = vmatpush1.msra.mxu0 0.0
        %3541 = vmatprep.subr.mxu0 0.0
        %3542 = vmatpush1.msra.mxu0 0.0
        %3543 = vmatprep.subr.mxu0 0.0
        %3544 = vmatpush1.msra.mxu0 0.0
        %3545 = vmatprep.subr.mxu0 0.0
        %3546 = vmatpush1.msra.mxu0 0.0
        %3547 = vmatprep.subr.mxu0 0.0
        %3548 = vmatpush1.msra.mxu0 0.0
        %3549 = vmatprep.subr.mxu0 0.0
        %3550 = vmatpush1.msra.mxu0 0.0
        %3551 = vmatprep.subr.mxu0 0.0
        %3552 = vmatpush1.msra.mxu0 0.0
        %3553 = vmatprep.subr.mxu0 0.0
        %3554 = vmatpush1.msra.mxu0 0.0
        %3555 = vmatprep.subr.mxu0 0.0
        %3556 = vmatpush1.msra.mxu0 0.0
        %3557 = vmatprep.subr.mxu0 0.0
        %3558 = vmatpush1.msra.mxu0 0.0
        %3559 = vmatprep.subr.mxu0 0.0
        %3560 = vmatpush1.msra.mxu0 0.0
        %3561 = vmatprep.subr.mxu0 0.0
        %3562 = vmatpush1.msra.mxu0 0.0
        %3563 = vmatprep.subr.mxu0 0.0
        %3564 = vmatpush1.msra.mxu0 0.0
        %3565 = vmatprep.subr.mxu0 0.0
        %3566 = vmatpush1.msra.mxu0 0.0
        %3567 = vmatprep.mubr.f32.mxu0 0.0
        %3568 = vmatmul.mubr.f32.gmra.mrb[0].mxu0 %v3453
        %v3569 = vpop.f32.mrb[0].mxu0
        %v3570 = vadd.f32 0.0, %v3569
        %v3571 = vpop.f32.mrb[0].mxu0
        %3572 = vmatprep.mubr.f32.mxu0 0.0
        %3573 = vmatmul.mubr.f32.gmra.mrb[0].mxu0 %v3454
        %v3574 = vpop.f32.mrb[0].mxu0
        %v3575 = vadd.f32 0.0, %v3574
        %v3576 = vpop.f32.mrb[0].mxu0
        %3577 = vmatprep.mubr.f32.mxu0 0.0
        %3578 = vmatmul.mubr.f32.gmra.mrb[0].mxu0 %v3455
        %v3579 = vpop.f32.mrb[0].mxu0
        %v3580 = vadd.f32 0.0, %v3579
        %v3581 = vpop.f32.mrb[0].mxu0
        %3582 = vmatprep.mubr.f32.mxu0 0.0
        %3583 = vmatmul.mubr.f32.gmra.mrb[0].mxu0 %v3456
        %v3584 = vpop.f32.mrb[0].mxu0
        %v3585 = vadd.f32 0.0, %v3584
        %v3586 = vpop.f32.mrb[0].mxu0
        %3587 = vmatprep.mubr.f32.mxu0 0.0
        %3588 = vmatmul.mubr.f32.gmra.mrb[0].mxu0 %v3457
        %v3589 = vpop.f32.mrb[0].mxu0
        %v3590 = vadd.f32 0.0, %v3589
        %v3591 = vpop.f32.mrb[0].mxu0
        %3592 = vmatprep.mubr.f32.mxu0 0.0
        %3593 = vmatmul.mubr.f32.gmra.mrb[0].mxu0 %v3458
        %v3594 = vpop.f32.mrb[0].mxu0
        %v3595 = vadd.f32 0.0, %v3594
        %v3596 = vpop.f32.mrb[0].mxu0
        %3597 = vmatprep.mubr.f32.mxu0 0.0
        %3598 = vmatmul.mubr.f32.gmra.mrb[0].mxu0 %v3459
        %v3599 = vpop.f32.mrb[0].mxu0
        %v3600 = vadd.f32 0.0, %v3599
        %v3601 = vpop.f32.mrb[0].mxu0
        %3602 = vmatprep.mubr.f32.mxu0 0.0
        %3603 = vmatmul.mubr.f32.gmra.mrb[0].mxu0 %v3460
        %v3604 = vpop.f32.mrb[0].mxu0
        %v3605 = vadd.f32 0.0, %v3604
        %v3606 = vpop.f32.mrb[0].mxu0
        %3607 = vmatprep.mubr.f32.mxu0 0.0
        %3608 = vmatmul.mubr.f32.gmra.mrb[0].mxu0 %v3461
        %v3609 = vpop.f32.mrb[0].mxu0
        %v3610 = vadd.f32 0.0, %v3609
        %v3611 = vpop.f32.mrb[0].mxu0
        %3612 = vmatprep.mubr.f32.mxu0 0.0
        %3613 = vmatmul.mubr.f32.gmra.mrb[0].mxu0 %v3462
        %v3614 = vpop.f32.mrb[0].mxu0
        %v3615 = vadd.f32 0.0, %v3614
        %v3616 = vpop.f32.mrb[0].mxu0
        %3617 = vmatprep.mubr.f32.mxu0 0.0
        %3618 = vmatmul.mubr.f32.gmra.mrb[0].mxu0 %v3463
        %v3619 = vpop.f32.mrb[0].mxu0
        %v3620 = vadd.f32 0.0, %v3619
        %v3621 = vpop.f32.mrb[0].mxu0
        %3622 = vmatprep.mubr.f32.mxu0 0.0
        %3623 = vmatmul.mubr.f32.gmra.mrb[0].mxu0 %v3464
        %v3624 = vpop.f32.mrb[0].mxu0
        %v3625 = vadd.f32 0.0, %v3624
        %v3626 = vpop.f32.mrb[0].mxu0
        %3627 = vmatprep.mubr.f32.mxu0 0.0
        %3628 = vmatmul.mubr.f32.gmra.mrb[0].mxu0 %v3465
        %v3629 = vpop.f32.mrb[0].mxu0
        %v3630 = vadd.f32 0.0, %v3629
        %v3631 = vpop.f32.mrb[0].mxu0
        %3632 = vmatprep.mubr.f32.mxu0 0.0
        %3633 = vmatmul.mubr.f32.gmra.mrb[0].mxu0 %v3466
        %v3634 = vpop.f32.mrb[0].mxu0
        %v3635 = vadd.f32 0.0, %v3634
        %v3636 = vpop.f32.mrb[0].mxu0
        %3637 = vmatprep.mubr.f32.mxu0 0.0
        %3638 = vmatmul.mubr.f32.gmra.mrb[0].mxu0 %v3467
        %v3639 = vpop.f32.mrb[0].mxu0
        %v3640 = vadd.f32 0.0, %v3639
        %v3641 = vpop.f32.mrb[0].mxu0
        %3642 = vmatprep.mubr.f32.mxu0 0.0
        %3643 = vmatmul.mubr.f32.gmra.mrb[0].mxu0 %v3468
        %v3644 = vpop.f32.mrb[0].mxu0
        %v3645 = vadd.f32 0.0, %v3644
        %v3646 = vpop.f32.mrb[0].mxu0
        %3647 = vdwg.mxu0
        %v3648 = vstv %s2706
        %v3649 = vmul.f32 %v3648, %v1565
        %v3650 = vmul.f32 %v3648, %v1566
        %v3651 = vmul.f32 %v3648, %v1567
        %v3652 = vmul.f32 %v3648, %v1568
        %v3653 = vmul.f32 %v3648, %v1569
        %v3654 = vmul.f32 %v3648, %v1570
        %v3655 = vmul.f32 %v3648, %v1571
        %v3656 = vmul.f32 %v3648, %v1572
        %v3657 = vmul.f32 %v3648, %v1573
        %v3658 = vmul.f32 %v3648, %v1574
        %v3659 = vmul.f32 %v3648, %v1575
        %v3660 = vmul.f32 %v3648, %v1576
        %v3661 = vmul.f32 %v3648, %v1577
        %v3662 = vmul.f32 %v3648, %v1578
        %v3663 = vmul.f32 %v3648, %v1579
        %v3664 = vmul.f32 %v3648, %v1580
        %v3665 = vstv %s2707
        %v3666 = vmul.f32 %v3665, %v1936
        %v3667 = vmul.f32 %v3665, %v1937
        %v3668 = vmul.f32 %v3665, %v1938
        %v3669 = vmul.f32 %v3665, %v1939
        %v3670 = vmul.f32 %v3665, %v1940
        %v3671 = vmul.f32 %v3665, %v1941
        %v3672 = vmul.f32 %v3665, %v1942
        %v3673 = vmul.f32 %v3665, %v1943
        %v3674 = vmul.f32 %v3665, %v1944
        %v3675 = vmul.f32 %v3665, %v1945
        %v3676 = vmul.f32 %v3665, %v1946
        %v3677 = vmul.f32 %v3665, %v1947
        %v3678 = vmul.f32 %v3665, %v1948
        %v3679 = vmul.f32 %v3665, %v1949
        %v3680 = vmul.f32 %v3665, %v1950
        %v3681 = vmul.f32 %v3665, %v1951
        %v3682 = vadd.f32 %v3649, %v3666
        %v3683 = vadd.f32 %v3650, %v3667
        %v3684 = vadd.f32 %v3651, %v3668
        %v3685 = vadd.f32 %v3652, %v3669
        %v3686 = vadd.f32 %v3653, %v3670
        %v3687 = vadd.f32 %v3654, %v3671
        %v3688 = vadd.f32 %v3655, %v3672
        %v3689 = vadd.f32 %v3656, %v3673
        %v3690 = vadd.f32 %v3657, %v3674
        %v3691 = vadd.f32 %v3658, %v3675
        %v3692 = vadd.f32 %v3659, %v3676
        %v3693 = vadd.f32 %v3660, %v3677
        %v3694 = vadd.f32 %v3661, %v3678
        %v3695 = vadd.f32 %v3662, %v3679
        %v3696 = vadd.f32 %v3663, %v3680
        %v3697 = vadd.f32 %v3664, %v3681
        %v3698 = vstv %s2708
        %v3699 = vmul.f32 %v3698, %v2307
        %v3700 = vmul.f32 %v3698, %v2308
        %v3701 = vmul.f32 %v3698, %v2309
        %v3702 = vmul.f32 %v3698, %v2310
        %v3703 = vmul.f32 %v3698, %v2311
        %v3704 = vmul.f32 %v3698, %v2312
        %v3705 = vmul.f32 %v3698, %v2313
        %v3706 = vmul.f32 %v3698, %v2314
        %v3707 = vmul.f32 %v3698, %v2315
        %v3708 = vmul.f32 %v3698, %v2316
        %v3709 = vmul.f32 %v3698, %v2317
        %v3710 = vmul.f32 %v3698, %v2318
        %v3711 = vmul.f32 %v3698, %v2319
        %v3712 = vmul.f32 %v3698, %v2320
        %v3713 = vmul.f32 %v3698, %v2321
        %v3714 = vmul.f32 %v3698, %v2322
        %v3715 = vadd.f32 %v3682, %v3699
        %v3716 = vadd.f32 %v3683, %v3700
        %v3717 = vadd.f32 %v3684, %v3701
        %v3718 = vadd.f32 %v3685, %v3702
        %v3719 = vadd.f32 %v3686, %v3703
        %v3720 = vadd.f32 %v3687, %v3704
        %v3721 = vadd.f32 %v3688, %v3705
        %v3722 = vadd.f32 %v3689, %v3706
        %v3723 = vadd.f32 %v3690, %v3707
        %v3724 = vadd.f32 %v3691, %v3708
        %v3725 = vadd.f32 %v3692, %v3709
        %v3726 = vadd.f32 %v3693, %v3710
        %v3727 = vadd.f32 %v3694, %v3711
        %v3728 = vadd.f32 %v3695, %v3712
        %v3729 = vadd.f32 %v3696, %v3713
        %v3730 = vadd.f32 %v3697, %v3714
        %v3731 = vstv %s2709
        %v3732 = vmul.f32 %v3731, %v2678
        %v3733 = vmul.f32 %v3731, %v2679
        %v3734 = vmul.f32 %v3731, %v2680
        %v3735 = vmul.f32 %v3731, %v2681
        %v3736 = vmul.f32 %v3731, %v2682
        %v3737 = vmul.f32 %v3731, %v2683
        %v3738 = vmul.f32 %v3731, %v2684
        %v3739 = vmul.f32 %v3731, %v2685
        %v3740 = vmul.f32 %v3731, %v2686
        %v3741 = vmul.f32 %v3731, %v2687
        %v3742 = vmul.f32 %v3731, %v2688
        %v3743 = vmul.f32 %v3731, %v2689
        %v3744 = vmul.f32 %v3731, %v2690
        %v3745 = vmul.f32 %v3731, %v2691
        %v3746 = vmul.f32 %v3731, %v2692
        %v3747 = vmul.f32 %v3731, %v2693
        %v3748 = vadd.f32 %v3715, %v3732
        %v3749 = vadd.f32 %v3716, %v3733
        %v3750 = vadd.f32 %v3717, %v3734
        %v3751 = vadd.f32 %v3718, %v3735
        %v3752 = vadd.f32 %v3719, %v3736
        %v3753 = vadd.f32 %v3720, %v3737
        %v3754 = vadd.f32 %v3721, %v3738
        %v3755 = vadd.f32 %v3722, %v3739
        %v3756 = vadd.f32 %v3723, %v3740
        %v3757 = vadd.f32 %v3724, %v3741
        %v3758 = vadd.f32 %v3725, %v3742
        %v3759 = vadd.f32 %v3726, %v3743
        %v3760 = vadd.f32 %v3727, %v3744
        %v3761 = vadd.f32 %v3728, %v3745
        %v3762 = vadd.f32 %v3729, %v3746
        %v3763 = vadd.f32 %v3730, %v3747
        %v3764 = vstv %s2713
        %v3765 = vadd.f32 %v3748, %v3764
        %v3766 = vadd.f32 %v3749, %v3764
        %v3767 = vadd.f32 %v3750, %v3764
        %v3768 = vadd.f32 %v3751, %v3764
        %v3769 = vadd.f32 %v3752, %v3764
        %v3770 = vadd.f32 %v3753, %v3764
        %v3771 = vadd.f32 %v3754, %v3764
        %v3772 = vadd.f32 %v3755, %v3764
        %v3773 = vadd.f32 %v3756, %v3764
        %v3774 = vadd.f32 %v3757, %v3764
        %v3775 = vadd.f32 %v3758, %v3764
        %v3776 = vadd.f32 %v3759, %v3764
        %v3777 = vadd.f32 %v3760, %v3764
        %v3778 = vadd.f32 %v3761, %v3764
        %v3779 = vadd.f32 %v3762, %v3764
        %v3780 = vadd.f32 %v3763, %v3764
        %s3781 = scalar_lea.vmem %s395, 384 [#allocation9]
        %3782 = vst [vmem:[%s3781] sm:$0xff] %v3765
        %3783 = vst [vmem:[%s3781 + $0x8] sm:$0xff] %v3766
        %3784 = vst [vmem:[%s3781 + $0x10] sm:$0xff] %v3767
        %3785 = vst [vmem:[%s3781 + $0x18] sm:$0xff] %v3768
        %3786 = vst [vmem:[%s3781 + $0x20] sm:$0xff] %v3769
        %3787 = vst [vmem:[%s3781 + $0x28] sm:$0xff] %v3770
        %3788 = vst [vmem:[%s3781 + $0x30] sm:$0xff] %v3771
        %3789 = vst [vmem:[%s3781 + $0x38] sm:$0xff] %v3772
        %3790 = vst [vmem:[%s3781 + $0x40] sm:$0xff] %v3773
        %3791 = vst [vmem:[%s3781 + $0x48] sm:$0xff] %v3774
        %3792 = vst [vmem:[%s3781 + $0x50] sm:$0xff] %v3775
        %3793 = vst [vmem:[%s3781 + $0x58] sm:$0xff] %v3776
        %3794 = vst [vmem:[%s3781 + $0x60] sm:$0xff] %v3777
        %3795 = vst [vmem:[%s3781 + $0x68] sm:$0xff] %v3778
        %3796 = vst [vmem:[%s3781 + $0x70] sm:$0xff] %v3779
        %3797 = vst [vmem:[%s3781 + $0x78] sm:$0xff] %v3780
        %s3798 = scalar_lea.vmem [#allocation3], 384
        %v3799 = vld [vmem:[%s3798] sm:$0xff]
        %v3800 = vld [vmem:[%s3798 + $0x8] sm:$0xff]
        %v3801 = vld [vmem:[%s3798 + $0x10] sm:$0xff]
        %v3802 = vld [vmem:[%s3798 + $0x18] sm:$0xff]
        %v3803 = vld [vmem:[%s3798 + $0x20] sm:$0xff]
        %v3804 = vld [vmem:[%s3798 + $0x28] sm:$0xff]
        %v3805 = vld [vmem:[%s3798 + $0x30] sm:$0xff]
        %v3806 = vld [vmem:[%s3798 + $0x38] sm:$0xff]
        %v3807 = vld [vmem:[%s3798 + $0x40] sm:$0xff]
        %v3808 = vld [vmem:[%s3798 + $0x48] sm:$0xff]
        %v3809 = vld [vmem:[%s3798 + $0x50] sm:$0xff]
        %v3810 = vld [vmem:[%s3798 + $0x58] sm:$0xff]
        %v3811 = vld [vmem:[%s3798 + $0x60] sm:$0xff]
        %v3812 = vld [vmem:[%s3798 + $0x68] sm:$0xff]
        %v3813 = vld [vmem:[%s3798 + $0x70] sm:$0xff]
        %v3814 = vld [vmem:[%s3798 + $0x78] sm:$0xff]
        %3815 = vmatprep.subr.mxu0 0.0
        %3816 = vmatpush1.msra.mxu0 %v3799
        %3817 = vmatprep.subr.mxu0 0.0
        %3818 = vmatpush1.msra.mxu0 %v3800
        %3819 = vmatprep.subr.mxu0 0.0
        %3820 = vmatpush1.msra.mxu0 %v3801
        %3821 = vmatprep.subr.mxu0 0.0
        %3822 = vmatpush1.msra.mxu0 %v3802
        %3823 = vmatprep.subr.mxu0 0.0
        %3824 = vmatpush1.msra.mxu0 %v3803
        %3825 = vmatprep.subr.mxu0 0.0
        %3826 = vmatpush1.msra.mxu0 %v3804
        %3827 = vmatprep.subr.mxu0 0.0
        %3828 = vmatpush1.msra.mxu0 %v3805
        %3829 = vmatprep.subr.mxu0 0.0
        %3830 = vmatpush1.msra.mxu0 %v3806
        %3831 = vmatprep.subr.mxu0 0.0
        %3832 = vmatpush1.msra.mxu0 %v3807
        %3833 = vmatprep.subr.mxu0 0.0
        %3834 = vmatpush1.msra.mxu0 %v3808
        %3835 = vmatprep.subr.mxu0 0.0
        %3836 = vmatpush1.msra.mxu0 %v3809
        %3837 = vmatprep.subr.mxu0 0.0
        %3838 = vmatpush1.msra.mxu0 %v3810
        %3839 = vmatprep.subr.mxu0 0.0
        %3840 = vmatpush1.msra.mxu0 %v3811
        %3841 = vmatprep.subr.mxu0 0.0
        %3842 = vmatpush1.msra.mxu0 %v3812
        %3843 = vmatprep.subr.mxu0 0.0
        %3844 = vmatpush1.msra.mxu0 %v3813
        %3845 = vmatprep.subr.mxu0 0.0
        %3846 = vmatpush1.msra.mxu0 %v3814
        %3847 = vmatprep.subr.mxu0 0.0
        %3848 = vmatpush1.msra.mxu0 0.0
        %3849 = vmatprep.subr.mxu0 0.0
        %3850 = vmatpush1.msra.mxu0 0.0
        %3851 = vmatprep.subr.mxu0 0.0
        %3852 = vmatpush1.msra.mxu0 0.0
        %3853 = vmatprep.subr.mxu0 0.0
        %3854 = vmatpush1.msra.mxu0 0.0
        %3855 = vmatprep.subr.mxu0 0.0
        %3856 = vmatpush1.msra.mxu0 0.0
        %3857 = vmatprep.subr.mxu0 0.0
        %3858 = vmatpush1.msra.mxu0 0.0
        %3859 = vmatprep.subr.mxu0 0.0
        %3860 = vmatpush1.msra.mxu0 0.0
        %3861 = vmatprep.subr.mxu0 0.0
        %3862 = vmatpush1.msra.mxu0 0.0
        %3863 = vmatprep.subr.mxu0 0.0
        %3864 = vmatpush1.msra.mxu0 0.0
        %3865 = vmatprep.subr.mxu0 0.0
        %3866 = vmatpush1.msra.mxu0 0.0
        %3867 = vmatprep.subr.mxu0 0.0
        %3868 = vmatpush1.msra.mxu0 0.0
        %3869 = vmatprep.subr.mxu0 0.0
        %3870 = vmatpush1.msra.mxu0 0.0
        %3871 = vmatprep.subr.mxu0 0.0
        %3872 = vmatpush1.msra.mxu0 0.0
        %3873 = vmatprep.subr.mxu0 0.0
        %3874 = vmatpush1.msra.mxu0 0.0
        %3875 = vmatprep.subr.mxu0 0.0
        %3876 = vmatpush1.msra.mxu0 0.0
        %3877 = vmatprep.subr.mxu0 0.0
        %3878 = vmatpush1.msra.mxu0 0.0
        %3879 = vmatprep.mubr.f32.mxu0 0.0
        %3880 = vmatmul.mubr.f32.gmra.mrb[0].mxu0 %v3765
        %v3881 = vpop.f32.mrb[0].mxu0
        %v3882 = vadd.f32 0.0, %v3881
        %v3883 = vpop.f32.mrb[0].mxu0
        %3884 = vmatprep.mubr.f32.mxu0 0.0
        %3885 = vmatmul.mubr.f32.gmra.mrb[0].mxu0 %v3766
        %v3886 = vpop.f32.mrb[0].mxu0
        %v3887 = vadd.f32 0.0, %v3886
        %v3888 = vpop.f32.mrb[0].mxu0
        %3889 = vmatprep.mubr.f32.mxu0 0.0
        %3890 = vmatmul.mubr.f32.gmra.mrb[0].mxu0 %v3767
        %v3891 = vpop.f32.mrb[0].mxu0
        %v3892 = vadd.f32 0.0, %v3891
        %v3893 = vpop.f32.mrb[0].mxu0
        %3894 = vmatprep.mubr.f32.mxu0 0.0
        %3895 = vmatmul.mubr.f32.gmra.mrb[0].mxu0 %v3768
        %v3896 = vpop.f32.mrb[0].mxu0
        %v3897 = vadd.f32 0.0, %v3896
        %v3898 = vpop.f32.mrb[0].mxu0
        %3899 = vmatprep.mubr.f32.mxu0 0.0
        %3900 = vmatmul.mubr.f32.gmra.mrb[0].mxu0 %v3769
        %v3901 = vpop.f32.mrb[0].mxu0
        %v3902 = vadd.f32 0.0, %v3901
        %v3903 = vpop.f32.mrb[0].mxu0
        %3904 = vmatprep.mubr.f32.mxu0 0.0
        %3905 = vmatmul.mubr.f32.gmra.mrb[0].mxu0 %v3770
        %v3906 = vpop.f32.mrb[0].mxu0
        %v3907 = vadd.f32 0.0, %v3906
        %v3908 = vpop.f32.mrb[0].mxu0
        %3909 = vmatprep.mubr.f32.mxu0 0.0
        %3910 = vmatmul.mubr.f32.gmra.mrb[0].mxu0 %v3771
        %v3911 = vpop.f32.mrb[0].mxu0
        %v3912 = vadd.f32 0.0, %v3911
        %v3913 = vpop.f32.mrb[0].mxu0
        %3914 = vmatprep.mubr.f32.mxu0 0.0
        %3915 = vmatmul.mubr.f32.gmra.mrb[0].mxu0 %v3772
        %v3916 = vpop.f32.mrb[0].mxu0
        %v3917 = vadd.f32 0.0, %v3916
        %v3918 = vpop.f32.mrb[0].mxu0
        %3919 = vmatprep.mubr.f32.mxu0 0.0
        %3920 = vmatmul.mubr.f32.gmra.mrb[0].mxu0 %v3773
        %v3921 = vpop.f32.mrb[0].mxu0
        %v3922 = vadd.f32 0.0, %v3921
        %v3923 = vpop.f32.mrb[0].mxu0
        %3924 = vmatprep.mubr.f32.mxu0 0.0
        %3925 = vmatmul.mubr.f32.gmra.mrb[0].mxu0 %v3774
        %v3926 = vpop.f32.mrb[0].mxu0
        %v3927 = vadd.f32 0.0, %v3926
        %v3928 = vpop.f32.mrb[0].mxu0
        %3929 = vmatprep.mubr.f32.mxu0 0.0
        %3930 = vmatmul.mubr.f32.gmra.mrb[0].mxu0 %v3775
        %v3931 = vpop.f32.mrb[0].mxu0
        %v3932 = vadd.f32 0.0, %v3931
        %v3933 = vpop.f32.mrb[0].mxu0
        %3934 = vmatprep.mubr.f32.mxu0 0.0
        %3935 = vmatmul.mubr.f32.gmra.mrb[0].mxu0 %v3776
        %v3936 = vpop.f32.mrb[0].mxu0
        %v3937 = vadd.f32 0.0, %v3936
        %v3938 = vpop.f32.mrb[0].mxu0
        %3939 = vmatprep.mubr.f32.mxu0 0.0
        %3940 = vmatmul.mubr.f32.gmra.mrb[0].mxu0 %v3777
        %v3941 = vpop.f32.mrb[0].mxu0
        %v3942 = vadd.f32 0.0, %v3941
        %v3943 = vpop.f32.mrb[0].mxu0
        %3944 = vmatprep.mubr.f32.mxu0 0.0
        %3945 = vmatmul.mubr.f32.gmra.mrb[0].mxu0 %v3778
        %v3946 = vpop.f32.mrb[0].mxu0
        %v3947 = vadd.f32 0.0, %v3946
        %v3948 = vpop.f32.mrb[0].mxu0
        %3949 = vmatprep.mubr.f32.mxu0 0.0
        %3950 = vmatmul.mubr.f32.gmra.mrb[0].mxu0 %v3779
        %v3951 = vpop.f32.mrb[0].mxu0
        %v3952 = vadd.f32 0.0, %v3951
        %v3953 = vpop.f32.mrb[0].mxu0
        %3954 = vmatprep.mubr.f32.mxu0 0.0
        %3955 = vmatmul.mubr.f32.gmra.mrb[0].mxu0 %v3780
        %v3956 = vpop.f32.mrb[0].mxu0
        %v3957 = vadd.f32 0.0, %v3956
        %v3958 = vpop.f32.mrb[0].mxu0
        %3959 = vdwg.mxu0
        %3976 = vrot.lane.b32.xlu0 %v3258, 8
        %v3977 = vpop.permute.xlu0 %3976
        %3978 = vrot.lane.b32.xlu0 %v3263, 8
        %v3979 = vpop.permute.xlu0 %3978
        %3980 = vrot.lane.b32.xlu0 %v3268, 8
        %v3981 = vpop.permute.xlu0 %3980
        %3982 = vrot.lane.b32.xlu0 %v3273, 8
        %v3983 = vpop.permute.xlu0 %3982
        %3984 = vrot.lane.b32.xlu0 %v3278, 8
        %v3985 = vpop.permute.xlu0 %3984
        %3986 = vrot.lane.b32.xlu0 %v3283, 8
        %v3987 = vpop.permute.xlu0 %3986
        %3988 = vrot.lane.b32.xlu0 %v3288, 8
        %v3989 = vpop.permute.xlu0 %3988
        %3990 = vrot.lane.b32.xlu0 %v3293, 8
        %v3991 = vpop.permute.xlu0 %3990
        %3992 = vrot.lane.b32.xlu0 %v3298, 8
        %v3993 = vpop.permute.xlu0 %3992
        %3994 = vrot.lane.b32.xlu0 %v3303, 8
        %v3995 = vpop.permute.xlu0 %3994
        %3996 = vrot.lane.b32.xlu0 %v3308, 8
        %v3997 = vpop.permute.xlu0 %3996
        %3998 = vrot.lane.b32.xlu0 %v3313, 8
        %v3999 = vpop.permute.xlu0 %3998
        %4000 = vrot.lane.b32.xlu0 %v3318, 8
        %v4001 = vpop.permute.xlu0 %4000
        %4002 = vrot.lane.b32.xlu0 %v3323, 8
        %v4003 = vpop.permute.xlu0 %4002
        %4004 = vrot.lane.b32.xlu0 %v3328, 8
        %v4005 = vpop.permute.xlu0 %4004
        %4006 = vrot.lane.b32.xlu0 %v3333, 8
        %v4007 = vpop.permute.xlu0 %4006
        %4040 = vrot.lane.b32.xlu0 %v3570, 16
        %v4041 = vpop.permute.xlu0 %4040
        %4042 = vrot.lane.b32.xlu0 %v3575, 16
        %v4043 = vpop.permute.xlu0 %4042
        %4044 = vrot.lane.b32.xlu0 %v3580, 16
        %v4045 = vpop.permute.xlu0 %4044
        %4046 = vrot.lane.b32.xlu0 %v3585, 16
        %v4047 = vpop.permute.xlu0 %4046
        %4048 = vrot.lane.b32.xlu0 %v3590, 16
        %v4049 = vpop.permute.xlu0 %4048
        %4050 = vrot.lane.b32.xlu0 %v3595, 16
        %v4051 = vpop.permute.xlu0 %4050
        %4052 = vrot.lane.b32.xlu0 %v3600, 16
        %v4053 = vpop.permute.xlu0 %4052
        %4054 = vrot.lane.b32.xlu0 %v3605, 16
        %v4055 = vpop.permute.xlu0 %4054
        %4056 = vrot.lane.b32.xlu0 %v3610, 16
        %v4057 = vpop.permute.xlu0 %4056
        %4058 = vrot.lane.b32.xlu0 %v3615, 16
        %v4059 = vpop.permute.xlu0 %4058
        %4060 = vrot.lane.b32.xlu0 %v3620, 16
        %v4061 = vpop.permute.xlu0 %4060
        %4062 = vrot.lane.b32.xlu0 %v3625, 16
        %v4063 = vpop.permute.xlu0 %4062
        %4064 = vrot.lane.b32.xlu0 %v3630, 16
        %v4065 = vpop.permute.xlu0 %4064
        %4066 = vrot.lane.b32.xlu0 %v3635, 16
        %v4067 = vpop.permute.xlu0 %4066
        %4068 = vrot.lane.b32.xlu0 %v3640, 16
        %v4069 = vpop.permute.xlu0 %4068
        %4070 = vrot.lane.b32.xlu0 %v3645, 16
        %v4071 = vpop.permute.xlu0 %4070
        %4104 = vrot.lane.b32.xlu0 %v3882, 24
        %v4105 = vpop.permute.xlu0 %4104
        %4106 = vrot.lane.b32.xlu0 %v3887, 24
        %v4107 = vpop.permute.xlu0 %4106
        %4108 = vrot.lane.b32.xlu0 %v3892, 24
        %v4109 = vpop.permute.xlu0 %4108
        %4110 = vrot.lane.b32.xlu0 %v3897, 24
        %v4111 = vpop.permute.xlu0 %4110
        %4112 = vrot.lane.b32.xlu0 %v3902, 24
        %v4113 = vpop.permute.xlu0 %4112
        %4114 = vrot.lane.b32.xlu0 %v3907, 24
        %v4115 = vpop.permute.xlu0 %4114
        %4116 = vrot.lane.b32.xlu0 %v3912, 24
        %v4117 = vpop.permute.xlu0 %4116
        %4118 = vrot.lane.b32.xlu0 %v3917, 24
        %v4119 = vpop.permute.xlu0 %4118
        %4120 = vrot.lane.b32.xlu0 %v3922, 24
        %v4121 = vpop.permute.xlu0 %4120
        %4122 = vrot.lane.b32.xlu0 %v3927, 24
        %v4123 = vpop.permute.xlu0 %4122
        %4124 = vrot.lane.b32.xlu0 %v3932, 24
        %v4125 = vpop.permute.xlu0 %4124
        %4126 = vrot.lane.b32.xlu0 %v3937, 24
        %v4127 = vpop.permute.xlu0 %4126
        %4128 = vrot.lane.b32.xlu0 %v3942, 24
        %v4129 = vpop.permute.xlu0 %4128
        %4130 = vrot.lane.b32.xlu0 %v3947, 24
        %v4131 = vpop.permute.xlu0 %4130
        %4132 = vrot.lane.b32.xlu0 %v3952, 24
        %v4133 = vpop.permute.xlu0 %4132
        %4134 = vrot.lane.b32.xlu0 %v3957, 24
        %v4135 = vpop.permute.xlu0 %4134
        %v4152 = vsel %vm1227, %v2946, %v3977
        %v4153 = vsel %vm1227, %v2951, %v3979
        %v4154 = vsel %vm1227, %v2956, %v3981
        %v4155 = vsel %vm1227, %v2961, %v3983
        %v4156 = vsel %vm1227, %v2966, %v3985
        %v4157 = vsel %vm1227, %v2971, %v3987
        %v4158 = vsel %vm1227, %v2976, %v3989
        %v4159 = vsel %vm1227, %v2981, %v3991
        %v4160 = vsel %vm1227, %v2986, %v3993
        %v4161 = vsel %vm1227, %v2991, %v3995
        %v4162 = vsel %vm1227, %v2996, %v3997
        %v4163 = vsel %vm1227, %v3001, %v3999
        %v4164 = vsel %vm1227, %v3006, %v4001
        %v4165 = vsel %vm1227, %v3011, %v4003
        %v4166 = vsel %vm1227, %v3016, %v4005
        %v4167 = vsel %vm1227, %v3021, %v4007
        %vm4168 = vcmask 130048
        %v4169 = vsel %vm4168, %v4152, %v4041
        %v4170 = vsel %vm4168, %v4153, %v4043
        %v4171 = vsel %vm4168, %v4154, %v4045
        %v4172 = vsel %vm4168, %v4155, %v4047
        %v4173 = vsel %vm4168, %v4156, %v4049
        %v4174 = vsel %vm4168, %v4157, %v4051
        %v4175 = vsel %vm4168, %v4158, %v4053
        %v4176 = vsel %vm4168, %v4159, %v4055
        %v4177 = vsel %vm4168, %v4160, %v4057
        %v4178 = vsel %vm4168, %v4161, %v4059
        %v4179 = vsel %vm4168, %v4162, %v4061
        %v4180 = vsel %vm4168, %v4163, %v4063
        %v4181 = vsel %vm4168, %v4164, %v4065
        %v4182 = vsel %vm4168, %v4165, %v4067
        %v4183 = vsel %vm4168, %v4166, %v4069
        %v4184 = vsel %vm4168, %v4167, %v4071
        %vm4185 = vcmask 195584
        %v4186 = vsel %vm4185, %v4169, %v4105
        %v4187 = vsel %vm4185, %v4170, %v4107
        %v4188 = vsel %vm4185, %v4171, %v4109
        %v4189 = vsel %vm4185, %v4172, %v4111
        %v4190 = vsel %vm4185, %v4173, %v4113
        %v4191 = vsel %vm4185, %v4174, %v4115
        %v4192 = vsel %vm4185, %v4175, %v4117
        %v4193 = vsel %vm4185, %v4176, %v4119
        %v4194 = vsel %vm4185, %v4177, %v4121
        %v4195 = vsel %vm4185, %v4178, %v4123
        %v4196 = vsel %vm4185, %v4179, %v4125
        %v4197 = vsel %vm4185, %v4180, %v4127
        %v4198 = vsel %vm4185, %v4181, %v4129
        %v4199 = vsel %vm4185, %v4182, %v4131
        %v4200 = vsel %vm4185, %v4183, %v4133
        %v4201 = vsel %vm4185, %v4184, %v4135
        %v4202 = vld [vmem:[%s4] sm:$0xff]
        %v4203 = vld [vmem:[%s4 + $0x8] sm:$0xff]
        %v4204 = vld [vmem:[%s4 + $0x10] sm:$0xff]
        %v4205 = vld [vmem:[%s4 + $0x18] sm:$0xff]
        %v4206 = vld [vmem:[%s5] sm:$0x1]
        %v4208 = vlaneseq
        %v4209 = vshrl.u32 %v4208, 7
        %v4210 = vsub.s32 0, %v4209
        %v4211 = vrot.slane %v4206, %v4210
        %v4214 = vsel %vm1013, %v4186, 0
        %v4217 = vsel %vm1013, %v4187, 0
        %v4220 = vsel %vm1013, %v4188, 0
        %v4223 = vsel %vm1013, %v4189, 0
        %v4226 = vsel %vm1013, %v4190, 0
        %v4229 = vsel %vm1013, %v4191, 0
        %v4232 = vsel %vm1013, %v4192, 0
        %v4235 = vsel %vm1013, %v4193, 0
        %v4238 = vsel %vm1013, %v4194, 0
        %v4241 = vsel %vm1013, %v4195, 0
        %v4244 = vsel %vm1013, %v4196, 0
        %v4247 = vsel %vm1013, %v4197, 0
        %v4250 = vsel %vm1013, %v4198, 0
        %v4253 = vsel %vm1013, %v4199, 0
        %v4256 = vsel %vm1013, %v4200, 0
        %v4259 = vsel %vm1013, %v4201, 0
        %4261 = vmatprep.subr.mxu0 0.0
        %4262 = vmatpush1.msra.mxu0 %v4202
        %4263 = vmatprep.subr.mxu0 0.0
        %4264 = vmatpush1.msra.mxu0 %v4203
        %4265 = vmatprep.subr.mxu0 0.0
        %4266 = vmatpush1.msra.mxu0 %v4204
        %4267 = vmatprep.subr.mxu0 0.0
        %4268 = vmatpush1.msra.mxu0 %v4205
        %4269 = vmatprep.subr.mxu0 0.0
        %4270 = vmatpush1.msra.mxu0 0.0
        %4271 = vmatprep.subr.mxu0 0.0
        %4272 = vmatpush1.msra.mxu0 0.0
        %4273 = vmatprep.subr.mxu0 0.0
        %4274 = vmatpush1.msra.mxu0 0.0
        %4275 = vmatprep.subr.mxu0 0.0
        %4276 = vmatpush1.msra.mxu0 0.0
        %4277 = vmatprep.subr.mxu0 0.0
        %4278 = vmatpush1.msra.mxu0 0.0
        %4279 = vmatprep.subr.mxu0 0.0
        %4280 = vmatpush1.msra.mxu0 0.0
        %4281 = vmatprep.subr.mxu0 0.0
        %4282 = vmatpush1.msra.mxu0 0.0
        %4283 = vmatprep.subr.mxu0 0.0
        %4284 = vmatpush1.msra.mxu0 0.0
        %4285 = vmatprep.subr.mxu0 0.0
        %4286 = vmatpush1.msra.mxu0 0.0
        %4287 = vmatprep.subr.mxu0 0.0
        %4288 = vmatpush1.msra.mxu0 0.0
        %4289 = vmatprep.subr.mxu0 0.0
        %4290 = vmatpush1.msra.mxu0 0.0
        %4291 = vmatprep.subr.mxu0 0.0
        %4292 = vmatpush1.msra.mxu0 0.0
        %4293 = vmatprep.subr.mxu0 0.0
        %4294 = vmatpush1.msra.mxu0 0.0
        %4295 = vmatprep.subr.mxu0 0.0
        %4296 = vmatpush1.msra.mxu0 0.0
        %4297 = vmatprep.subr.mxu0 0.0
        %4298 = vmatpush1.msra.mxu0 0.0
        %4299 = vmatprep.subr.mxu0 0.0
        %4300 = vmatpush1.msra.mxu0 0.0
        %4301 = vmatprep.subr.mxu0 0.0
        %4302 = vmatpush1.msra.mxu0 0.0
        %4303 = vmatprep.subr.mxu0 0.0
        %4304 = vmatpush1.msra.mxu0 0.0
        %4305 = vmatprep.subr.mxu0 0.0
        %4306 = vmatpush1.msra.mxu0 0.0
        %4307 = vmatprep.subr.mxu0 0.0
        %4308 = vmatpush1.msra.mxu0 0.0
        %4309 = vmatprep.subr.mxu0 0.0
        %4310 = vmatpush1.msra.mxu0 0.0
        %4311 = vmatprep.subr.mxu0 0.0
        %4312 = vmatpush1.msra.mxu0 0.0
        %4313 = vmatprep.subr.mxu0 0.0
        %4314 = vmatpush1.msra.mxu0 0.0
        %4315 = vmatprep.subr.mxu0 0.0
        %4316 = vmatpush1.msra.mxu0 0.0
        %4317 = vmatprep.subr.mxu0 0.0
        %4318 = vmatpush1.msra.mxu0 0.0
        %4319 = vmatprep.subr.mxu0 0.0
        %4320 = vmatpush1.msra.mxu0 0.0
        %4321 = vmatprep.subr.mxu0 0.0
        %4322 = vmatpush1.msra.mxu0 0.0
        %4323 = vmatprep.subr.mxu0 0.0
        %4324 = vmatpush1.msra.mxu0 0.0
        %4325 = vmatprep.mubr.f32.mxu0 0.0
        %4326 = vmatmul.mubr.f32.gmra.mrb[0].mxu0 %v4214
        %v4327 = vpop.f32.mrb[0].mxu0
        %v4328 = vadd.f32 %v4211, %v4327
        %v4329 = vpop.f32.mrb[0].mxu0
        %4330 = vmatprep.mubr.f32.mxu0 0.0
        %4331 = vmatmul.mubr.f32.gmra.mrb[0].mxu0 %v4217
        %v4332 = vpop.f32.mrb[0].mxu0
        %v4333 = vadd.f32 %v4211, %v4332
        %v4334 = vpop.f32.mrb[0].mxu0
        %4335 = vmatprep.mubr.f32.mxu0 0.0
        %4336 = vmatmul.mubr.f32.gmra.mrb[0].mxu0 %v4220
        %v4337 = vpop.f32.mrb[0].mxu0
        %v4338 = vadd.f32 %v4211, %v4337
        %v4339 = vpop.f32.mrb[0].mxu0
        %4340 = vmatprep.mubr.f32.mxu0 0.0
        %4341 = vmatmul.mubr.f32.gmra.mrb[0].mxu0 %v4223
        %v4342 = vpop.f32.mrb[0].mxu0
        %v4343 = vadd.f32 %v4211, %v4342
        %v4344 = vpop.f32.mrb[0].mxu0
        %4345 = vmatprep.mubr.f32.mxu0 0.0
        %4346 = vmatmul.mubr.f32.gmra.mrb[0].mxu0 %v4226
        %v4347 = vpop.f32.mrb[0].mxu0
        %v4348 = vadd.f32 %v4211, %v4347
        %v4349 = vpop.f32.mrb[0].mxu0
        %4350 = vmatprep.mubr.f32.mxu0 0.0
        %4351 = vmatmul.mubr.f32.gmra.mrb[0].mxu0 %v4229
        %v4352 = vpop.f32.mrb[0].mxu0
        %v4353 = vadd.f32 %v4211, %v4352
        %v4354 = vpop.f32.mrb[0].mxu0
        %4355 = vmatprep.mubr.f32.mxu0 0.0
        %4356 = vmatmul.mubr.f32.gmra.mrb[0].mxu0 %v4232
        %v4357 = vpop.f32.mrb[0].mxu0
        %v4358 = vadd.f32 %v4211, %v4357
        %v4359 = vpop.f32.mrb[0].mxu0
        %4360 = vmatprep.mubr.f32.mxu0 0.0
        %4361 = vmatmul.mubr.f32.gmra.mrb[0].mxu0 %v4235
        %v4362 = vpop.f32.mrb[0].mxu0
        %v4363 = vadd.f32 %v4211, %v4362
        %v4364 = vpop.f32.mrb[0].mxu0
        %4365 = vmatprep.mubr.f32.mxu0 0.0
        %4366 = vmatmul.mubr.f32.gmra.mrb[0].mxu0 %v4238
        %v4367 = vpop.f32.mrb[0].mxu0
        %v4368 = vadd.f32 %v4211, %v4367
        %v4369 = vpop.f32.mrb[0].mxu0
        %4370 = vmatprep.mubr.f32.mxu0 0.0
        %4371 = vmatmul.mubr.f32.gmra.mrb[0].mxu0 %v4241
        %v4372 = vpop.f32.mrb[0].mxu0
        %v4373 = vadd.f32 %v4211, %v4372
        %v4374 = vpop.f32.mrb[0].mxu0
        %4375 = vmatprep.mubr.f32.mxu0 0.0
        %4376 = vmatmul.mubr.f32.gmra.mrb[0].mxu0 %v4244
        %v4377 = vpop.f32.mrb[0].mxu0
        %v4378 = vadd.f32 %v4211, %v4377
        %v4379 = vpop.f32.mrb[0].mxu0
        %4380 = vmatprep.mubr.f32.mxu0 0.0
        %4381 = vmatmul.mubr.f32.gmra.mrb[0].mxu0 %v4247
        %v4382 = vpop.f32.mrb[0].mxu0
        %v4383 = vadd.f32 %v4211, %v4382
        %v4384 = vpop.f32.mrb[0].mxu0
        %4385 = vmatprep.mubr.f32.mxu0 0.0
        %4386 = vmatmul.mubr.f32.gmra.mrb[0].mxu0 %v4250
        %v4387 = vpop.f32.mrb[0].mxu0
        %v4388 = vadd.f32 %v4211, %v4387
        %v4389 = vpop.f32.mrb[0].mxu0
        %4390 = vmatprep.mubr.f32.mxu0 0.0
        %4391 = vmatmul.mubr.f32.gmra.mrb[0].mxu0 %v4253
        %v4392 = vpop.f32.mrb[0].mxu0
        %v4393 = vadd.f32 %v4211, %v4392
        %v4394 = vpop.f32.mrb[0].mxu0
        %4395 = vmatprep.mubr.f32.mxu0 0.0
        %4396 = vmatmul.mubr.f32.gmra.mrb[0].mxu0 %v4256
        %v4397 = vpop.f32.mrb[0].mxu0
        %v4398 = vadd.f32 %v4211, %v4397
        %v4399 = vpop.f32.mrb[0].mxu0
        %4400 = vmatprep.mubr.f32.mxu0 0.0
        %4401 = vmatmul.mubr.f32.gmra.mrb[0].mxu0 %v4259
        %v4402 = vpop.f32.mrb[0].mxu0
        %v4403 = vadd.f32 %v4211, %v4402
        %v4404 = vpop.f32.mrb[0].mxu0
        %4405 = vdwg.mxu0
        %4406 = vst.msk [vmem:[%s414] sm:$0xff] %vm1013, %v4328
        %4407 = vst.msk [vmem:[%s414 + $0x8] sm:$0xff] %vm1013, %v4333
        %4408 = vst.msk [vmem:[%s414 + $0x10] sm:$0xff] %vm1013, %v4338
        %4409 = vst.msk [vmem:[%s414 + $0x18] sm:$0xff] %vm1013, %v4343
        %4410 = vst.msk [vmem:[%s414 + $0x20] sm:$0xff] %vm1013, %v4348
        %4411 = vst.msk [vmem:[%s414 + $0x28] sm:$0xff] %vm1013, %v4353
        %4412 = vst.msk [vmem:[%s414 + $0x30] sm:$0xff] %vm1013, %v4358
        %4413 = vst.msk [vmem:[%s414 + $0x38] sm:$0xff] %vm1013, %v4363
        %4414 = vst.msk [vmem:[%s414 + $0x40] sm:$0xff] %vm1013, %v4368
        %4415 = vst.msk [vmem:[%s414 + $0x48] sm:$0xff] %vm1013, %v4373
        %4416 = vst.msk [vmem:[%s414 + $0x50] sm:$0xff] %vm1013, %v4378
        %4417 = vst.msk [vmem:[%s414 + $0x58] sm:$0xff] %vm1013, %v4383
        %4418 = vst.msk [vmem:[%s414 + $0x60] sm:$0xff] %vm1013, %v4388
        %4419 = vst.msk [vmem:[%s414 + $0x68] sm:$0xff] %vm1013, %v4393
        %4420 = vst.msk [vmem:[%s414 + $0x70] sm:$0xff] %vm1013, %v4398
        %4421 = vst.msk [vmem:[%s414 + $0x78] sm:$0xff] %vm1013, %v4403
        %s4422 = smul.u32 16, %s31
        %p4423 = scmp.lt.s32.totalorder %s30, 1
        %s4424 = scalar_select %p4423, %s30, 1
        %p4425 = scmp.lt.s32.totalorder %s4422, 15
        %s4426 = scalar_select %p4425, %s4422, 15
        %s4427 = smul.addr %s4424, 16
        %s4428 = sadd.s32 %s4426, %s4427
        %s4429 = smul.addr %s4428, 8
        %s4430 = scalar_lea.vmem %s8, %s4429
        %s4431 = sand.u32 %s254, 1
        %s4432 = scalar_lea.sflag [#allocation5], %s4431
        %s4433 = sand.u32 %s254, 1
        %s4434 = smul.addr %s4433, 512
        %s4435 = scalar_lea.vmem [#allocation9], %s4434
        // Predicated region
        $region65: #{tpu_custom_call.1} parent=51 // pred_check
          %p4436 = pneg %p236
        $region66: #{tpu_custom_call.1} parent=51 // pred_check_branch
          %4438 = sbr.rel (%p4436) target = $region68
        $region67: #{tpu_custom_call.1} parent=51 // pred_region
          %s4439 = smul.u32 16, %s31
        $region68: #{tpu_custom_call.1} parent=51 // pred_fallthru
          _
        // Predicated region
        $region69: #{tpu_custom_call.1} parent=51 // pred_check
          %p4440 = pneg %p264
        $region70: #{tpu_custom_call.1} parent=51 // pred_check_branch
          %4442 = sbr.rel (%p4440) target = $region72
        $region71: #{tpu_custom_call.1} parent=51 // pred_region
          %s4443 = smul.u32 16, %s31
          %s4445 = ssub.s32 8192, 8192
          %4446 = vsyncadd %s4432, %s4445
          %s4447 = smul.addr %s30, 64
          %s4448 = sadd.s32 %s4443, %s4447
          %s4449 = smul.addr %s4448, 128
          %s4450 = scalar_lea.hbm %s9, %s4449
          %s4451 = sshll.u32 %s4435, 4
          %s4452 = int_to_ptr.vmem [resolvable:$true] %s4451
          %4457 = dma.vmem_to_hbm [thread:$0]  %s4452, 8192, %s4450, %s4432, 128, 128, 8
        $region72: #{tpu_custom_call.1} parent=51 // pred_fallthru
          _
      $region52: #{tpu_custom_call.1} parent=5 // pred_fallthru
        _
      %p4458 = scmp.le.s32.totalorder 2, %s21
      // Predicated region
      $region73: #{tpu_custom_call.1} parent=5 // pred_check
        %p4459 = pneg %p4458
      $region74: #{tpu_custom_call.1} parent=5 // pred_check_branch
        %4461 = sbr.rel (%p4459) target = $region76
      $region75: #{tpu_custom_call.1} parent=5 // pred_region
        %s4462 = ssub.s32 %s21, 2
        // Predicated region
        $region77: #{tpu_custom_call.1} parent=75 // pred_check
          %p4463 = pneg %p242
        $region78: #{tpu_custom_call.1} parent=75 // pred_check_branch
          %4465 = sbr.rel (%p4463) target = $region80
        $region79: #{tpu_custom_call.1} parent=75 // pred_region
          %s4466 = smul.u32 16, %s33
          %p4467 = scmp.lt.s32.totalorder %s32, 1
          %s4468 = scalar_select %p4467, %s32, 1
          %p4469 = scmp.lt.s32.totalorder %s4466, 15
          %s4470 = scalar_select %p4469, %s4466, 15
          %s4471 = smul.addr %s4468, 16
          %s4472 = sadd.s32 %s4470, %s4471
          %s4473 = smul.addr %s4472, 8
          %s4474 = scalar_lea.vmem %s8, %s4473
        $region80: #{tpu_custom_call.1} parent=75 // pred_fallthru
          _
        // Predicated region
        $region81: #{tpu_custom_call.1} parent=75 // pred_check
          %p4475 = pneg %p270
        $region82: #{tpu_custom_call.1} parent=75 // pred_check_branch
          %4477 = sbr.rel (%p4475) target = $region84
        $region83: #{tpu_custom_call.1} parent=75 // pred_region
          %s4478 = sand.u32 %s255, 1
          %s4479 = scalar_lea.sflag [#allocation5], %s4478
          %s4480 = sand.u32 %s255, 1
          %s4481 = smul.addr %s4480, 512
          %s4482 = scalar_lea.vmem [#allocation9], %s4481
          %4483 = dma.done %s4479, 8192
        $region84: #{tpu_custom_call.1} parent=75 // pred_fallthru
          _
      $region76: #{tpu_custom_call.1} parent=5 // pred_fallthru
        _
    $region6: #{tpu_custom_call.1} parent=1 // loop_footer
      %s25 = sadd.s32 1, %s21
    $region7: #{tpu_custom_call.1} parent=1 // loop_footer_branch
      %20 = sbr.rel target = $region3
    $region8: #{tpu_custom_call.1} parent=1 // loop_exit
      _
    %4484 = vsyncpa [#allocation5], 1
    %s4485 = scalar_lea.sflag [#allocation5], 1
    %4486 = vsyncpa %s4485, 1
    %4487 = vsyncpa [#allocation6], 1
    %s4488 = scalar_lea.sflag [#allocation6], 1
    %4489 = vsyncpa %s4488, 1
    %4490 = vsyncpa [#allocation8], 1

</llo_original>
